<compile_context>
chip_gen: v7x
topology: tpu7x:2x2x1
jax: 0.10.0
libtpu: 0.0.40
codegen_flags: <defaults>
</compile_context>

<pallas_src>
import jax
import jax.numpy as jnp
from jax.experimental import pallas as pl
from jax.experimental.pallas import tpu as pltpu

LATENT_DIM = 32
OUTPUT_DIM = 784
OUTPUT_PAD = 896          # 7 * 128, lane-dense output
HIDDEN = (128, 256, 512, 1024)
BN_EPS = 1e-5
LEAKY_SLOPE = 0.2


def _leaky_relu(x, slope=LEAKY_SLOPE):
    # slope in (0,1): max(x, slope*x) == LeakyReLU(x)
    return jnp.maximum(x, slope * x)


def _batchnorm_train_onepass(x, gamma, beta, eps=BN_EPS):
    # Training-mode BN with single-pass statistics (f32 accumulation):
    #   mean = E[x], var = E[x^2] - mean^2 (biased), folded into scale/shift.
    inv_n = 1.0 / x.shape[0]
    mean = jnp.sum(x, axis=0, keepdims=True) * inv_n
    ex2 = jnp.sum(x * x, axis=0, keepdims=True) * inv_n
    var = jnp.maximum(ex2 - mean * mean, 0.0)      # guard tiny negatives
    scale = gamma * jax.lax.rsqrt(var + eps)
    shift = beta - mean * scale
    return x * scale + shift


def generator_kernel(
    z_ref,
    w1_ref, b1_ref,
    w2_ref, g2_ref, be2_ref,
    w3_ref, g3_ref, be3_ref,
    w4_hbm, g4_ref, be4_ref,
    w5_hbm, b5_ref,
    out_ref,
    w4_vmem, w5_vmem, dma_sems,
):
    # Prefetch the two largest weights from HBM while layers 1-3 run.
    cp4 = pltpu.make_async_copy(w4_hbm, w4_vmem, dma_sems.at[0])
    cp5 = pltpu.make_async_copy(w5_hbm, w5_vmem, dma_sems.at[1])
    cp4.start()
    cp5.start()

    # Layer 1: Linear(32, 128) + LeakyReLU   (bf16 matmul, f32 accumulate)
    h = jnp.dot(z_ref[...], w1_ref[...],
                preferred_element_type=jnp.float32) + b1_ref[...]
    h = _leaky_relu(h)

    # Layer 2: Linear(128, 256) + BN + LeakyReLU  (bias cancelled by BN)
    h = jnp.dot(h.astype(jnp.bfloat16), w2_ref[...],
                preferred_element_type=jnp.float32)
    h = _leaky_relu(_batchnorm_train_onepass(h, g2_ref[...], be2_ref[...]))

    # Layer 3: Linear(256, 512) + BN + LeakyReLU
    h = jnp.dot(h.astype(jnp.bfloat16), w3_ref[...],
                preferred_element_type=jnp.float32)
    h = _leaky_relu(_batchnorm_train_onepass(h, g3_ref[...], be3_ref[...]))

    # Layer 4: Linear(512, 1024) + BN + LeakyReLU   (prefetched weight)
    cp4.wait()
    h = jnp.dot(h.astype(jnp.bfloat16), w4_vmem[...],
                preferred_element_type=jnp.float32)
    h = _leaky_relu(_batchnorm_train_onepass(h, g4_ref[...], be4_ref[...]))

    # Layer 5: Linear(1024, 896-padded 784) + Tanh  (prefetched weight)
    cp5.wait()
    h = jnp.dot(h.astype(jnp.bfloat16), w5_vmem[...],
                preferred_element_type=jnp.float32) + b5_ref[...]
    out_ref[...] = jnp.tanh(h).astype(out_ref.dtype)


def _cost_estimate(batch):
    mm_dims = [(LATENT_DIM, 128), (128, 256), (256, 512), (512, 1024),
               (1024, OUTPUT_PAD)]
    flops = sum(2 * batch * k * n for k, n in mm_dims)
    transcendentals = batch * OUTPUT_PAD + sum(HIDDEN[1:])   # tanh + BN rsqrt
    w_bytes = sum(k * n for k, n in mm_dims) * 2             # bf16 weights
    small_bytes = (128 + 2 * 256 + 2 * 512 + 2 * 1024 + OUTPUT_PAD) * 4
    io_bytes = batch * LATENT_DIM * 2 + batch * OUTPUT_PAD * 2
    return pl.CostEstimate(flops=flops, transcendentals=transcendentals,
                           bytes_accessed=w_bytes + small_bytes + io_bytes)


def _vmem_limit_bytes(batch):
    # ~3.2 MiB bf16 weights (+2.75 MiB scratch copies) + ~24 KiB/row of
    # activation temporaries + headroom.  Capped at 48 MiB so it is safe on
    # v7x (64 MiB physical); v5e/v6e (128 MiB) could go higher for huge B.
    budget = (8 << 20) + batch * 24 * 1024
    return max(16 << 20, min(budget, 48 << 20))


def generator_forward(z, params, slice_output=True):
    B = z.shape[0]
    assert B >= 8 and B % 8 == 0, "batch must be a multiple of 8 (sublane tile)"
    flat = [z.astype(jnp.bfloat16), *params]
    # flat index: 0 z, 1 w1, 2 b1, 3 w2, 4 g2, 5 be2, 6 w3, 7 g3, 8 be3,
    #             9 w4, 10 g4, 11 be4, 12 w5, 13 b5
    vmem_spec = pl.BlockSpec(memory_space=pltpu.MemorySpace.VMEM)
    in_specs = [vmem_spec] * len(flat)
    in_specs[9] = pl.BlockSpec(memory_space=pl.ANY)    # w4 stays in HBM
    in_specs[12] = pl.BlockSpec(memory_space=pl.ANY)   # w5 stays in HBM

    out = pl.pallas_call(
        generator_kernel,
        out_shape=jax.ShapeDtypeStruct((B, OUTPUT_PAD), jnp.bfloat16),
        in_specs=in_specs,
        out_specs=vmem_spec,
        scratch_shapes=[
            pltpu.VMEM((HIDDEN[2], HIDDEN[3]), jnp.bfloat16),    # w4 buffer
            pltpu.VMEM((HIDDEN[3], OUTPUT_PAD), jnp.bfloat16),   # w5 buffer
            pltpu.SemaphoreType.DMA((2,)),
        ],
        compiler_params=pltpu.CompilerParams(
            vmem_limit_bytes=_vmem_limit_bytes(B)),
        cost_estimate=_cost_estimate(B),
    )(*flat)
    if slice_output:
        return out[:, :OUTPUT_DIM]
    return out      # lane-padded (B, 896) layout, padding columns are tanh(0)=0


def init_params(key, latent_dim=LATENT_DIM, output_dim=OUTPUT_DIM):
    """PyTorch-default-style init: Linear W,b ~ U(-1/sqrt(fan_in), +1/sqrt(fan_in)),
    BatchNorm gamma=1, beta=0.  Weights stored (in_features, out_features) in
    bf16; W5/b5 are column-zero-padded to 896.  Biases of BN-followed linears
    are omitted (exactly cancelled by training-mode BN)."""
    dims = [latent_dim, *HIDDEN, output_dim]
    keys = jax.random.split(key, 2 * (len(dims) - 1))
    params = []

    def lin(i, n_out):
        fan_in = dims[i]
        bound = float(fan_in) ** -0.5
        w = jax.random.uniform(keys[2 * i], (fan_in, n_out), jnp.float32,
                               -bound, bound)
        b = jax.random.uniform(keys[2 * i + 1], (1, n_out), jnp.float32,
                               -bound, bound)
        return w, b

    # Layer 1
    w1, b1 = lin(0, HIDDEN[0])
    params += [w1.astype(jnp.bfloat16), b1]
    # Layers 2-4 (BN-followed: drop bias, add gamma/beta)
    for i in (1, 2, 3):
        w, _ = lin(i, dims[i + 1])
        params += [w.astype(jnp.bfloat16),
                   jnp.ones((1, dims[i + 1]), jnp.float32),
                   jnp.zeros((1, dims[i + 1]), jnp.float32)]
    # Layer 5 (padded to 896 output lanes)
    w5, b5 = lin(4, output_dim)
    w5p = jnp.zeros((HIDDEN[3], OUTPUT_PAD), jnp.float32).at[:, :output_dim].set(w5)
    b5p = jnp.zeros((1, OUTPUT_PAD), jnp.float32).at[:, :output_dim].set(b5)
    params += [w5p.astype(jnp.bfloat16), b5p]
    return params


def reference_forward(z, params):
    """Pure-JAX reference: same precision recipe (bf16 matmul inputs, f32
    accumulation, f32 elementwise) but with the *centered* two-pass BN, to
    validate the kernel's one-pass statistics."""
    (w1, b1, w2, g2, be2, w3, g3, be3, w4, g4, be4, w5, b5) = params

    def mm(x, w):
        return jax.lax.dot_general(x.astype(jnp.bfloat16), w,
                                   (((1,), (0,)), ((), ())),
                                   preferred_element_type=jnp.float32)

    def bn(x, g, b, eps=BN_EPS):
        mean = jnp.mean(x, axis=0, keepdims=True)
        d = x - mean
        var = jnp.mean(d * d, axis=0, keepdims=True)
        scale = g * jax.lax.rsqrt(var + eps)
        return x * scale + (b - mean * scale)

    h = _leaky_relu(mm(z, w1) + b1)
    h = _leaky_relu(bn(mm(h, w2), g2, be2))
    h = _leaky_relu(bn(mm(h, w3), g3, be3))
    h = _leaky_relu(bn(mm(h, w4), g4, be4))
    out = jnp.tanh(mm(h, w5) + b5).astype(jnp.bfloat16)
    return out[:, :OUTPUT_DIM]


if __name__ == "__main__":
    key = jax.random.PRNGKey(0)
    k_param, k_z = jax.random.split(key)

    # Small demo batch (multiple of 8, >1 so BN batch stats are defined).
    # For real throughput, batch per call should be >= 256 to amortize
    # weight DMA / MXU weight loads.
    B = 64
    params = init_params(k_param)
    z = jax.random.normal(k_z, (B, LATENT_DIM), jnp.float32)

    out = jax.block_until_ready(generator_forward(z, params))
    ref = jax.block_until_ready(reference_forward(z, params))

    assert out.shape == (B, OUTPUT_DIM), out.shape
    assert out.dtype == jnp.bfloat16, out.dtype
    max_err = float(jnp.max(jnp.abs(out.astype(jnp.float32)
                                    - ref.astype(jnp.float32))))
    # bf16 output quantization (~0.004 near |x|~1) + one-pass-vs-centered BN.
    assert max_err < 1e-2, max_err

    print("KERNEL_OK")
</pallas_src>

<mosaic_0001>
module attributes {stable_mosaic.version = 11 : i64} {
  func.func @generator_kernel(%arg0: memref<64x32xbf16, #tpu.memory_space<vmem>>, %arg1: memref<32x128xbf16, #tpu.memory_space<vmem>>, %arg2: memref<1x128xf32, #tpu.memory_space<vmem>>, %arg3: memref<128x256xbf16, #tpu.memory_space<vmem>>, %arg4: memref<1x256xf32, #tpu.memory_space<vmem>>, %arg5: memref<1x256xf32, #tpu.memory_space<vmem>>, %arg6: memref<256x512xbf16, #tpu.memory_space<vmem>>, %arg7: memref<1x512xf32, #tpu.memory_space<vmem>>, %arg8: memref<1x512xf32, #tpu.memory_space<vmem>>, %arg9: memref<512x1024xbf16, #tpu.memory_space<any>>, %arg10: memref<1x1024xf32, #tpu.memory_space<vmem>>, %arg11: memref<1x1024xf32, #tpu.memory_space<vmem>>, %arg12: memref<1024x896xbf16, #tpu.memory_space<any>>, %arg13: memref<1x896xf32, #tpu.memory_space<vmem>>, %arg14: memref<64x896xbf16, #tpu.memory_space<vmem>>, %arg15: memref<512x1024xbf16, #tpu.memory_space<vmem>>, %arg16: memref<1024x896xbf16, #tpu.memory_space<vmem>>, %arg17: memref<2x!tpu.dma_semaphore, #tpu.memory_space<semaphore_mem>>) attributes {dimension_semantics = [], scalar_prefetch = 0 : i64, scratch_operands = 3 : i64, tpu.core_type = #tpu.core_type<tc>} {
    %c0_i32 = arith.constant 0 : i32
    %0 = tpu.memref_slice %arg17[%c0_i32] : memref<2x!tpu.dma_semaphore, #tpu.memory_space<semaphore_mem>> -> memref<1x!tpu.dma_semaphore, #tpu.memory_space<semaphore_mem>>
    %1 = tpu.memref_squeeze %0 : memref<1x!tpu.dma_semaphore, #tpu.memory_space<semaphore_mem>> -> memref<!tpu.dma_semaphore, #tpu.memory_space<semaphore_mem>>
    tpu.enqueue_dma source(%arg9 : memref<512x1024xbf16, #tpu.memory_space<any>>) target(%arg15 : memref<512x1024xbf16, #tpu.memory_space<vmem>>) target_semaphore(%1 : memref<!tpu.dma_semaphore, #tpu.memory_space<semaphore_mem>>)
    %c1_i32 = arith.constant 1 : i32
    %2 = tpu.memref_slice %arg17[%c1_i32] : memref<2x!tpu.dma_semaphore, #tpu.memory_space<semaphore_mem>> -> memref<1x!tpu.dma_semaphore, #tpu.memory_space<semaphore_mem>>
    %3 = tpu.memref_squeeze %2 : memref<1x!tpu.dma_semaphore, #tpu.memory_space<semaphore_mem>> -> memref<!tpu.dma_semaphore, #tpu.memory_space<semaphore_mem>>
    tpu.enqueue_dma source(%arg12 : memref<1024x896xbf16, #tpu.memory_space<any>>) target(%arg16 : memref<1024x896xbf16, #tpu.memory_space<vmem>>) target_semaphore(%3 : memref<!tpu.dma_semaphore, #tpu.memory_space<semaphore_mem>>)
    %c0 = arith.constant 0 : index
    %c0_0 = arith.constant 0 : index
    %4 = vector.load %arg0[%c0, %c0_0] : memref<64x32xbf16, #tpu.memory_space<vmem>>, vector<64x32xbf16>
    %c0_1 = arith.constant 0 : index
    %c0_2 = arith.constant 0 : index
    %5 = vector.load %arg1[%c0_1, %c0_2] : memref<32x128xbf16, #tpu.memory_space<vmem>>, vector<32x128xbf16>
    %cst = arith.constant dense<0.000000e+00> : vector<64x128xf32>
    %6 = tpu.matmul %4, %5, %cst {dimension_numbers = #tpu.dot_dimension_numbers<[1], [0], [0], [1], [0, 0, 1, 1], [], []>} : vector<64x32xbf16>, vector<32x128xbf16>, vector<64x128xf32> -> vector<64x128xf32>
    %c0_3 = arith.constant 0 : index
    %c0_4 = arith.constant 0 : index
    %7 = vector.load %arg2[%c0_3, %c0_4] : memref<1x128xf32, #tpu.memory_space<vmem>>, vector<1x128xf32>
    %8 = vector.broadcast %7 : vector<1x128xf32> to vector<64x128xf32>
    %9 = arith.addf %6, %8 : vector<64x128xf32>
    %cst_5 = arith.constant 2.000000e-01 : f32
    %10 = vector.broadcast %cst_5 : f32 to vector<64x128xf32>
    %11 = arith.mulf %10, %9 : vector<64x128xf32>
    %12 = arith.maximumf %9, %11 : vector<64x128xf32>
    %13 = arith.truncf %12 : vector<64x128xf32> to vector<64x128xbf16>
    %c0_6 = arith.constant 0 : index
    %c0_7 = arith.constant 0 : index
    %14 = vector.load %arg3[%c0_6, %c0_7] : memref<128x256xbf16, #tpu.memory_space<vmem>>, vector<128x256xbf16>
    %cst_8 = arith.constant dense<0.000000e+00> : vector<64x256xf32>
    %15 = tpu.matmul %13, %14, %cst_8 {dimension_numbers = #tpu.dot_dimension_numbers<[1], [0], [0], [1], [0, 0, 1, 1], [], []>} : vector<64x128xbf16>, vector<128x256xbf16>, vector<64x256xf32> -> vector<64x256xf32>
    %c0_9 = arith.constant 0 : index
    %c0_10 = arith.constant 0 : index
    %16 = vector.load %arg4[%c0_9, %c0_10] : memref<1x256xf32, #tpu.memory_space<vmem>>, vector<1x256xf32>
    %c0_11 = arith.constant 0 : index
    %c0_12 = arith.constant 0 : index
    %17 = vector.load %arg5[%c0_11, %c0_12] : memref<1x256xf32, #tpu.memory_space<vmem>>, vector<1x256xf32>
    %cst_13 = arith.constant dense<0.000000e+00> : vector<256xf32>
    %18 = vector.multi_reduction <add>, %15, %cst_13 [0] : vector<64x256xf32> to vector<256xf32>
    %19 = vector.shape_cast %18 : vector<256xf32> to vector<1x256xf32>
    %cst_14 = arith.constant 1.562500e-02 : f32
    %20 = vector.broadcast %cst_14 : f32 to vector<1x256xf32>
    %21 = arith.mulf %19, %20 : vector<1x256xf32>
    %22 = arith.mulf %15, %15 : vector<64x256xf32>
    %cst_15 = arith.constant dense<0.000000e+00> : vector<256xf32>
    %23 = vector.multi_reduction <add>, %22, %cst_15 [0] : vector<64x256xf32> to vector<256xf32>
    %24 = vector.shape_cast %23 : vector<256xf32> to vector<1x256xf32>
    %cst_16 = arith.constant 1.562500e-02 : f32
    %25 = vector.broadcast %cst_16 : f32 to vector<1x256xf32>
    %26 = arith.mulf %24, %25 : vector<1x256xf32>
    %27 = arith.mulf %21, %21 : vector<1x256xf32>
    %28 = arith.subf %26, %27 : vector<1x256xf32>
    %cst_17 = arith.constant 0.000000e+00 : f32
    %29 = vector.broadcast %cst_17 : f32 to vector<1x256xf32>
    %30 = arith.maximumf %28, %29 : vector<1x256xf32>
    %cst_18 = arith.constant 9.99999974E-6 : f32
    %31 = vector.broadcast %cst_18 : f32 to vector<1x256xf32>
    %32 = arith.addf %30, %31 : vector<1x256xf32>
    %33 = math.rsqrt %32 : vector<1x256xf32>
    %34 = arith.mulf %16, %33 : vector<1x256xf32>
    %35 = arith.mulf %21, %34 : vector<1x256xf32>
    %36 = arith.subf %17, %35 : vector<1x256xf32>
    %37 = vector.broadcast %34 : vector<1x256xf32> to vector<64x256xf32>
    %38 = arith.mulf %15, %37 : vector<64x256xf32>
    %39 = vector.broadcast %36 : vector<1x256xf32> to vector<64x256xf32>
    %40 = arith.addf %38, %39 : vector<64x256xf32>
    %cst_19 = arith.constant 2.000000e-01 : f32
    %41 = vector.broadcast %cst_19 : f32 to vector<64x256xf32>
    %42 = arith.mulf %41, %40 : vector<64x256xf32>
    %43 = arith.maximumf %40, %42 : vector<64x256xf32>
    %44 = arith.truncf %43 : vector<64x256xf32> to vector<64x256xbf16>
    %c0_20 = arith.constant 0 : index
    %c0_21 = arith.constant 0 : index
    %45 = vector.load %arg6[%c0_20, %c0_21] : memref<256x512xbf16, #tpu.memory_space<vmem>>, vector<256x512xbf16>
    %cst_22 = arith.constant dense<0.000000e+00> : vector<64x512xf32>
    %46 = tpu.matmul %44, %45, %cst_22 {dimension_numbers = #tpu.dot_dimension_numbers<[1], [0], [0], [1], [0, 0, 1, 1], [], []>} : vector<64x256xbf16>, vector<256x512xbf16>, vector<64x512xf32> -> vector<64x512xf32>
    %c0_23 = arith.constant 0 : index
    %c0_24 = arith.constant 0 : index
    %47 = vector.load %arg7[%c0_23, %c0_24] : memref<1x512xf32, #tpu.memory_space<vmem>>, vector<1x512xf32>
    %c0_25 = arith.constant 0 : index
    %c0_26 = arith.constant 0 : index
    %48 = vector.load %arg8[%c0_25, %c0_26] : memref<1x512xf32, #tpu.memory_space<vmem>>, vector<1x512xf32>
    %cst_27 = arith.constant dense<0.000000e+00> : vector<512xf32>
    %49 = vector.multi_reduction <add>, %46, %cst_27 [0] : vector<64x512xf32> to vector<512xf32>
    %50 = vector.shape_cast %49 : vector<512xf32> to vector<1x512xf32>
    %cst_28 = arith.constant 1.562500e-02 : f32
    %51 = vector.broadcast %cst_28 : f32 to vector<1x512xf32>
    %52 = arith.mulf %50, %51 : vector<1x512xf32>
    %53 = arith.mulf %46, %46 : vector<64x512xf32>
    %cst_29 = arith.constant dense<0.000000e+00> : vector<512xf32>
    %54 = vector.multi_reduction <add>, %53, %cst_29 [0] : vector<64x512xf32> to vector<512xf32>
    %55 = vector.shape_cast %54 : vector<512xf32> to vector<1x512xf32>
    %cst_30 = arith.constant 1.562500e-02 : f32
    %56 = vector.broadcast %cst_30 : f32 to vector<1x512xf32>
    %57 = arith.mulf %55, %56 : vector<1x512xf32>
    %58 = arith.mulf %52, %52 : vector<1x512xf32>
    %59 = arith.subf %57, %58 : vector<1x512xf32>
    %cst_31 = arith.constant 0.000000e+00 : f32
    %60 = vector.broadcast %cst_31 : f32 to vector<1x512xf32>
    %61 = arith.maximumf %59, %60 : vector<1x512xf32>
    %cst_32 = arith.constant 9.99999974E-6 : f32
    %62 = vector.broadcast %cst_32 : f32 to vector<1x512xf32>
    %63 = arith.addf %61, %62 : vector<1x512xf32>
    %64 = math.rsqrt %63 : vector<1x512xf32>
    %65 = arith.mulf %47, %64 : vector<1x512xf32>
    %66 = arith.mulf %52, %65 : vector<1x512xf32>
    %67 = arith.subf %48, %66 : vector<1x512xf32>
    %68 = vector.broadcast %65 : vector<1x512xf32> to vector<64x512xf32>
    %69 = arith.mulf %46, %68 : vector<64x512xf32>
    %70 = vector.broadcast %67 : vector<1x512xf32> to vector<64x512xf32>
    %71 = arith.addf %69, %70 : vector<64x512xf32>
    %cst_33 = arith.constant 2.000000e-01 : f32
    %72 = vector.broadcast %cst_33 : f32 to vector<64x512xf32>
    %73 = arith.mulf %72, %71 : vector<64x512xf32>
    %74 = arith.maximumf %71, %73 : vector<64x512xf32>
    %c0_i32_34 = arith.constant 0 : i32
    %75 = tpu.memref_slice %arg17[%c0_i32_34] : memref<2x!tpu.dma_semaphore, #tpu.memory_space<semaphore_mem>> -> memref<1x!tpu.dma_semaphore, #tpu.memory_space<semaphore_mem>>
    %76 = tpu.memref_squeeze %75 : memref<1x!tpu.dma_semaphore, #tpu.memory_space<semaphore_mem>> -> memref<!tpu.dma_semaphore, #tpu.memory_space<semaphore_mem>>
    tpu.wait_dma2 semaphore(%76 : memref<!tpu.dma_semaphore, #tpu.memory_space<semaphore_mem>>) src(%arg9 : memref<512x1024xbf16, #tpu.memory_space<any>>) dst(%arg15 : memref<512x1024xbf16, #tpu.memory_space<vmem>>)
    %77 = arith.truncf %74 : vector<64x512xf32> to vector<64x512xbf16>
    %c0_35 = arith.constant 0 : index
    %c0_36 = arith.constant 0 : index
    %78 = vector.load %arg15[%c0_35, %c0_36] : memref<512x1024xbf16, #tpu.memory_space<vmem>>, vector<512x1024xbf16>
    %cst_37 = arith.constant dense<0.000000e+00> : vector<64x1024xf32>
    %79 = tpu.matmul %77, %78, %cst_37 {dimension_numbers = #tpu.dot_dimension_numbers<[1], [0], [0], [1], [0, 0, 1, 1], [], []>} : vector<64x512xbf16>, vector<512x1024xbf16>, vector<64x1024xf32> -> vector<64x1024xf32>
    %c0_38 = arith.constant 0 : index
    %c0_39 = arith.constant 0 : index
    %80 = vector.load %arg10[%c0_38, %c0_39] : memref<1x1024xf32, #tpu.memory_space<vmem>>, vector<1x1024xf32>
    %c0_40 = arith.constant 0 : index
    %c0_41 = arith.constant 0 : index
    %81 = vector.load %arg11[%c0_40, %c0_41] : memref<1x1024xf32, #tpu.memory_space<vmem>>, vector<1x1024xf32>
    %cst_42 = arith.constant dense<0.000000e+00> : vector<1024xf32>
    %82 = vector.multi_reduction <add>, %79, %cst_42 [0] : vector<64x1024xf32> to vector<1024xf32>
    %83 = vector.shape_cast %82 : vector<1024xf32> to vector<1x1024xf32>
    %cst_43 = arith.constant 1.562500e-02 : f32
    %84 = vector.broadcast %cst_43 : f32 to vector<1x1024xf32>
    %85 = arith.mulf %83, %84 : vector<1x1024xf32>
    %86 = arith.mulf %79, %79 : vector<64x1024xf32>
    %cst_44 = arith.constant dense<0.000000e+00> : vector<1024xf32>
    %87 = vector.multi_reduction <add>, %86, %cst_44 [0] : vector<64x1024xf32> to vector<1024xf32>
    %88 = vector.shape_cast %87 : vector<1024xf32> to vector<1x1024xf32>
    %cst_45 = arith.constant 1.562500e-02 : f32
    %89 = vector.broadcast %cst_45 : f32 to vector<1x1024xf32>
    %90 = arith.mulf %88, %89 : vector<1x1024xf32>
    %91 = arith.mulf %85, %85 : vector<1x1024xf32>
    %92 = arith.subf %90, %91 : vector<1x1024xf32>
    %cst_46 = arith.constant 0.000000e+00 : f32
    %93 = vector.broadcast %cst_46 : f32 to vector<1x1024xf32>
    %94 = arith.maximumf %92, %93 : vector<1x1024xf32>
    %cst_47 = arith.constant 9.99999974E-6 : f32
    %95 = vector.broadcast %cst_47 : f32 to vector<1x1024xf32>
    %96 = arith.addf %94, %95 : vector<1x1024xf32>
    %97 = math.rsqrt %96 : vector<1x1024xf32>
    %98 = arith.mulf %80, %97 : vector<1x1024xf32>
    %99 = arith.mulf %85, %98 : vector<1x1024xf32>
    %100 = arith.subf %81, %99 : vector<1x1024xf32>
    %101 = vector.broadcast %98 : vector<1x1024xf32> to vector<64x1024xf32>
    %102 = arith.mulf %79, %101 : vector<64x1024xf32>
    %103 = vector.broadcast %100 : vector<1x1024xf32> to vector<64x1024xf32>
    %104 = arith.addf %102, %103 : vector<64x1024xf32>
    %cst_48 = arith.constant 2.000000e-01 : f32
    %105 = vector.broadcast %cst_48 : f32 to vector<64x1024xf32>
    %106 = arith.mulf %105, %104 : vector<64x1024xf32>
    %107 = arith.maximumf %104, %106 : vector<64x1024xf32>
    %c1_i32_49 = arith.constant 1 : i32
    %108 = tpu.memref_slice %arg17[%c1_i32_49] : memref<2x!tpu.dma_semaphore, #tpu.memory_space<semaphore_mem>> -> memref<1x!tpu.dma_semaphore, #tpu.memory_space<semaphore_mem>>
    %109 = tpu.memref_squeeze %108 : memref<1x!tpu.dma_semaphore, #tpu.memory_space<semaphore_mem>> -> memref<!tpu.dma_semaphore, #tpu.memory_space<semaphore_mem>>
    tpu.wait_dma2 semaphore(%109 : memref<!tpu.dma_semaphore, #tpu.memory_space<semaphore_mem>>) src(%arg12 : memref<1024x896xbf16, #tpu.memory_space<any>>) dst(%arg16 : memref<1024x896xbf16, #tpu.memory_space<vmem>>)
    %110 = arith.truncf %107 : vector<64x1024xf32> to vector<64x1024xbf16>
    %c0_50 = arith.constant 0 : index
    %c0_51 = arith.constant 0 : index
    %111 = vector.load %arg16[%c0_50, %c0_51] : memref<1024x896xbf16, #tpu.memory_space<vmem>>, vector<1024x896xbf16>
    %cst_52 = arith.constant dense<0.000000e+00> : vector<64x896xf32>
    %112 = tpu.matmul %110, %111, %cst_52 {dimension_numbers = #tpu.dot_dimension_numbers<[1], [0], [0], [1], [0, 0, 1, 1], [], []>} : vector<64x1024xbf16>, vector<1024x896xbf16>, vector<64x896xf32> -> vector<64x896xf32>
    %c0_53 = arith.constant 0 : index
    %c0_54 = arith.constant 0 : index
    %113 = vector.load %arg13[%c0_53, %c0_54] : memref<1x896xf32, #tpu.memory_space<vmem>>, vector<1x896xf32>
    %114 = vector.broadcast %113 : vector<1x896xf32> to vector<64x896xf32>
    %115 = arith.addf %112, %114 : vector<64x896xf32>
    %116 = math.tanh %115 : vector<64x896xf32>
    %117 = arith.truncf %116 : vector<64x896xf32> to vector<64x896xbf16>
    %c0_55 = arith.constant 0 : index
    %c0_56 = arith.constant 0 : index
    %118 = vector.load %arg14[%c0_55, %c0_56] : memref<64x896xbf16, #tpu.memory_space<vmem>>, vector<64x896xbf16>
    tpu.vector_store %arg14[%c0_55, %c0_56], %117 {strides = array<i32>} : memref<64x896xbf16, #tpu.memory_space<vmem>>, vector<64x896xbf16>,
    return
  }
}

</mosaic_0001>

<llo_original>
// kernel: tpu_custom_call.1
$region0: #{tpu_custom_call.1}
  #allocation0 [shape = 'u32[]', space=smem, size = 0x4, offset = 0x4, fixed_abs, tag = 'smem constant byte address 0x4 - core index']
  #allocation1 [shape = 'u32[144,128]{1,0:T(1,128)}', space=vmem, size = 0x12000, scoped, tag = 'internal scratch']
  #allocation2 [shape = 'bf16[512,1024]{1,0:T(16,128)(2,1)}', space=vmem, size = 0x100000, scoped, tag = 'scratch operand']
  #allocation3 [shape = 'bf16[1024,896]{1,0:T(16,128)(2,1)}', space=vmem, size = 0x1c0000, scoped, tag = 'scratch operand']
  #allocation4 [shape = 's32[2]{0}', space=sflag, size = 0x8, scoped, tag = 'scratch operand']
  #allocation24 [shape = 's32[]', space=sflag, size = 0x4, offset = 0, fixed_abs, tag = 'sflag constant byte address 0x0 - dummy sync flag']
  #allocation26 [shape = 's32[]', space=sflag, size = 0x4, offset = 0, fixed_abs, tag = 'sflag constant byte address 0x0 - dummy sync flag']
  %s0 = inlined_call_operand.vmem [shape: bf16[64,32], index: 0, kind: input, shape index: {}]
  %s1 = inlined_call_operand.hbm [shape: bf16[32,128], index: 1, kind: input, shape index: {}]
  %s2 = inlined_call_operand.hbm [shape: f32[1,128], index: 2, kind: input, shape index: {}]
  %s3 = inlined_call_operand.hbm [shape: bf16[128,256], index: 3, kind: input, shape index: {}]
  %s4 = inlined_call_operand.hbm [shape: f32[1,256], index: 4, kind: input, shape index: {}]
  %s5 = inlined_call_operand.hbm [shape: f32[1,256], index: 5, kind: input, shape index: {}]
  %s6 = inlined_call_operand.hbm [shape: bf16[256,512], index: 6, kind: input, shape index: {}]
  %s7 = inlined_call_operand.hbm [shape: f32[1,512], index: 7, kind: input, shape index: {}]
  %s8 = inlined_call_operand.hbm [shape: f32[1,512], index: 8, kind: input, shape index: {}]
  %s9 = inlined_call_operand.hbm [shape: bf16[512,1024], index: 9, kind: input, shape index: {}]
  %s10 = inlined_call_operand.hbm [shape: f32[1,1024], index: 10, kind: input, shape index: {}]
  %s11 = inlined_call_operand.hbm [shape: f32[1,1024], index: 11, kind: input, shape index: {}]
  %s12 = inlined_call_operand.hbm [shape: bf16[1024,896], index: 12, kind: input, shape index: {}]
  %s13 = inlined_call_operand.hbm [shape: f32[1,896], index: 13, kind: input, shape index: {}]
  %s14 = inlined_call_operand.hbm [shape: bf16[64,896], index: 14, kind: output, shape index: {}]
  %s15 = sld [smem:[#allocation0]]
  $region102: #{tpu_custom_call.1} parent=0
    _
  %s17 = ssub.s32 1, %s15
  %s18 = scalar_select 0, %s17, %s15
  $region1: #{tpu_custom_call.1} parent=0
    #allocation5 [shape = 'u8[8192]{0}', space=vmem, size = 0x2000, scoped, tag = 'input window, operand 1, single buffered']
    #allocation6 [shape = 's32[1]{0}', space=sflag, size = 0x4, scoped, tag = 'scoped memory for tpu_custom_call.1']
    #allocation7 [shape = 's32[1]{0}', space=sflag, size = 0x4, scoped, tag = 'scoped memory for tpu_custom_call.1']
    #allocation8 [shape = 'u8[512]{0}', space=vmem, size = 0x400, scoped, tag = 'input window, operand 2, single buffered']
    #allocation9 [shape = 's32[1]{0}', space=sflag, size = 0x4, scoped, tag = 'scoped memory for tpu_custom_call.1']
    #allocation10 [shape = 'u8[65536]{0}', space=vmem, size = 0x10000, scoped, tag = 'input window, operand 3, single buffered']
    #allocation11 [shape = 'u8[1024]{0}', space=vmem, size = 0x400, scoped, tag = 'input window, operand 4, single buffered']
    #allocation12 [shape = 's32[1]{0}', space=sflag, size = 0x4, scoped, tag = 'scoped memory for tpu_custom_call.1']
    #allocation13 [shape = 'u8[1024]{0}', space=vmem, size = 0x400, scoped, tag = 'input window, operand 5, single buffered']
    #allocation14 [shape = 'u8[262144]{0}', space=vmem, size = 0x40000, scoped, tag = 'input window, operand 6, single buffered']
    #allocation15 [shape = 's32[1]{0}', space=sflag, size = 0x4, scoped, tag = 'scoped memory for tpu_custom_call.1']
    #allocation16 [shape = 'u8[2048]{0}', space=vmem, size = 0x800, scoped, tag = 'input window, operand 7, single buffered']
    #allocation17 [shape = 'u8[2048]{0}', space=vmem, size = 0x800, scoped, tag = 'input window, operand 8, single buffered']
    #allocation18 [shape = 's32[1]{0}', space=sflag, size = 0x4, scoped, tag = 'scoped memory for tpu_custom_call.1']
    #allocation19 [shape = 'u8[4096]{0}', space=vmem, size = 0x1000, scoped, tag = 'input window, operand 10, single buffered']
    #allocation20 [shape = 'u8[4096]{0}', space=vmem, size = 0x1000, scoped, tag = 'input window, operand 11, single buffered']
    #allocation21 [shape = 's32[1]{0}', space=sflag, size = 0x4, scoped, tag = 'scoped memory for tpu_custom_call.1']
    #allocation22 [shape = 'u8[3584]{0}', space=vmem, size = 0x1000, scoped, tag = 'input window, operand 13, single buffered']
    #allocation23 [shape = 'u8[114688]{0}', space=vmem, size = 0x1c000, scoped, tag = 'output window, operand 0, single buffered']
    #allocation25 [shape = 'u32[9]{0}', space=smem, size = 0x24, scoped, tag = 'DMA stride descriptor']
    #allocation27 [shape = 'u32[9]{0}', space=smem, size = 0x24, scoped, tag = 'DMA stride descriptor']
    %19 = vsyncpa [#allocation6], 0
    %20 = vsyncpa [#allocation9], 0
    %21 = vsyncpa [#allocation12], 0
    %22 = vsyncpa [#allocation15], 0
    %23 = vsyncpa [#allocation18], 0
    %24 = vsyncpa [#allocation21], 0
    %25 = vsyncpa [#allocation7], 0
    // Predicated region
    $region2: #{tpu_custom_call.1} parent=1 // pred_check
      _
    $region3: #{tpu_custom_call.1} parent=1 // pred_check_branch
      %27 = sbr.rel (0) target = $region5
    $region4: #{tpu_custom_call.1} parent=1 // pred_region
      _
    $region5: #{tpu_custom_call.1} parent=1 // pred_fallthru
      _
    // Predicated region
    $region6: #{tpu_custom_call.1} parent=1 // pred_check
      _
    $region7: #{tpu_custom_call.1} parent=1 // pred_check_branch
      %29 = sbr.rel (0) target = $region9
    $region8: #{tpu_custom_call.1} parent=1 // pred_region
      %s31 = ssub.s32 256, 256
      %32 = vsyncadd [#allocation6], %s31
      %s33 = sshll.u32 [#allocation5], 4
      %s34 = int_to_ptr.vmem [resolvable:$true] %s33
      %39 = dma.hbm_to_vmem [thread:$0]  %s1, 256, %s34, [#allocation6], 64, 64, 4
    $region9: #{tpu_custom_call.1} parent=1 // pred_fallthru
      _
    // Predicated region
    $region10: #{tpu_custom_call.1} parent=1 // pred_check
      _
    $region11: #{tpu_custom_call.1} parent=1 // pred_check_branch
      %41 = sbr.rel (0) target = $region13
    $region12: #{tpu_custom_call.1} parent=1 // pred_region
      %s43 = ssub.s32 16, 16
      %44 = vsyncadd [#allocation9], %s43
      %s46 = sshll.u32 [#allocation8], 4
      %s47 = int_to_ptr.vmem [resolvable:$true] %s46
      %49 = dma.hbm_to_vmem [thread:$0]  %s2, 16, %s47, [#allocation9]
    $region13: #{tpu_custom_call.1} parent=1 // pred_fallthru
      _
    // Predicated region
    $region14: #{tpu_custom_call.1} parent=1 // pred_check
      _
    $region15: #{tpu_custom_call.1} parent=1 // pred_check_branch
      %51 = sbr.rel (0) target = $region17
    $region16: #{tpu_custom_call.1} parent=1 // pred_region
      %s53 = ssub.s32 2048, 2048
      %54 = vsyncadd [#allocation9], %s53
      %s55 = sshll.u32 [#allocation10], 4
      %s56 = int_to_ptr.vmem [resolvable:$true] %s55
      %61 = dma.hbm_to_vmem [thread:$0]  %s3, 2048, %s56, [#allocation9], 128, 128, 8
    $region17: #{tpu_custom_call.1} parent=1 // pred_fallthru
      _
    // Predicated region
    $region18: #{tpu_custom_call.1} parent=1 // pred_check
      _
    $region19: #{tpu_custom_call.1} parent=1 // pred_check_branch
      %63 = sbr.rel (0) target = $region21
    $region20: #{tpu_custom_call.1} parent=1 // pred_region
      %s65 = ssub.s32 32, 32
      %66 = vsyncadd [#allocation12], %s65
      %s68 = sshll.u32 [#allocation11], 4
      %s69 = int_to_ptr.vmem [resolvable:$true] %s68
      %71 = dma.hbm_to_vmem [thread:$0]  %s4, 32, %s69, [#allocation12]
    $region21: #{tpu_custom_call.1} parent=1 // pred_fallthru
      _
    // Predicated region
    $region22: #{tpu_custom_call.1} parent=1 // pred_check
      _
    $region23: #{tpu_custom_call.1} parent=1 // pred_check_branch
      %73 = sbr.rel (0) target = $region25
    $region24: #{tpu_custom_call.1} parent=1 // pred_region
      %s75 = ssub.s32 32, 32
      %76 = vsyncadd [#allocation12], %s75
      %s78 = sshll.u32 [#allocation13], 4
      %s79 = int_to_ptr.vmem [resolvable:$true] %s78
      %81 = dma.hbm_to_vmem [thread:$0]  %s5, 32, %s79, [#allocation12]
    $region25: #{tpu_custom_call.1} parent=1 // pred_fallthru
      _
    // Predicated region
    $region26: #{tpu_custom_call.1} parent=1 // pred_check
      _
    $region27: #{tpu_custom_call.1} parent=1 // pred_check_branch
      %83 = sbr.rel (0) target = $region29
    $region28: #{tpu_custom_call.1} parent=1 // pred_region
      %s85 = ssub.s32 8192, 8192
      %86 = vsyncadd [#allocation15], %s85
      %s87 = sshll.u32 [#allocation14], 4
      %s88 = int_to_ptr.vmem [resolvable:$true] %s87
      %93 = dma.hbm_to_vmem [thread:$0]  %s6, 8192, %s88, [#allocation15], 256, 256, 16
    $region29: #{tpu_custom_call.1} parent=1 // pred_fallthru
      _
    // Predicated region
    $region30: #{tpu_custom_call.1} parent=1 // pred_check
      _
    $region31: #{tpu_custom_call.1} parent=1 // pred_check_branch
      %95 = sbr.rel (0) target = $region33
    $region32: #{tpu_custom_call.1} parent=1 // pred_region
      %s97 = ssub.s32 64, 64
      %98 = vsyncadd [#allocation15], %s97
      %s100 = sshll.u32 [#allocation16], 4
      %s101 = int_to_ptr.vmem [resolvable:$true] %s100
      %103 = dma.hbm_to_vmem [thread:$0]  %s7, 64, %s101, [#allocation15]
    $region33: #{tpu_custom_call.1} parent=1 // pred_fallthru
      _
    // Predicated region
    $region34: #{tpu_custom_call.1} parent=1 // pred_check
      _
    $region35: #{tpu_custom_call.1} parent=1 // pred_check_branch
      %105 = sbr.rel (0) target = $region37
    $region36: #{tpu_custom_call.1} parent=1 // pred_region
      %s107 = ssub.s32 64, 64
      %108 = vsyncadd [#allocation18], %s107
      %s110 = sshll.u32 [#allocation17], 4
      %s111 = int_to_ptr.vmem [resolvable:$true] %s110
      %113 = dma.hbm_to_vmem [thread:$0]  %s8, 64, %s111, [#allocation18]
    $region37: #{tpu_custom_call.1} parent=1 // pred_fallthru
      _
    // Predicated region
    $region38: #{tpu_custom_call.1} parent=1 // pred_check
      _
    $region39: #{tpu_custom_call.1} parent=1 // pred_check_branch
      %115 = sbr.rel (0) target = $region41
    $region40: #{tpu_custom_call.1} parent=1 // pred_region
      %s117 = ssub.s32 128, 128
      %118 = vsyncadd [#allocation18], %s117
      %s120 = sshll.u32 [#allocation19], 4
      %s121 = int_to_ptr.vmem [resolvable:$true] %s120
      %123 = dma.hbm_to_vmem [thread:$0]  %s10, 128, %s121, [#allocation18]
    $region41: #{tpu_custom_call.1} parent=1 // pred_fallthru
      _
    // Predicated region
    $region42: #{tpu_custom_call.1} parent=1 // pred_check
      _
    $region43: #{tpu_custom_call.1} parent=1 // pred_check_branch
      %125 = sbr.rel (0) target = $region45
    $region44: #{tpu_custom_call.1} parent=1 // pred_region
      %s127 = ssub.s32 128, 128
      %128 = vsyncadd [#allocation21], %s127
      %s130 = sshll.u32 [#allocation20], 4
      %s131 = int_to_ptr.vmem [resolvable:$true] %s130
      %133 = dma.hbm_to_vmem [thread:$0]  %s11, 128, %s131, [#allocation21]
    $region45: #{tpu_custom_call.1} parent=1 // pred_fallthru
      _
    // Predicated region
    $region46: #{tpu_custom_call.1} parent=1 // pred_check
      _
    $region47: #{tpu_custom_call.1} parent=1 // pred_check_branch
      %135 = sbr.rel (0) target = $region49
    $region48: #{tpu_custom_call.1} parent=1 // pred_region
      %s137 = ssub.s32 112, 112
      %138 = vsyncadd [#allocation21], %s137
      %s140 = sshll.u32 [#allocation22], 4
      %s141 = int_to_ptr.vmem [resolvable:$true] %s140
      %143 = dma.hbm_to_vmem [thread:$0]  %s13, 112, %s141, [#allocation21]
    $region49: #{tpu_custom_call.1} parent=1 // pred_fallthru
      _
    // Predicated region
    $region50: #{tpu_custom_call.1} parent=1 // pred_check
      _
    $region51: #{tpu_custom_call.1} parent=1 // pred_check_branch
      %145 = sbr.rel (0) target = $region53
    $region52: #{tpu_custom_call.1} parent=1 // pred_region
      %146 = dma.done [#allocation6], 256
    $region53: #{tpu_custom_call.1} parent=1 // pred_fallthru
      _
    // Predicated region
    $region54: #{tpu_custom_call.1} parent=1 // pred_check
      _
    $region55: #{tpu_custom_call.1} parent=1 // pred_check_branch
      %148 = sbr.rel (0) target = $region57
    $region56: #{tpu_custom_call.1} parent=1 // pred_region
      %149 = dma.done [#allocation9], 16
    $region57: #{tpu_custom_call.1} parent=1 // pred_fallthru
      _
    // Predicated region
    $region58: #{tpu_custom_call.1} parent=1 // pred_check
      _
    $region59: #{tpu_custom_call.1} parent=1 // pred_check_branch
      %151 = sbr.rel (0) target = $region61
    $region60: #{tpu_custom_call.1} parent=1 // pred_region
      %152 = dma.done [#allocation9], 2048
    $region61: #{tpu_custom_call.1} parent=1 // pred_fallthru
      _
    // Predicated region
    $region62: #{tpu_custom_call.1} parent=1 // pred_check
      _
    $region63: #{tpu_custom_call.1} parent=1 // pred_check_branch
      %154 = sbr.rel (0) target = $region65
    $region64: #{tpu_custom_call.1} parent=1 // pred_region
      %155 = dma.done [#allocation12], 32
    $region65: #{tpu_custom_call.1} parent=1 // pred_fallthru
      _
    // Predicated region
    $region66: #{tpu_custom_call.1} parent=1 // pred_check
      _
    $region67: #{tpu_custom_call.1} parent=1 // pred_check_branch
      %157 = sbr.rel (0) target = $region69
    $region68: #{tpu_custom_call.1} parent=1 // pred_region
      %158 = dma.done [#allocation12], 32
    $region69: #{tpu_custom_call.1} parent=1 // pred_fallthru
      _
    // Predicated region
    $region70: #{tpu_custom_call.1} parent=1 // pred_check
      _
    $region71: #{tpu_custom_call.1} parent=1 // pred_check_branch
      %160 = sbr.rel (0) target = $region73
    $region72: #{tpu_custom_call.1} parent=1 // pred_region
      %161 = dma.done [#allocation15], 8192
    $region73: #{tpu_custom_call.1} parent=1 // pred_fallthru
      _
    // Predicated region
    $region74: #{tpu_custom_call.1} parent=1 // pred_check
      _
    $region75: #{tpu_custom_call.1} parent=1 // pred_check_branch
      %163 = sbr.rel (0) target = $region77
    $region76: #{tpu_custom_call.1} parent=1 // pred_region
      %164 = dma.done [#allocation15], 64
    $region77: #{tpu_custom_call.1} parent=1 // pred_fallthru
      _
    // Predicated region
    $region78: #{tpu_custom_call.1} parent=1 // pred_check
      _
    $region79: #{tpu_custom_call.1} parent=1 // pred_check_branch
      %166 = sbr.rel (0) target = $region81
    $region80: #{tpu_custom_call.1} parent=1 // pred_region
      %167 = dma.done [#allocation18], 64
    $region81: #{tpu_custom_call.1} parent=1 // pred_fallthru
      _
    // Predicated region
    $region82: #{tpu_custom_call.1} parent=1 // pred_check
      _
    $region83: #{tpu_custom_call.1} parent=1 // pred_check_branch
      %169 = sbr.rel (0) target = $region85
    $region84: #{tpu_custom_call.1} parent=1 // pred_region
      %170 = dma.done [#allocation18], 128
    $region85: #{tpu_custom_call.1} parent=1 // pred_fallthru
      _
    // Predicated region
    $region86: #{tpu_custom_call.1} parent=1 // pred_check
      _
    $region87: #{tpu_custom_call.1} parent=1 // pred_check_branch
      %172 = sbr.rel (0) target = $region89
    $region88: #{tpu_custom_call.1} parent=1 // pred_region
      %173 = dma.done [#allocation21], 128
    $region89: #{tpu_custom_call.1} parent=1 // pred_fallthru
      _
    // Predicated region
    $region90: #{tpu_custom_call.1} parent=1 // pred_check
      _
    $region91: #{tpu_custom_call.1} parent=1 // pred_check_branch
      %175 = sbr.rel (0) target = $region93
    $region92: #{tpu_custom_call.1} parent=1 // pred_region
      %176 = dma.done [#allocation21], 112
    $region93: #{tpu_custom_call.1} parent=1 // pred_fallthru
      _
    %s179 = sshll.u32 1, 14
    %s180 = sxor.u32 4294967295, %s179
    %s182 = sld [smem:[#allocation0]]
    %s183 = sadd.s32 2, %s182
    %s185 = sshll.u32 7, 26
    %s186 = sxor.u32 4294967295, %s185
    %s187 = sand.u32 0, %s186
    %s188 = sshll.u32 %s183, 26
    %s189 = sor.u32 %s187, %s188
    %s190 = sshll.u32 [#allocation2], 4
    %s191 = int_to_ptr.vmem [resolvable:$true] %s190
    %194 = sst [smem:[#allocation25]] 1024
    %s195 = scalar_lea.smem [#allocation25], 1
    %196 = sst [smem:[%s195]] 1024
    %s197 = scalar_lea.smem [#allocation25], 2
    %198 = sst [smem:[%s197]] 8
    %s199 = scalar_lea.smem [#allocation25], 3
    %200 = sst [smem:[%s199]] 64
    %s201 = scalar_lea.smem [#allocation25], 4
    %202 = sst [smem:[%s201]] 128
    %s203 = scalar_lea.smem [#allocation25], 5
    %204 = sst [smem:[%s203]] 2
    %s205 = scalar_lea.smem [#allocation25], 6
    %206 = sst [smem:[%s205]] 512
    %s207 = scalar_lea.smem [#allocation25], 7
    %208 = sst [smem:[%s207]] 64
    %s209 = scalar_lea.smem [#allocation25], 8
    %210 = sst [smem:[%s209]] 4
    %212 = dma.general %s9, 32768, %s191, [#allocation4], [#allocation24], [#allocation25], %s189, 0
    %s213 = scalar_lea.sflag [#allocation4], 1
    %s215 = sshll.u32 1, 14
    %s216 = sxor.u32 4294967295, %s215
    %s218 = sadd.s32 2, %s182
    %s220 = sshll.u32 7, 26
    %s221 = sxor.u32 4294967295, %s220
    %s222 = sand.u32 0, %s221
    %s223 = sshll.u32 %s218, 26
    %s224 = sor.u32 %s222, %s223
    %s225 = sshll.u32 [#allocation3], 4
    %s226 = int_to_ptr.vmem [resolvable:$true] %s225
    %229 = sst [smem:[#allocation27]] 896
    %s230 = scalar_lea.smem [#allocation27], 1
    %231 = sst [smem:[%s230]] 896
    %s232 = scalar_lea.smem [#allocation27], 2
    %233 = sst [smem:[%s232]] 7
    %s234 = scalar_lea.smem [#allocation27], 3
    %235 = sst [smem:[%s234]] 64
    %s236 = scalar_lea.smem [#allocation27], 4
    %237 = sst [smem:[%s236]] 128
    %s238 = scalar_lea.smem [#allocation27], 5
    %239 = sst [smem:[%s238]] 2
    %s240 = scalar_lea.smem [#allocation27], 6
    %241 = sst [smem:[%s240]] 448
    %s242 = scalar_lea.smem [#allocation27], 7
    %243 = sst [smem:[%s242]] 64
    %s244 = scalar_lea.smem [#allocation27], 8
    %245 = sst [smem:[%s244]] 4
    %247 = dma.general %s12, 57344, %s226, %s213, [#allocation26], [#allocation27], %s224, 0
    %v248 = vld [vmem:[%s0] sm:$0xf]
    %v249 = vld [vmem:[%s0 + $0x4] sm:$0xf]
    %v250 = vld [vmem:[%s0 + $0x8] sm:$0xf]
    %v251 = vld [vmem:[%s0 + $0xc] sm:$0xf]
    %v252 = vld [vmem:[%s0 + $0x10] sm:$0xf]
    %v253 = vld [vmem:[%s0 + $0x14] sm:$0xf]
    %v254 = vld [vmem:[%s0 + $0x18] sm:$0xf]
    %v255 = vld [vmem:[%s0 + $0x1c] sm:$0xf]
    %v256 = vld [vmem:[#allocation5] sm:$0xf]
    %v257 = vld [vmem:[#allocation5 + $0x4] sm:$0xf]
    %v258 = vld [vmem:[#allocation5 + $0x8] sm:$0xf]
    %v259 = vld [vmem:[#allocation5 + $0xc] sm:$0xf]
    %v260 = vld [vmem:[#allocation8] sm:$0x1]
    %v262 = vlaneseq
    %v263 = vshrl.u32 %v262, 7
    %v264 = vsub.s32 0, %v263
    %v265 = vrot.slane %v260, %v264
    %v275 = vunpack.c.l.b16 %v248
    %v276 = vunpack.c.l.b16 %v249
    %v277 = vunpack.c.l.b16 %v250
    %v278 = vunpack.c.l.b16 %v251
    %v279 = vunpack.c.l.b16 %v252
    %v280 = vunpack.c.l.b16 %v253
    %v281 = vunpack.c.l.b16 %v254
    %v282 = vunpack.c.l.b16 %v255
    %v283 = vpack.c.b16 %v276, %v275
    %v284 = vpack.c.b16 %v278, %v277
    %v285 = vpack.c.b16 %v280, %v279
    %v286 = vpack.c.b16 %v282, %v281
    %v291 = vunpack.c.l.b16 %v256
    %v292 = vunpack.c.l.b16 %v257
    %v293 = vunpack.c.l.b16 %v258
    %v294 = vunpack.c.l.b16 %v259
    %v295 = vpack.c.b16 %v292, %v291
    %v296 = vpack.c.b16 %v294, %v293
    %vm299 = vcmask 261120
    %v301 = vsel %vm299, %v283, 0
    %v304 = vsel %vm299, %v284, 0
    %v307 = vsel %vm299, %v285, 0
    %v310 = vsel %vm299, %v286, 0
    %312 = vmatprep.subr.bf16.mxu0 0
    %313 = vmatpush1.bf16.msra.mxu0 %v295
    %314 = vmatprep.subr.bf16.mxu0 0
    %315 = vmatpush1.bf16.msra.mxu0 %v296
    %316 = vmatprep.subr.bf16.mxu0 0
    %317 = vmatpush1.bf16.msra.mxu0 0
    %318 = vmatprep.subr.bf16.mxu0 0
    %319 = vmatpush1.bf16.msra.mxu0 0
    %320 = vmatprep.subr.bf16.mxu0 0
    %321 = vmatpush1.bf16.msra.mxu0 0
    %322 = vmatprep.subr.bf16.mxu0 0
    %323 = vmatpush1.bf16.msra.mxu0 0
    %324 = vmatprep.subr.bf16.mxu0 0
    %325 = vmatpush1.bf16.msra.mxu0 0
    %326 = vmatprep.subr.bf16.mxu0 0
    %327 = vmatpush1.bf16.msra.mxu0 0
    %328 = vmatprep.subr.bf16.mxu0 0
    %329 = vmatpush1.bf16.msra.mxu0 0
    %330 = vmatprep.subr.bf16.mxu0 0
    %331 = vmatpush1.bf16.msra.mxu0 0
    %332 = vmatprep.subr.bf16.mxu0 0
    %333 = vmatpush1.bf16.msra.mxu0 0
    %334 = vmatprep.subr.bf16.mxu0 0
    %335 = vmatpush1.bf16.msra.mxu0 0
    %336 = vmatprep.subr.bf16.mxu0 0
    %337 = vmatpush1.bf16.msra.mxu0 0
    %338 = vmatprep.subr.bf16.mxu0 0
    %339 = vmatpush1.bf16.msra.mxu0 0
    %340 = vmatprep.subr.bf16.mxu0 0
    %341 = vmatpush1.bf16.msra.mxu0 0
    %342 = vmatprep.subr.bf16.mxu0 0
    %343 = vmatpush1.bf16.msra.mxu0 0
    %344 = vmatprep.mubr.bf16.mxu0 0
    %345 = vmatmul.mubr.bf16.gmra.mrb[0].mxu0 %v301
    %v346 = vpop.f32.mrb[0].mxu0
    %v347 = vadd.f32 %v265, %v346
    %v348 = vpop.f32.mrb[0].mxu0
    %v349 = vpop.f32.mrb[0].mxu0
    %v350 = vadd.f32 %v265, %v349
    %v351 = vpop.f32.mrb[0].mxu0
    %352 = vmatprep.mubr.bf16.mxu0 0
    %353 = vmatmul.mubr.bf16.gmra.mrb[0].mxu0 %v304
    %v354 = vpop.f32.mrb[0].mxu0
    %v355 = vadd.f32 %v265, %v354
    %v356 = vpop.f32.mrb[0].mxu0
    %v357 = vpop.f32.mrb[0].mxu0
    %v358 = vadd.f32 %v265, %v357
    %v359 = vpop.f32.mrb[0].mxu0
    %360 = vmatprep.mubr.bf16.mxu0 0
    %361 = vmatmul.mubr.bf16.gmra.mrb[0].mxu0 %v307
    %v362 = vpop.f32.mrb[0].mxu0
    %v363 = vadd.f32 %v265, %v362
    %v364 = vpop.f32.mrb[0].mxu0
    %v365 = vpop.f32.mrb[0].mxu0
    %v366 = vadd.f32 %v265, %v365
    %v367 = vpop.f32.mrb[0].mxu0
    %368 = vmatprep.mubr.bf16.mxu0 0
    %369 = vmatmul.mubr.bf16.gmra.mrb[0].mxu0 %v310
    %v370 = vpop.f32.mrb[0].mxu0
    %v371 = vadd.f32 %v265, %v370
    %v372 = vpop.f32.mrb[0].mxu0
    %v373 = vpop.f32.mrb[0].mxu0
    %v374 = vadd.f32 %v265, %v373
    %v375 = vpop.f32.mrb[0].mxu0
    %376 = vdwg.mxu0
    %v377 = vmul.f32 %v347, 0.2
    %v378 = vmul.f32 %v350, 0.2
    %v379 = vmul.f32 %v355, 0.2
    %v380 = vmul.f32 %v358, 0.2
    %v381 = vmul.f32 %v363, 0.2
    %v382 = vmul.f32 %v366, 0.2
    %v383 = vmul.f32 %v371, 0.2
    %v384 = vmul.f32 %v374, 0.2
    %v385 = vmax.f32 %v347, %v377
    %v386 = vmax.f32 %v350, %v378
    %v387 = vmax.f32 %v355, %v379
    %v388 = vmax.f32 %v358, %v380
    %v389 = vmax.f32 %v363, %v381
    %v390 = vmax.f32 %v366, %v382
    %v391 = vmax.f32 %v371, %v383
    %v392 = vmax.f32 %v374, %v384
    %v393 = vpack.c.bf16 %v386, %v385
    %v394 = vpack.c.bf16 %v388, %v387
    %v395 = vpack.c.bf16 %v390, %v389
    %v396 = vpack.c.bf16 %v392, %v391
    %v397 = vld [vmem:[#allocation10] sm:$0xff]
    %v398 = vld [vmem:[#allocation10 + $0x8] sm:$0xff]
    %v399 = vld [vmem:[#allocation10 + $0x10] sm:$0xff]
    %v400 = vld [vmem:[#allocation10 + $0x18] sm:$0xff]
    %v401 = vld [vmem:[#allocation10 + $0x20] sm:$0xff]
    %v402 = vld [vmem:[#allocation10 + $0x28] sm:$0xff]
    %v403 = vld [vmem:[#allocation10 + $0x30] sm:$0xff]
    %v404 = vld [vmem:[#allocation10 + $0x38] sm:$0xff]
    %v405 = vld [vmem:[#allocation10 + $0x40] sm:$0xff]
    %v406 = vld [vmem:[#allocation10 + $0x48] sm:$0xff]
    %v407 = vld [vmem:[#allocation10 + $0x50] sm:$0xff]
    %v408 = vld [vmem:[#allocation10 + $0x58] sm:$0xff]
    %v409 = vld [vmem:[#allocation10 + $0x60] sm:$0xff]
    %v410 = vld [vmem:[#allocation10 + $0x68] sm:$0xff]
    %v411 = vld [vmem:[#allocation10 + $0x70] sm:$0xff]
    %v412 = vld [vmem:[#allocation10 + $0x78] sm:$0xff]
    %v429 = vunpack.c.l.b16 %v397
    %v430 = vunpack.c.h.b16 %v397
    %v431 = vunpack.c.l.b16 %v398
    %v432 = vunpack.c.h.b16 %v398
    %v433 = vunpack.c.l.b16 %v399
    %v434 = vunpack.c.h.b16 %v399
    %v435 = vunpack.c.l.b16 %v400
    %v436 = vunpack.c.h.b16 %v400
    %v437 = vunpack.c.l.b16 %v401
    %v438 = vunpack.c.h.b16 %v401
    %v439 = vunpack.c.l.b16 %v402
    %v440 = vunpack.c.h.b16 %v402
    %v441 = vunpack.c.l.b16 %v403
    %v442 = vunpack.c.h.b16 %v403
    %v443 = vunpack.c.l.b16 %v404
    %v444 = vunpack.c.h.b16 %v404
    %v445 = vunpack.c.l.b16 %v405
    %v446 = vunpack.c.h.b16 %v405
    %v447 = vunpack.c.l.b16 %v406
    %v448 = vunpack.c.h.b16 %v406
    %v449 = vunpack.c.l.b16 %v407
    %v450 = vunpack.c.h.b16 %v407
    %v451 = vunpack.c.l.b16 %v408
    %v452 = vunpack.c.h.b16 %v408
    %v453 = vunpack.c.l.b16 %v409
    %v454 = vunpack.c.h.b16 %v409
    %v455 = vunpack.c.l.b16 %v410
    %v456 = vunpack.c.h.b16 %v410
    %v457 = vunpack.c.l.b16 %v411
    %v458 = vunpack.c.h.b16 %v411
    %v459 = vunpack.c.l.b16 %v412
    %v460 = vunpack.c.h.b16 %v412
    %v461 = vpack.c.b16 %v431, %v429
    %v462 = vpack.c.b16 %v432, %v430
    %v463 = vpack.c.b16 %v435, %v433
    %v464 = vpack.c.b16 %v436, %v434
    %v465 = vpack.c.b16 %v439, %v437
    %v466 = vpack.c.b16 %v440, %v438
    %v467 = vpack.c.b16 %v443, %v441
    %v468 = vpack.c.b16 %v444, %v442
    %v469 = vpack.c.b16 %v447, %v445
    %v470 = vpack.c.b16 %v448, %v446
    %v471 = vpack.c.b16 %v451, %v449
    %v472 = vpack.c.b16 %v452, %v450
    %v473 = vpack.c.b16 %v455, %v453
    %v474 = vpack.c.b16 %v456, %v454
    %v475 = vpack.c.b16 %v459, %v457
    %v476 = vpack.c.b16 %v460, %v458
    %493 = vmatprep.subr.bf16.mxu0 %v462
    %494 = vmatpush1.bf16.msra.mxu0 %v461
    %495 = vmatprep.subr.bf16.mxu0 %v464
    %496 = vmatpush1.bf16.msra.mxu0 %v463
    %497 = vmatprep.subr.bf16.mxu0 %v466
    %498 = vmatpush1.bf16.msra.mxu0 %v465
    %499 = vmatprep.subr.bf16.mxu0 %v468
    %500 = vmatpush1.bf16.msra.mxu0 %v467
    %501 = vmatprep.subr.bf16.mxu0 %v470
    %502 = vmatpush1.bf16.msra.mxu0 %v469
    %503 = vmatprep.subr.bf16.mxu0 %v472
    %504 = vmatpush1.bf16.msra.mxu0 %v471
    %505 = vmatprep.subr.bf16.mxu0 %v474
    %506 = vmatpush1.bf16.msra.mxu0 %v473
    %507 = vmatprep.subr.bf16.mxu0 %v476
    %508 = vmatpush1.bf16.msra.mxu0 %v475
    %509 = vmatprep.subr.bf16.mxu0 0
    %510 = vmatpush1.bf16.msra.mxu0 0
    %511 = vmatprep.subr.bf16.mxu0 0
    %512 = vmatpush1.bf16.msra.mxu0 0
    %513 = vmatprep.subr.bf16.mxu0 0
    %514 = vmatpush1.bf16.msra.mxu0 0
    %515 = vmatprep.subr.bf16.mxu0 0
    %516 = vmatpush1.bf16.msra.mxu0 0
    %517 = vmatprep.subr.bf16.mxu0 0
    %518 = vmatpush1.bf16.msra.mxu0 0
    %519 = vmatprep.subr.bf16.mxu0 0
    %520 = vmatpush1.bf16.msra.mxu0 0
    %521 = vmatprep.subr.bf16.mxu0 0
    %522 = vmatpush1.bf16.msra.mxu0 0
    %523 = vmatprep.subr.bf16.mxu0 0
    %524 = vmatpush1.bf16.msra.mxu0 0
    %525 = vmatprep.mubr.bf16.mxu0 0
    %526 = vmatmul.mubr.bf16.gmra.mrb[0].mxu0 %v393
    %v527 = vpop.f32.mrb[0].mxu0
    %v528 = vadd.f32 0.0, %v527
    %v529 = vpop.f32.mrb[0].mxu0
    %v530 = vadd.f32 0.0, %v529
    %v531 = vpop.f32.mrb[0].mxu0
    %v532 = vadd.f32 0.0, %v531
    %v533 = vpop.f32.mrb[0].mxu0
    %v534 = vadd.f32 0.0, %v533
    %535 = vmatprep.mubr.bf16.mxu0 0
    %536 = vmatmul.mubr.bf16.gmra.mrb[0].mxu0 %v394
    %v537 = vpop.f32.mrb[0].mxu0
    %v538 = vadd.f32 0.0, %v537
    %v539 = vpop.f32.mrb[0].mxu0
    %v540 = vadd.f32 0.0, %v539
    %v541 = vpop.f32.mrb[0].mxu0
    %v542 = vadd.f32 0.0, %v541
    %v543 = vpop.f32.mrb[0].mxu0
    %v544 = vadd.f32 0.0, %v543
    %545 = vmatprep.mubr.bf16.mxu0 0
    %546 = vmatmul.mubr.bf16.gmra.mrb[0].mxu0 %v395
    %v547 = vpop.f32.mrb[0].mxu0
    %v548 = vadd.f32 0.0, %v547
    %v549 = vpop.f32.mrb[0].mxu0
    %v550 = vadd.f32 0.0, %v549
    %v551 = vpop.f32.mrb[0].mxu0
    %v552 = vadd.f32 0.0, %v551
    %v553 = vpop.f32.mrb[0].mxu0
    %v554 = vadd.f32 0.0, %v553
    %555 = vmatprep.mubr.bf16.mxu0 0
    %556 = vmatmul.mubr.bf16.gmra.mrb[0].mxu0 %v396
    %v557 = vpop.f32.mrb[0].mxu0
    %v558 = vadd.f32 0.0, %v557
    %v559 = vpop.f32.mrb[0].mxu0
    %v560 = vadd.f32 0.0, %v559
    %v561 = vpop.f32.mrb[0].mxu0
    %v562 = vadd.f32 0.0, %v561
    %v563 = vpop.f32.mrb[0].mxu0
    %v564 = vadd.f32 0.0, %v563
    %565 = vdwg.mxu0
    %v566 = vld [vmem:[#allocation11] sm:$0x3]
    %v567 = vld [vmem:[#allocation13] sm:$0x3]
    %v568 = vadd.f32 %v528, %v532
    %v569 = vadd.f32 %v568, %v538
    %v570 = vadd.f32 %v569, %v542
    %v571 = vadd.f32 %v570, %v548
    %v572 = vadd.f32 %v571, %v552
    %v573 = vadd.f32 %v572, %v558
    %v574 = vadd.f32 %v573, %v562
    %v575 = vrot.slane %v574, 4
    %v576 = vadd.f32 %v574, %v575
    %v577 = vrot.slane %v576, 2
    %v578 = vadd.f32 %v576, %v577
    %v579 = vrot.slane %v578, 1
    %v580 = vadd.f32 %v578, %v579
    %v581 = vadd.f32 %v530, %v534
    %v582 = vadd.f32 %v581, %v540
    %v583 = vadd.f32 %v582, %v544
    %v584 = vadd.f32 %v583, %v550
    %v585 = vadd.f32 %v584, %v554
    %v586 = vadd.f32 %v585, %v560
    %v587 = vadd.f32 %v586, %v564
    %v588 = vrot.slane %v587, 4
    %v589 = vadd.f32 %v587, %v588
    %v590 = vrot.slane %v589, 2
    %v591 = vadd.f32 %v589, %v590
    %v592 = vrot.slane %v591, 1
    %v593 = vadd.f32 %v591, %v592
    %v594 = vmul.f32 %v580, 0.015625
    %v595 = vmul.f32 %v593, 0.015625
    %v596 = vmul.f32 %v528, %v528
    %v597 = vmul.f32 %v530, %v530
    %v598 = vmul.f32 %v532, %v532
    %v599 = vmul.f32 %v534, %v534
    %v600 = vmul.f32 %v538, %v538
    %v601 = vmul.f32 %v540, %v540
    %v602 = vmul.f32 %v542, %v542
    %v603 = vmul.f32 %v544, %v544
    %v604 = vmul.f32 %v548, %v548
    %v605 = vmul.f32 %v550, %v550
    %v606 = vmul.f32 %v552, %v552
    %v607 = vmul.f32 %v554, %v554
    %v608 = vmul.f32 %v558, %v558
    %v609 = vmul.f32 %v560, %v560
    %v610 = vmul.f32 %v562, %v562
    %v611 = vmul.f32 %v564, %v564
    %v612 = vadd.f32 %v596, %v598
    %v613 = vadd.f32 %v612, %v600
    %v614 = vadd.f32 %v613, %v602
    %v615 = vadd.f32 %v614, %v604
    %v616 = vadd.f32 %v615, %v606
    %v617 = vadd.f32 %v616, %v608
    %v618 = vadd.f32 %v617, %v610
    %v619 = vrot.slane %v618, 4
    %v620 = vadd.f32 %v618, %v619
    %v621 = vrot.slane %v620, 2
    %v622 = vadd.f32 %v620, %v621
    %v623 = vrot.slane %v622, 1
    %v624 = vadd.f32 %v622, %v623
    %v625 = vadd.f32 %v597, %v599
    %v626 = vadd.f32 %v625, %v601
    %v627 = vadd.f32 %v626, %v603
    %v628 = vadd.f32 %v627, %v605
    %v629 = vadd.f32 %v628, %v607
    %v630 = vadd.f32 %v629, %v609
    %v631 = vadd.f32 %v630, %v611
    %v632 = vrot.slane %v631, 4
    %v633 = vadd.f32 %v631, %v632
    %v634 = vrot.slane %v633, 2
    %v635 = vadd.f32 %v633, %v634
    %v636 = vrot.slane %v635, 1
    %v637 = vadd.f32 %v635, %v636
    %v638 = vmul.f32 %v624, 0.015625
    %v639 = vmul.f32 %v637, 0.015625
    %v640 = vmul.f32 %v594, %v594
    %v641 = vmul.f32 %v595, %v595
    %v642 = vsub.f32 %v638, %v640
    %v643 = vsub.f32 %v639, %v641
    %v644 = vmax.f32 %v642, 0.0
    %v645 = vmax.f32 %v643, 0.0
    %v646 = vadd.f32 %v644, 1e-05
    %v647 = vadd.f32 %v645, 1e-05
    %v648 = vrsqrt.pop %v646
    %v649 = vrsqrt.pop %v647
    %v652 = vcombine.low %v648, %v649
    %v654 = vunpack.c.l.s4 1966171168
    %v655 = vunpack.c.0.s8 %v654
    %v656 = vlaneseq
    %v657 = vshrl.u32 %v656, 7
    %v658 = vsub.s32 %v655, %v657
    %v659 = vrot.slane %v652, %v658
    %v661 = vunpack.c.l.s4 1966171168
    %v662 = vunpack.c.0.s8 %v661
    %v663 = vlaneseq
    %v664 = vshrl.u32 %v663, 7
    %v665 = vsub.s32 %v662, %v664
    %v666 = vrot.slane %v659, %v665
    %v668 = vmul.f32 %v566, %v666
    %v670 = vlaneseq
    %v671 = vshrl.u32 %v670, 7
    %v672 = vsub.s32 0, %v671
    %v673 = vrot.slane %v668, %v672
    %v674 = vlaneseq
    %v675 = vshrl.u32 %v674, 7
    %v676 = vsub.s32 1, %v675
    %v677 = vrot.slane %v668, %v676
    %v680 = vmul.f32 %v594, %v673
    %v681 = vmul.f32 %v595, %v677
    %v684 = vcombine.low %v680, %v681
    %v686 = vunpack.c.l.s4 1966171168
    %v687 = vunpack.c.0.s8 %v686
    %v688 = vlaneseq
    %v689 = vshrl.u32 %v688, 7
    %v690 = vsub.s32 %v687, %v689
    %v691 = vrot.slane %v684, %v690
    %v693 = vunpack.c.l.s4 1966171168
    %v694 = vunpack.c.0.s8 %v693
    %v695 = vlaneseq
    %v696 = vshrl.u32 %v695, 7
    %v697 = vsub.s32 %v694, %v696
    %v698 = vrot.slane %v691, %v697
    %v700 = vsub.f32 %v567, %v698
    %v701 = vmul.f32 %v528, %v673
    %v702 = vmul.f32 %v530, %v677
    %v703 = vmul.f32 %v532, %v673
    %v704 = vmul.f32 %v534, %v677
    %v705 = vmul.f32 %v538, %v673
    %v706 = vmul.f32 %v540, %v677
    %v707 = vmul.f32 %v542, %v673
    %v708 = vmul.f32 %v544, %v677
    %v709 = vmul.f32 %v548, %v673
    %v710 = vmul.f32 %v550, %v677
    %v711 = vmul.f32 %v552, %v673
    %v712 = vmul.f32 %v554, %v677
    %v713 = vmul.f32 %v558, %v673
    %v714 = vmul.f32 %v560, %v677
    %v715 = vmul.f32 %v562, %v673
    %v716 = vmul.f32 %v564, %v677
    %v718 = vlaneseq
    %v719 = vshrl.u32 %v718, 7
    %v720 = vsub.s32 0, %v719
    %v721 = vrot.slane %v700, %v720
    %v722 = vlaneseq
    %v723 = vshrl.u32 %v722, 7
    %v724 = vsub.s32 1, %v723
    %v725 = vrot.slane %v700, %v724
    %v728 = vadd.f32 %v701, %v721
    %v729 = vadd.f32 %v702, %v725
    %v730 = vadd.f32 %v703, %v721
    %v731 = vadd.f32 %v704, %v725
    %v732 = vadd.f32 %v705, %v721
    %v733 = vadd.f32 %v706, %v725
    %v734 = vadd.f32 %v707, %v721
    %v735 = vadd.f32 %v708, %v725
    %v736 = vadd.f32 %v709, %v721
    %v737 = vadd.f32 %v710, %v725
    %v738 = vadd.f32 %v711, %v721
    %v739 = vadd.f32 %v712, %v725
    %v740 = vadd.f32 %v713, %v721
    %v741 = vadd.f32 %v714, %v725
    %v742 = vadd.f32 %v715, %v721
    %v743 = vadd.f32 %v716, %v725
    %v744 = vmul.f32 %v728, 0.2
    %v745 = vmul.f32 %v729, 0.2
    %v746 = vmul.f32 %v730, 0.2
    %v747 = vmul.f32 %v731, 0.2
    %v748 = vmul.f32 %v732, 0.2
    %v749 = vmul.f32 %v733, 0.2
    %v750 = vmul.f32 %v734, 0.2
    %v751 = vmul.f32 %v735, 0.2
    %v752 = vmul.f32 %v736, 0.2
    %v753 = vmul.f32 %v737, 0.2
    %v754 = vmul.f32 %v738, 0.2
    %v755 = vmul.f32 %v739, 0.2
    %v756 = vmul.f32 %v740, 0.2
    %v757 = vmul.f32 %v741, 0.2
    %v758 = vmul.f32 %v742, 0.2
    %v759 = vmul.f32 %v743, 0.2
    %v760 = vmax.f32 %v728, %v744
    %v761 = vmax.f32 %v729, %v745
    %v762 = vmax.f32 %v730, %v746
    %v763 = vmax.f32 %v731, %v747
    %v764 = vmax.f32 %v732, %v748
    %v765 = vmax.f32 %v733, %v749
    %v766 = vmax.f32 %v734, %v750
    %v767 = vmax.f32 %v735, %v751
    %v768 = vmax.f32 %v736, %v752
    %v769 = vmax.f32 %v737, %v753
    %v770 = vmax.f32 %v738, %v754
    %v771 = vmax.f32 %v739, %v755
    %v772 = vmax.f32 %v740, %v756
    %v773 = vmax.f32 %v741, %v757
    %v774 = vmax.f32 %v742, %v758
    %v775 = vmax.f32 %v743, %v759
    %v776 = vpack.c.bf16 %v762, %v760
    %v777 = vpack.c.bf16 %v763, %v761
    %v778 = vpack.c.bf16 %v766, %v764
    %v779 = vpack.c.bf16 %v767, %v765
    %v780 = vpack.c.bf16 %v770, %v768
    %v781 = vpack.c.bf16 %v771, %v769
    %v782 = vpack.c.bf16 %v774, %v772
    %v783 = vpack.c.bf16 %v775, %v773
    %v784 = vld [vmem:[#allocation14] sm:$0xff]
    %v785 = vld [vmem:[#allocation14 + $0x8] sm:$0xff]
    %v786 = vld [vmem:[#allocation14 + $0x10] sm:$0xff]
    %v787 = vld [vmem:[#allocation14 + $0x18] sm:$0xff]
    %v788 = vld [vmem:[#allocation14 + $0x20] sm:$0xff]
    %v789 = vld [vmem:[#allocation14 + $0x28] sm:$0xff]
    %v790 = vld [vmem:[#allocation14 + $0x30] sm:$0xff]
    %v791 = vld [vmem:[#allocation14 + $0x38] sm:$0xff]
    %v792 = vld [vmem:[#allocation14 + $0x40] sm:$0xff]
    %v793 = vld [vmem:[#allocation14 + $0x48] sm:$0xff]
    %v794 = vld [vmem:[#allocation14 + $0x50] sm:$0xff]
    %v795 = vld [vmem:[#allocation14 + $0x58] sm:$0xff]
    %v796 = vld [vmem:[#allocation14 + $0x60] sm:$0xff]
    %v797 = vld [vmem:[#allocation14 + $0x68] sm:$0xff]
    %v798 = vld [vmem:[#allocation14 + $0x70] sm:$0xff]
    %v799 = vld [vmem:[#allocation14 + $0x78] sm:$0xff]
    %v800 = vld [vmem:[#allocation14 + $0x80] sm:$0xff]
    %v801 = vld [vmem:[#allocation14 + $0x88] sm:$0xff]
    %v802 = vld [vmem:[#allocation14 + $0x90] sm:$0xff]
    %v803 = vld [vmem:[#allocation14 + $0x98] sm:$0xff]
    %v804 = vld [vmem:[#allocation14 + $0xa0] sm:$0xff]
    %v805 = vld [vmem:[#allocation14 + $0xa8] sm:$0xff]
    %v806 = vld [vmem:[#allocation14 + $0xb0] sm:$0xff]
    %v807 = vld [vmem:[#allocation14 + $0xb8] sm:$0xff]
    %v808 = vld [vmem:[#allocation14 + $0xc0] sm:$0xff]
    %v809 = vld [vmem:[#allocation14 + $0xc8] sm:$0xff]
    %v810 = vld [vmem:[#allocation14 + $0xd0] sm:$0xff]
    %v811 = vld [vmem:[#allocation14 + $0xd8] sm:$0xff]
    %v812 = vld [vmem:[#allocation14 + $0xe0] sm:$0xff]
    %v813 = vld [vmem:[#allocation14 + $0xe8] sm:$0xff]
    %v814 = vld [vmem:[#allocation14 + $0xf0] sm:$0xff]
    %v815 = vld [vmem:[#allocation14 + $0xf8] sm:$0xff]
    %v816 = vld [vmem:[#allocation14 + $0x100] sm:$0xff]
    %v817 = vld [vmem:[#allocation14 + $0x108] sm:$0xff]
    %v818 = vld [vmem:[#allocation14 + $0x110] sm:$0xff]
    %v819 = vld [vmem:[#allocation14 + $0x118] sm:$0xff]
    %v820 = vld [vmem:[#allocation14 + $0x120] sm:$0xff]
    %v821 = vld [vmem:[#allocation14 + $0x128] sm:$0xff]
    %v822 = vld [vmem:[#allocation14 + $0x130] sm:$0xff]
    %v823 = vld [vmem:[#allocation14 + $0x138] sm:$0xff]
    %v824 = vld [vmem:[#allocation14 + $0x140] sm:$0xff]
    %v825 = vld [vmem:[#allocation14 + $0x148] sm:$0xff]
    %v826 = vld [vmem:[#allocation14 + $0x150] sm:$0xff]
    %v827 = vld [vmem:[#allocation14 + $0x158] sm:$0xff]
    %v828 = vld [vmem:[#allocation14 + $0x160] sm:$0xff]
    %v829 = vld [vmem:[#allocation14 + $0x168] sm:$0xff]
    %v830 = vld [vmem:[#allocation14 + $0x170] sm:$0xff]
    %v831 = vld [vmem:[#allocation14 + $0x178] sm:$0xff]
    %v832 = vld [vmem:[#allocation14 + $0x180] sm:$0xff]
    %v833 = vld [vmem:[#allocation14 + $0x188] sm:$0xff]
    %v834 = vld [vmem:[#allocation14 + $0x190] sm:$0xff]
    %v835 = vld [vmem:[#allocation14 + $0x198] sm:$0xff]
    %v836 = vld [vmem:[#allocation14 + $0x1a0] sm:$0xff]
    %v837 = vld [vmem:[#allocation14 + $0x1a8] sm:$0xff]
    %v838 = vld [vmem:[#allocation14 + $0x1b0] sm:$0xff]
    %v839 = vld [vmem:[#allocation14 + $0x1b8] sm:$0xff]
    %v840 = vld [vmem:[#allocation14 + $0x1c0] sm:$0xff]
    %v841 = vld [vmem:[#allocation14 + $0x1c8] sm:$0xff]
    %v842 = vld [vmem:[#allocation14 + $0x1d0] sm:$0xff]
    %v843 = vld [vmem:[#allocation14 + $0x1d8] sm:$0xff]
    %v844 = vld [vmem:[#allocation14 + $0x1e0] sm:$0xff]
    %v845 = vld [vmem:[#allocation14 + $0x1e8] sm:$0xff]
    %v846 = vld [vmem:[#allocation14 + $0x1f0] sm:$0xff]
    %v847 = vld [vmem:[#allocation14 + $0x1f8] sm:$0xff]
    %v912 = vunpack.c.l.b16 %v784
    %v913 = vunpack.c.h.b16 %v784
    %v914 = vunpack.c.l.b16 %v785
    %v915 = vunpack.c.h.b16 %v785
    %v916 = vunpack.c.l.b16 %v786
    %v917 = vunpack.c.h.b16 %v786
    %v918 = vunpack.c.l.b16 %v787
    %v919 = vunpack.c.h.b16 %v787
    %v920 = vunpack.c.l.b16 %v788
    %v921 = vunpack.c.h.b16 %v788
    %v922 = vunpack.c.l.b16 %v789
    %v923 = vunpack.c.h.b16 %v789
    %v924 = vunpack.c.l.b16 %v790
    %v925 = vunpack.c.h.b16 %v790
    %v926 = vunpack.c.l.b16 %v791
    %v927 = vunpack.c.h.b16 %v791
    %v928 = vunpack.c.l.b16 %v792
    %v929 = vunpack.c.h.b16 %v792
    %v930 = vunpack.c.l.b16 %v793
    %v931 = vunpack.c.h.b16 %v793
    %v932 = vunpack.c.l.b16 %v794
    %v933 = vunpack.c.h.b16 %v794
    %v934 = vunpack.c.l.b16 %v795
    %v935 = vunpack.c.h.b16 %v795
    %v936 = vunpack.c.l.b16 %v796
    %v937 = vunpack.c.h.b16 %v796
    %v938 = vunpack.c.l.b16 %v797
    %v939 = vunpack.c.h.b16 %v797
    %v940 = vunpack.c.l.b16 %v798
    %v941 = vunpack.c.h.b16 %v798
    %v942 = vunpack.c.l.b16 %v799
    %v943 = vunpack.c.h.b16 %v799
    %v944 = vunpack.c.l.b16 %v800
    %v945 = vunpack.c.h.b16 %v800
    %v946 = vunpack.c.l.b16 %v801
    %v947 = vunpack.c.h.b16 %v801
    %v948 = vunpack.c.l.b16 %v802
    %v949 = vunpack.c.h.b16 %v802
    %v950 = vunpack.c.l.b16 %v803
    %v951 = vunpack.c.h.b16 %v803
    %v952 = vunpack.c.l.b16 %v804
    %v953 = vunpack.c.h.b16 %v804
    %v954 = vunpack.c.l.b16 %v805
    %v955 = vunpack.c.h.b16 %v805
    %v956 = vunpack.c.l.b16 %v806
    %v957 = vunpack.c.h.b16 %v806
    %v958 = vunpack.c.l.b16 %v807
    %v959 = vunpack.c.h.b16 %v807
    %v960 = vunpack.c.l.b16 %v808
    %v961 = vunpack.c.h.b16 %v808
    %v962 = vunpack.c.l.b16 %v809
    %v963 = vunpack.c.h.b16 %v809
    %v964 = vunpack.c.l.b16 %v810
    %v965 = vunpack.c.h.b16 %v810
    %v966 = vunpack.c.l.b16 %v811
    %v967 = vunpack.c.h.b16 %v811
    %v968 = vunpack.c.l.b16 %v812
    %v969 = vunpack.c.h.b16 %v812
    %v970 = vunpack.c.l.b16 %v813
    %v971 = vunpack.c.h.b16 %v813
    %v972 = vunpack.c.l.b16 %v814
    %v973 = vunpack.c.h.b16 %v814
    %v974 = vunpack.c.l.b16 %v815
    %v975 = vunpack.c.h.b16 %v815
    %v976 = vunpack.c.l.b16 %v816
    %v977 = vunpack.c.h.b16 %v816
    %v978 = vunpack.c.l.b16 %v817
    %v979 = vunpack.c.h.b16 %v817
    %v980 = vunpack.c.l.b16 %v818
    %v981 = vunpack.c.h.b16 %v818
    %v982 = vunpack.c.l.b16 %v819
    %v983 = vunpack.c.h.b16 %v819
    %v984 = vunpack.c.l.b16 %v820
    %v985 = vunpack.c.h.b16 %v820
    %v986 = vunpack.c.l.b16 %v821
    %v987 = vunpack.c.h.b16 %v821
    %v988 = vunpack.c.l.b16 %v822
    %v989 = vunpack.c.h.b16 %v822
    %v990 = vunpack.c.l.b16 %v823
    %v991 = vunpack.c.h.b16 %v823
    %v992 = vunpack.c.l.b16 %v824
    %v993 = vunpack.c.h.b16 %v824
    %v994 = vunpack.c.l.b16 %v825
    %v995 = vunpack.c.h.b16 %v825
    %v996 = vunpack.c.l.b16 %v826
    %v997 = vunpack.c.h.b16 %v826
    %v998 = vunpack.c.l.b16 %v827
    %v999 = vunpack.c.h.b16 %v827
    %v1000 = vunpack.c.l.b16 %v828
    %v1001 = vunpack.c.h.b16 %v828
    %v1002 = vunpack.c.l.b16 %v829
    %v1003 = vunpack.c.h.b16 %v829
    %v1004 = vunpack.c.l.b16 %v830
    %v1005 = vunpack.c.h.b16 %v830
    %v1006 = vunpack.c.l.b16 %v831
    %v1007 = vunpack.c.h.b16 %v831
    %v1008 = vunpack.c.l.b16 %v832
    %v1009 = vunpack.c.h.b16 %v832
    %v1010 = vunpack.c.l.b16 %v833
    %v1011 = vunpack.c.h.b16 %v833
    %v1012 = vunpack.c.l.b16 %v834
    %v1013 = vunpack.c.h.b16 %v834
    %v1014 = vunpack.c.l.b16 %v835
    %v1015 = vunpack.c.h.b16 %v835
    %v1016 = vunpack.c.l.b16 %v836
    %v1017 = vunpack.c.h.b16 %v836
    %v1018 = vunpack.c.l.b16 %v837
    %v1019 = vunpack.c.h.b16 %v837
    %v1020 = vunpack.c.l.b16 %v838
    %v1021 = vunpack.c.h.b16 %v838
    %v1022 = vunpack.c.l.b16 %v839
    %v1023 = vunpack.c.h.b16 %v839
    %v1024 = vunpack.c.l.b16 %v840
    %v1025 = vunpack.c.h.b16 %v840
    %v1026 = vunpack.c.l.b16 %v841
    %v1027 = vunpack.c.h.b16 %v841
    %v1028 = vunpack.c.l.b16 %v842
    %v1029 = vunpack.c.h.b16 %v842
    %v1030 = vunpack.c.l.b16 %v843
    %v1031 = vunpack.c.h.b16 %v843
    %v1032 = vunpack.c.l.b16 %v844
    %v1033 = vunpack.c.h.b16 %v844
    %v1034 = vunpack.c.l.b16 %v845
    %v1035 = vunpack.c.h.b16 %v845
    %v1036 = vunpack.c.l.b16 %v846
    %v1037 = vunpack.c.h.b16 %v846
    %v1038 = vunpack.c.l.b16 %v847
    %v1039 = vunpack.c.h.b16 %v847
    %v1040 = vpack.c.b16 %v916, %v912
    %v1041 = vpack.c.b16 %v917, %v913
    %v1042 = vpack.c.b16 %v918, %v914
    %v1043 = vpack.c.b16 %v919, %v915
    %v1044 = vpack.c.b16 %v924, %v920
    %v1045 = vpack.c.b16 %v925, %v921
    %v1046 = vpack.c.b16 %v926, %v922
    %v1047 = vpack.c.b16 %v927, %v923
    %v1048 = vpack.c.b16 %v932, %v928
    %v1049 = vpack.c.b16 %v933, %v929
    %v1050 = vpack.c.b16 %v934, %v930
    %v1051 = vpack.c.b16 %v935, %v931
    %v1052 = vpack.c.b16 %v940, %v936
    %v1053 = vpack.c.b16 %v941, %v937
    %v1054 = vpack.c.b16 %v942, %v938
    %v1055 = vpack.c.b16 %v943, %v939
    %v1056 = vpack.c.b16 %v948, %v944
    %v1057 = vpack.c.b16 %v949, %v945
    %v1058 = vpack.c.b16 %v950, %v946
    %v1059 = vpack.c.b16 %v951, %v947
    %v1060 = vpack.c.b16 %v956, %v952
    %v1061 = vpack.c.b16 %v957, %v953
    %v1062 = vpack.c.b16 %v958, %v954
    %v1063 = vpack.c.b16 %v959, %v955
    %v1064 = vpack.c.b16 %v964, %v960
    %v1065 = vpack.c.b16 %v965, %v961
    %v1066 = vpack.c.b16 %v966, %v962
    %v1067 = vpack.c.b16 %v967, %v963
    %v1068 = vpack.c.b16 %v972, %v968
    %v1069 = vpack.c.b16 %v973, %v969
    %v1070 = vpack.c.b16 %v974, %v970
    %v1071 = vpack.c.b16 %v975, %v971
    %v1072 = vpack.c.b16 %v980, %v976
    %v1073 = vpack.c.b16 %v981, %v977
    %v1074 = vpack.c.b16 %v982, %v978
    %v1075 = vpack.c.b16 %v983, %v979
    %v1076 = vpack.c.b16 %v988, %v984
    %v1077 = vpack.c.b16 %v989, %v985
    %v1078 = vpack.c.b16 %v990, %v986
    %v1079 = vpack.c.b16 %v991, %v987
    %v1080 = vpack.c.b16 %v996, %v992
    %v1081 = vpack.c.b16 %v997, %v993
    %v1082 = vpack.c.b16 %v998, %v994
    %v1083 = vpack.c.b16 %v999, %v995
    %v1084 = vpack.c.b16 %v1004, %v1000
    %v1085 = vpack.c.b16 %v1005, %v1001
    %v1086 = vpack.c.b16 %v1006, %v1002
    %v1087 = vpack.c.b16 %v1007, %v1003
    %v1088 = vpack.c.b16 %v1012, %v1008
    %v1089 = vpack.c.b16 %v1013, %v1009
    %v1090 = vpack.c.b16 %v1014, %v1010
    %v1091 = vpack.c.b16 %v1015, %v1011
    %v1092 = vpack.c.b16 %v1020, %v1016
    %v1093 = vpack.c.b16 %v1021, %v1017
    %v1094 = vpack.c.b16 %v1022, %v1018
    %v1095 = vpack.c.b16 %v1023, %v1019
    %v1096 = vpack.c.b16 %v1028, %v1024
    %v1097 = vpack.c.b16 %v1029, %v1025
    %v1098 = vpack.c.b16 %v1030, %v1026
    %v1099 = vpack.c.b16 %v1031, %v1027
    %v1100 = vpack.c.b16 %v1036, %v1032
    %v1101 = vpack.c.b16 %v1037, %v1033
    %v1102 = vpack.c.b16 %v1038, %v1034
    %v1103 = vpack.c.b16 %v1039, %v1035
    %1168 = vmatprep.subr.bf16.mxu0 %v1041
    %1169 = vmatpush1.bf16.msra.mxu0 %v1040
    %1170 = vmatprep.subr.bf16.mxu0 %v1045
    %1171 = vmatpush1.bf16.msra.mxu0 %v1044
    %1172 = vmatprep.subr.bf16.mxu0 %v1049
    %1173 = vmatpush1.bf16.msra.mxu0 %v1048
    %1174 = vmatprep.subr.bf16.mxu0 %v1053
    %1175 = vmatpush1.bf16.msra.mxu0 %v1052
    %1176 = vmatprep.subr.bf16.mxu0 %v1057
    %1177 = vmatpush1.bf16.msra.mxu0 %v1056
    %1178 = vmatprep.subr.bf16.mxu0 %v1061
    %1179 = vmatpush1.bf16.msra.mxu0 %v1060
    %1180 = vmatprep.subr.bf16.mxu0 %v1065
    %1181 = vmatpush1.bf16.msra.mxu0 %v1064
    %1182 = vmatprep.subr.bf16.mxu0 %v1069
    %1183 = vmatpush1.bf16.msra.mxu0 %v1068
    %1184 = vmatprep.subr.bf16.mxu0 %v1073
    %1185 = vmatpush1.bf16.msra.mxu0 %v1072
    %1186 = vmatprep.subr.bf16.mxu0 %v1077
    %1187 = vmatpush1.bf16.msra.mxu0 %v1076
    %1188 = vmatprep.subr.bf16.mxu0 %v1081
    %1189 = vmatpush1.bf16.msra.mxu0 %v1080
    %1190 = vmatprep.subr.bf16.mxu0 %v1085
    %1191 = vmatpush1.bf16.msra.mxu0 %v1084
    %1192 = vmatprep.subr.bf16.mxu0 %v1089
    %1193 = vmatpush1.bf16.msra.mxu0 %v1088
    %1194 = vmatprep.subr.bf16.mxu0 %v1093
    %1195 = vmatpush1.bf16.msra.mxu0 %v1092
    %1196 = vmatprep.subr.bf16.mxu0 %v1097
    %1197 = vmatpush1.bf16.msra.mxu0 %v1096
    %1198 = vmatprep.subr.bf16.mxu0 %v1101
    %1199 = vmatpush1.bf16.msra.mxu0 %v1100
    %1200 = vmatprep.mubr.bf16.mxu0 %v777
    %1201 = vmatmul.mubr.bf16.gmra.mrb[0].mxu0 %v776
    %v1202 = vpop.f32.mrb[0].mxu0
    %v1203 = vadd.f32 0.0, %v1202
    %v1204 = vpop.f32.mrb[0].mxu0
    %v1205 = vadd.f32 0.0, %v1204
    %v1206 = vpop.f32.mrb[0].mxu0
    %v1207 = vadd.f32 0.0, %v1206
    %v1208 = vpop.f32.mrb[0].mxu0
    %v1209 = vadd.f32 0.0, %v1208
    %1210 = vmatprep.mubr.bf16.mxu0 %v779
    %1211 = vmatmul.mubr.bf16.gmra.mrb[0].mxu0 %v778
    %v1212 = vpop.f32.mrb[0].mxu0
    %v1213 = vadd.f32 0.0, %v1212
    %v1214 = vpop.f32.mrb[0].mxu0
    %v1215 = vadd.f32 0.0, %v1214
    %v1216 = vpop.f32.mrb[0].mxu0
    %v1217 = vadd.f32 0.0, %v1216
    %v1218 = vpop.f32.mrb[0].mxu0
    %v1219 = vadd.f32 0.0, %v1218
    %1220 = vmatprep.mubr.bf16.mxu0 %v781
    %1221 = vmatmul.mubr.bf16.gmra.mrb[0].mxu0 %v780
    %v1222 = vpop.f32.mrb[0].mxu0
    %v1223 = vadd.f32 0.0, %v1222
    %v1224 = vpop.f32.mrb[0].mxu0
    %v1225 = vadd.f32 0.0, %v1224
    %v1226 = vpop.f32.mrb[0].mxu0
    %v1227 = vadd.f32 0.0, %v1226
    %v1228 = vpop.f32.mrb[0].mxu0
    %v1229 = vadd.f32 0.0, %v1228
    %1230 = vmatprep.mubr.bf16.mxu0 %v783
    %1231 = vmatmul.mubr.bf16.gmra.mrb[0].mxu0 %v782
    %v1232 = vpop.f32.mrb[0].mxu0
    %v1233 = vadd.f32 0.0, %v1232
    %v1234 = vpop.f32.mrb[0].mxu0
    %v1235 = vadd.f32 0.0, %v1234
    %v1236 = vpop.f32.mrb[0].mxu0
    %v1237 = vadd.f32 0.0, %v1236
    %v1238 = vpop.f32.mrb[0].mxu0
    %v1239 = vadd.f32 0.0, %v1238
    %1240 = vdwg.mxu0
    %1241 = vmatprep.subr.bf16.mxu0 %v1043
    %1242 = vmatpush1.bf16.msra.mxu0 %v1042
    %1243 = vmatprep.subr.bf16.mxu0 %v1047
    %1244 = vmatpush1.bf16.msra.mxu0 %v1046
    %1245 = vmatprep.subr.bf16.mxu0 %v1051
    %1246 = vmatpush1.bf16.msra.mxu0 %v1050
    %1247 = vmatprep.subr.bf16.mxu0 %v1055
    %1248 = vmatpush1.bf16.msra.mxu0 %v1054
    %1249 = vmatprep.subr.bf16.mxu0 %v1059
    %1250 = vmatpush1.bf16.msra.mxu0 %v1058
    %1251 = vmatprep.subr.bf16.mxu0 %v1063
    %1252 = vmatpush1.bf16.msra.mxu0 %v1062
    %1253 = vmatprep.subr.bf16.mxu0 %v1067
    %1254 = vmatpush1.bf16.msra.mxu0 %v1066
    %1255 = vmatprep.subr.bf16.mxu0 %v1071
    %1256 = vmatpush1.bf16.msra.mxu0 %v1070
    %1257 = vmatprep.subr.bf16.mxu0 %v1075
    %1258 = vmatpush1.bf16.msra.mxu0 %v1074
    %1259 = vmatprep.subr.bf16.mxu0 %v1079
    %1260 = vmatpush1.bf16.msra.mxu0 %v1078
    %1261 = vmatprep.subr.bf16.mxu0 %v1083
    %1262 = vmatpush1.bf16.msra.mxu0 %v1082
    %1263 = vmatprep.subr.bf16.mxu0 %v1087
    %1264 = vmatpush1.bf16.msra.mxu0 %v1086
    %1265 = vmatprep.subr.bf16.mxu0 %v1091
    %1266 = vmatpush1.bf16.msra.mxu0 %v1090
    %1267 = vmatprep.subr.bf16.mxu0 %v1095
    %1268 = vmatpush1.bf16.msra.mxu0 %v1094
    %1269 = vmatprep.subr.bf16.mxu0 %v1099
    %1270 = vmatpush1.bf16.msra.mxu0 %v1098
    %1271 = vmatprep.subr.bf16.mxu0 %v1103
    %1272 = vmatpush1.bf16.msra.mxu0 %v1102
    %1273 = vmatprep.mubr.bf16.mxu0 %v777
    %1274 = vmatmul.mubr.bf16.gmra.mrb[0].mxu0 %v776
    %v1275 = vpop.f32.mrb[0].mxu0
    %v1276 = vadd.f32 0.0, %v1275
    %v1277 = vpop.f32.mrb[0].mxu0
    %v1278 = vadd.f32 0.0, %v1277
    %v1279 = vpop.f32.mrb[0].mxu0
    %v1280 = vadd.f32 0.0, %v1279
    %v1281 = vpop.f32.mrb[0].mxu0
    %v1282 = vadd.f32 0.0, %v1281
    %1283 = vmatprep.mubr.bf16.mxu0 %v779
    %1284 = vmatmul.mubr.bf16.gmra.mrb[0].mxu0 %v778
    %v1285 = vpop.f32.mrb[0].mxu0
    %v1286 = vadd.f32 0.0, %v1285
    %v1287 = vpop.f32.mrb[0].mxu0
    %v1288 = vadd.f32 0.0, %v1287
    %v1289 = vpop.f32.mrb[0].mxu0
    %v1290 = vadd.f32 0.0, %v1289
    %v1291 = vpop.f32.mrb[0].mxu0
    %v1292 = vadd.f32 0.0, %v1291
    %1293 = vmatprep.mubr.bf16.mxu0 %v781
    %1294 = vmatmul.mubr.bf16.gmra.mrb[0].mxu0 %v780
    %v1295 = vpop.f32.mrb[0].mxu0
    %v1296 = vadd.f32 0.0, %v1295
    %v1297 = vpop.f32.mrb[0].mxu0
    %v1298 = vadd.f32 0.0, %v1297
    %v1299 = vpop.f32.mrb[0].mxu0
    %v1300 = vadd.f32 0.0, %v1299
    %v1301 = vpop.f32.mrb[0].mxu0
    %v1302 = vadd.f32 0.0, %v1301
    %1303 = vmatprep.mubr.bf16.mxu0 %v783
    %1304 = vmatmul.mubr.bf16.gmra.mrb[0].mxu0 %v782
    %v1305 = vpop.f32.mrb[0].mxu0
    %v1306 = vadd.f32 0.0, %v1305
    %v1307 = vpop.f32.mrb[0].mxu0
    %v1308 = vadd.f32 0.0, %v1307
    %v1309 = vpop.f32.mrb[0].mxu0
    %v1310 = vadd.f32 0.0, %v1309
    %v1311 = vpop.f32.mrb[0].mxu0
    %v1312 = vadd.f32 0.0, %v1311
    %1313 = vdwg.mxu0
    %v1314 = vld [vmem:[#allocation16] sm:$0xf]
    %v1315 = vld [vmem:[#allocation17] sm:$0xf]
    %v1316 = vadd.f32 %v1203, %v1207
    %v1317 = vadd.f32 %v1316, %v1213
    %v1318 = vadd.f32 %v1317, %v1217
    %v1319 = vadd.f32 %v1318, %v1223
    %v1320 = vadd.f32 %v1319, %v1227
    %v1321 = vadd.f32 %v1320, %v1233
    %v1322 = vadd.f32 %v1321, %v1237
    %v1323 = vrot.slane %v1322, 4
    %v1324 = vadd.f32 %v1322, %v1323
    %v1325 = vrot.slane %v1324, 2
    %v1326 = vadd.f32 %v1324, %v1325
    %v1327 = vrot.slane %v1326, 1
    %v1328 = vadd.f32 %v1326, %v1327
    %v1329 = vadd.f32 %v1205, %v1209
    %v1330 = vadd.f32 %v1329, %v1215
    %v1331 = vadd.f32 %v1330, %v1219
    %v1332 = vadd.f32 %v1331, %v1225
    %v1333 = vadd.f32 %v1332, %v1229
    %v1334 = vadd.f32 %v1333, %v1235
    %v1335 = vadd.f32 %v1334, %v1239
    %v1336 = vrot.slane %v1335, 4
    %v1337 = vadd.f32 %v1335, %v1336
    %v1338 = vrot.slane %v1337, 2
    %v1339 = vadd.f32 %v1337, %v1338
    %v1340 = vrot.slane %v1339, 1
    %v1341 = vadd.f32 %v1339, %v1340
    %v1342 = vadd.f32 %v1276, %v1280
    %v1343 = vadd.f32 %v1342, %v1286
    %v1344 = vadd.f32 %v1343, %v1290
    %v1345 = vadd.f32 %v1344, %v1296
    %v1346 = vadd.f32 %v1345, %v1300
    %v1347 = vadd.f32 %v1346, %v1306
    %v1348 = vadd.f32 %v1347, %v1310
    %v1349 = vrot.slane %v1348, 4
    %v1350 = vadd.f32 %v1348, %v1349
    %v1351 = vrot.slane %v1350, 2
    %v1352 = vadd.f32 %v1350, %v1351
    %v1353 = vrot.slane %v1352, 1
    %v1354 = vadd.f32 %v1352, %v1353
    %v1355 = vadd.f32 %v1278, %v1282
    %v1356 = vadd.f32 %v1355, %v1288
    %v1357 = vadd.f32 %v1356, %v1292
    %v1358 = vadd.f32 %v1357, %v1298
    %v1359 = vadd.f32 %v1358, %v1302
    %v1360 = vadd.f32 %v1359, %v1308
    %v1361 = vadd.f32 %v1360, %v1312
    %v1362 = vrot.slane %v1361, 4
    %v1363 = vadd.f32 %v1361, %v1362
    %v1364 = vrot.slane %v1363, 2
    %v1365 = vadd.f32 %v1363, %v1364
    %v1366 = vrot.slane %v1365, 1
    %v1367 = vadd.f32 %v1365, %v1366
    %v1368 = vmul.f32 %v1328, 0.015625
    %v1369 = vmul.f32 %v1341, 0.015625
    %v1370 = vmul.f32 %v1354, 0.015625
    %v1371 = vmul.f32 %v1367, 0.015625
    %v1372 = vmul.f32 %v1203, %v1203
    %v1373 = vmul.f32 %v1205, %v1205
    %v1374 = vmul.f32 %v1276, %v1276
    %v1375 = vmul.f32 %v1278, %v1278
    %v1376 = vmul.f32 %v1207, %v1207
    %v1377 = vmul.f32 %v1209, %v1209
    %v1378 = vmul.f32 %v1280, %v1280
    %v1379 = vmul.f32 %v1282, %v1282
    %v1380 = vmul.f32 %v1213, %v1213
    %v1381 = vmul.f32 %v1215, %v1215
    %v1382 = vmul.f32 %v1286, %v1286
    %v1383 = vmul.f32 %v1288, %v1288
    %v1384 = vmul.f32 %v1217, %v1217
    %v1385 = vmul.f32 %v1219, %v1219
    %v1386 = vmul.f32 %v1290, %v1290
    %v1387 = vmul.f32 %v1292, %v1292
    %v1388 = vmul.f32 %v1223, %v1223
    %v1389 = vmul.f32 %v1225, %v1225
    %v1390 = vmul.f32 %v1296, %v1296
    %v1391 = vmul.f32 %v1298, %v1298
    %v1392 = vmul.f32 %v1227, %v1227
    %v1393 = vmul.f32 %v1229, %v1229
    %v1394 = vmul.f32 %v1300, %v1300
    %v1395 = vmul.f32 %v1302, %v1302
    %v1396 = vmul.f32 %v1233, %v1233
    %v1397 = vmul.f32 %v1235, %v1235
    %v1398 = vmul.f32 %v1306, %v1306
    %v1399 = vmul.f32 %v1308, %v1308
    %v1400 = vmul.f32 %v1237, %v1237
    %v1401 = vmul.f32 %v1239, %v1239
    %v1402 = vmul.f32 %v1310, %v1310
    %v1403 = vmul.f32 %v1312, %v1312
    %v1404 = vadd.f32 %v1372, %v1376
    %v1405 = vadd.f32 %v1404, %v1380
    %v1406 = vadd.f32 %v1405, %v1384
    %v1407 = vadd.f32 %v1406, %v1388
    %v1408 = vadd.f32 %v1407, %v1392
    %v1409 = vadd.f32 %v1408, %v1396
    %v1410 = vadd.f32 %v1409, %v1400
    %v1411 = vrot.slane %v1410, 4
    %v1412 = vadd.f32 %v1410, %v1411
    %v1413 = vrot.slane %v1412, 2
    %v1414 = vadd.f32 %v1412, %v1413
    %v1415 = vrot.slane %v1414, 1
    %v1416 = vadd.f32 %v1414, %v1415
    %v1417 = vadd.f32 %v1373, %v1377
    %v1418 = vadd.f32 %v1417, %v1381
    %v1419 = vadd.f32 %v1418, %v1385
    %v1420 = vadd.f32 %v1419, %v1389
    %v1421 = vadd.f32 %v1420, %v1393
    %v1422 = vadd.f32 %v1421, %v1397
    %v1423 = vadd.f32 %v1422, %v1401
    %v1424 = vrot.slane %v1423, 4
    %v1425 = vadd.f32 %v1423, %v1424
    %v1426 = vrot.slane %v1425, 2
    %v1427 = vadd.f32 %v1425, %v1426
    %v1428 = vrot.slane %v1427, 1
    %v1429 = vadd.f32 %v1427, %v1428
    %v1430 = vadd.f32 %v1374, %v1378
    %v1431 = vadd.f32 %v1430, %v1382
    %v1432 = vadd.f32 %v1431, %v1386
    %v1433 = vadd.f32 %v1432, %v1390
    %v1434 = vadd.f32 %v1433, %v1394
    %v1435 = vadd.f32 %v1434, %v1398
    %v1436 = vadd.f32 %v1435, %v1402
    %v1437 = vrot.slane %v1436, 4
    %v1438 = vadd.f32 %v1436, %v1437
    %v1439 = vrot.slane %v1438, 2
    %v1440 = vadd.f32 %v1438, %v1439
    %v1441 = vrot.slane %v1440, 1
    %v1442 = vadd.f32 %v1440, %v1441
    %v1443 = vadd.f32 %v1375, %v1379
    %v1444 = vadd.f32 %v1443, %v1383
    %v1445 = vadd.f32 %v1444, %v1387
    %v1446 = vadd.f32 %v1445, %v1391
    %v1447 = vadd.f32 %v1446, %v1395
    %v1448 = vadd.f32 %v1447, %v1399
    %v1449 = vadd.f32 %v1448, %v1403
    %v1450 = vrot.slane %v1449, 4
    %v1451 = vadd.f32 %v1449, %v1450
    %v1452 = vrot.slane %v1451, 2
    %v1453 = vadd.f32 %v1451, %v1452
    %v1454 = vrot.slane %v1453, 1
    %v1455 = vadd.f32 %v1453, %v1454
    %v1456 = vmul.f32 %v1416, 0.015625
    %v1457 = vmul.f32 %v1429, 0.015625
    %v1458 = vmul.f32 %v1442, 0.015625
    %v1459 = vmul.f32 %v1455, 0.015625
    %v1460 = vmul.f32 %v1368, %v1368
    %v1461 = vmul.f32 %v1369, %v1369
    %v1462 = vmul.f32 %v1370, %v1370
    %v1463 = vmul.f32 %v1371, %v1371
    %v1464 = vsub.f32 %v1456, %v1460
    %v1465 = vsub.f32 %v1457, %v1461
    %v1466 = vsub.f32 %v1458, %v1462
    %v1467 = vsub.f32 %v1459, %v1463
    %v1468 = vmax.f32 %v1464, 0.0
    %v1469 = vmax.f32 %v1465, 0.0
    %v1470 = vmax.f32 %v1466, 0.0
    %v1471 = vmax.f32 %v1467, 0.0
    %v1472 = vadd.f32 %v1468, 1e-05
    %v1473 = vadd.f32 %v1469, 1e-05
    %v1474 = vadd.f32 %v1470, 1e-05
    %v1475 = vadd.f32 %v1471, 1e-05
    %v1476 = vrsqrt.pop %v1472
    %v1477 = vrsqrt.pop %v1473
    %v1478 = vrsqrt.pop %v1474
    %v1479 = vrsqrt.pop %v1475
    %v1484 = vcombine.low %v1476, %v1477
    %v1485 = vcombine.low %v1478, %v1479
    %v1487 = vunpack.c.l.s4 1966171168
    %v1488 = vunpack.c.0.s8 %v1487
    %v1489 = vlaneseq
    %v1490 = vshrl.u32 %v1489, 7
    %v1491 = vsub.s32 %v1488, %v1490
    %v1492 = vrot.slane %v1484, %v1491
    %v1494 = vunpack.c.l.s4 1966171168
    %v1495 = vunpack.c.0.s8 %v1494
    %v1496 = vlaneseq
    %v1497 = vshrl.u32 %v1496, 7
    %v1498 = vsub.s32 %v1495, %v1497
    %v1499 = vrot.slane %v1485, %v1498
    %v1500 = vcombine.low %v1492, %v1499
    %v1502 = vunpack.c.l.s4 1966171168
    %v1503 = vunpack.c.0.s8 %v1502
    %v1504 = vlaneseq
    %v1505 = vshrl.u32 %v1504, 7
    %v1506 = vsub.s32 %v1503, %v1505
    %v1507 = vrot.slane %v1500, %v1506
    %v1509 = vmul.f32 %v1314, %v1507
    %v1511 = vlaneseq
    %v1512 = vshrl.u32 %v1511, 7
    %v1513 = vsub.s32 0, %v1512
    %v1514 = vrot.slane %v1509, %v1513
    %v1515 = vlaneseq
    %v1516 = vshrl.u32 %v1515, 7
    %v1517 = vsub.s32 1, %v1516
    %v1518 = vrot.slane %v1509, %v1517
    %v1519 = vlaneseq
    %v1520 = vshrl.u32 %v1519, 7
    %v1521 = vsub.s32 2, %v1520
    %v1522 = vrot.slane %v1509, %v1521
    %v1523 = vlaneseq
    %v1524 = vshrl.u32 %v1523, 7
    %v1525 = vsub.s32 3, %v1524
    %v1526 = vrot.slane %v1509, %v1525
    %v1531 = vmul.f32 %v1368, %v1514
    %v1532 = vmul.f32 %v1369, %v1518
    %v1533 = vmul.f32 %v1370, %v1522
    %v1534 = vmul.f32 %v1371, %v1526
    %v1539 = vcombine.low %v1531, %v1532
    %v1540 = vcombine.low %v1533, %v1534
    %v1542 = vunpack.c.l.s4 1966171168
    %v1543 = vunpack.c.0.s8 %v1542
    %v1544 = vlaneseq
    %v1545 = vshrl.u32 %v1544, 7
    %v1546 = vsub.s32 %v1543, %v1545
    %v1547 = vrot.slane %v1539, %v1546
    %v1549 = vunpack.c.l.s4 1966171168
    %v1550 = vunpack.c.0.s8 %v1549
    %v1551 = vlaneseq
    %v1552 = vshrl.u32 %v1551, 7
    %v1553 = vsub.s32 %v1550, %v1552
    %v1554 = vrot.slane %v1540, %v1553
    %v1555 = vcombine.low %v1547, %v1554
    %v1557 = vunpack.c.l.s4 1966171168
    %v1558 = vunpack.c.0.s8 %v1557
    %v1559 = vlaneseq
    %v1560 = vshrl.u32 %v1559, 7
    %v1561 = vsub.s32 %v1558, %v1560
    %v1562 = vrot.slane %v1555, %v1561
    %v1564 = vsub.f32 %v1315, %v1562
    %v1565 = vmul.f32 %v1203, %v1514
    %v1566 = vmul.f32 %v1205, %v1518
    %v1567 = vmul.f32 %v1276, %v1522
    %v1568 = vmul.f32 %v1278, %v1526
    %v1569 = vmul.f32 %v1207, %v1514
    %v1570 = vmul.f32 %v1209, %v1518
    %v1571 = vmul.f32 %v1280, %v1522
    %v1572 = vmul.f32 %v1282, %v1526
    %v1573 = vmul.f32 %v1213, %v1514
    %v1574 = vmul.f32 %v1215, %v1518
    %v1575 = vmul.f32 %v1286, %v1522
    %v1576 = vmul.f32 %v1288, %v1526
    %v1577 = vmul.f32 %v1217, %v1514
    %v1578 = vmul.f32 %v1219, %v1518
    %v1579 = vmul.f32 %v1290, %v1522
    %v1580 = vmul.f32 %v1292, %v1526
    %v1581 = vmul.f32 %v1223, %v1514
    %v1582 = vmul.f32 %v1225, %v1518
    %v1583 = vmul.f32 %v1296, %v1522
    %v1584 = vmul.f32 %v1298, %v1526
    %v1585 = vmul.f32 %v1227, %v1514
    %v1586 = vmul.f32 %v1229, %v1518
    %v1587 = vmul.f32 %v1300, %v1522
    %v1588 = vmul.f32 %v1302, %v1526
    %v1589 = vmul.f32 %v1233, %v1514
    %v1590 = vmul.f32 %v1235, %v1518
    %v1591 = vmul.f32 %v1306, %v1522
    %v1592 = vmul.f32 %v1308, %v1526
    %v1593 = vmul.f32 %v1237, %v1514
    %v1594 = vmul.f32 %v1239, %v1518
    %v1595 = vmul.f32 %v1310, %v1522
    %v1596 = vmul.f32 %v1312, %v1526
    %v1598 = vlaneseq
    %v1599 = vshrl.u32 %v1598, 7
    %v1600 = vsub.s32 0, %v1599
    %v1601 = vrot.slane %v1564, %v1600
    %v1602 = vlaneseq
    %v1603 = vshrl.u32 %v1602, 7
    %v1604 = vsub.s32 1, %v1603
    %v1605 = vrot.slane %v1564, %v1604
    %v1606 = vlaneseq
    %v1607 = vshrl.u32 %v1606, 7
    %v1608 = vsub.s32 2, %v1607
    %v1609 = vrot.slane %v1564, %v1608
    %v1610 = vlaneseq
    %v1611 = vshrl.u32 %v1610, 7
    %v1612 = vsub.s32 3, %v1611
    %v1613 = vrot.slane %v1564, %v1612
    %v1618 = vadd.f32 %v1565, %v1601
    %v1619 = vadd.f32 %v1566, %v1605
    %v1620 = vadd.f32 %v1567, %v1609
    %v1621 = vadd.f32 %v1568, %v1613
    %v1622 = vadd.f32 %v1569, %v1601
    %v1623 = vadd.f32 %v1570, %v1605
    %v1624 = vadd.f32 %v1571, %v1609
    %v1625 = vadd.f32 %v1572, %v1613
    %v1626 = vadd.f32 %v1573, %v1601
    %v1627 = vadd.f32 %v1574, %v1605
    %v1628 = vadd.f32 %v1575, %v1609
    %v1629 = vadd.f32 %v1576, %v1613
    %v1630 = vadd.f32 %v1577, %v1601
    %v1631 = vadd.f32 %v1578, %v1605
    %v1632 = vadd.f32 %v1579, %v1609
    %v1633 = vadd.f32 %v1580, %v1613
    %v1634 = vadd.f32 %v1581, %v1601
    %v1635 = vadd.f32 %v1582, %v1605
    %v1636 = vadd.f32 %v1583, %v1609
    %v1637 = vadd.f32 %v1584, %v1613
    %v1638 = vadd.f32 %v1585, %v1601
    %v1639 = vadd.f32 %v1586, %v1605
    %v1640 = vadd.f32 %v1587, %v1609
    %v1641 = vadd.f32 %v1588, %v1613
    %v1642 = vadd.f32 %v1589, %v1601
    %v1643 = vadd.f32 %v1590, %v1605
    %v1644 = vadd.f32 %v1591, %v1609
    %v1645 = vadd.f32 %v1592, %v1613
    %v1646 = vadd.f32 %v1593, %v1601
    %v1647 = vadd.f32 %v1594, %v1605
    %v1648 = vadd.f32 %v1595, %v1609
    %v1649 = vadd.f32 %v1596, %v1613
    %v1650 = vmul.f32 %v1618, 0.2
    %v1651 = vmul.f32 %v1619, 0.2
    %v1652 = vmul.f32 %v1620, 0.2
    %v1653 = vmul.f32 %v1621, 0.2
    %v1654 = vmul.f32 %v1622, 0.2
    %v1655 = vmul.f32 %v1623, 0.2
    %v1656 = vmul.f32 %v1624, 0.2
    %v1657 = vmul.f32 %v1625, 0.2
    %v1658 = vmul.f32 %v1626, 0.2
    %v1659 = vmul.f32 %v1627, 0.2
    %v1660 = vmul.f32 %v1628, 0.2
    %v1661 = vmul.f32 %v1629, 0.2
    %v1662 = vmul.f32 %v1630, 0.2
    %v1663 = vmul.f32 %v1631, 0.2
    %v1664 = vmul.f32 %v1632, 0.2
    %v1665 = vmul.f32 %v1633, 0.2
    %v1666 = vmul.f32 %v1634, 0.2
    %v1667 = vmul.f32 %v1635, 0.2
    %v1668 = vmul.f32 %v1636, 0.2
    %v1669 = vmul.f32 %v1637, 0.2
    %v1670 = vmul.f32 %v1638, 0.2
    %v1671 = vmul.f32 %v1639, 0.2
    %v1672 = vmul.f32 %v1640, 0.2
    %v1673 = vmul.f32 %v1641, 0.2
    %v1674 = vmul.f32 %v1642, 0.2
    %v1675 = vmul.f32 %v1643, 0.2
    %v1676 = vmul.f32 %v1644, 0.2
    %v1677 = vmul.f32 %v1645, 0.2
    %v1678 = vmul.f32 %v1646, 0.2
    %v1679 = vmul.f32 %v1647, 0.2
    %v1680 = vmul.f32 %v1648, 0.2
    %v1681 = vmul.f32 %v1649, 0.2
    %v1682 = vmax.f32 %v1618, %v1650
    %v1683 = vmax.f32 %v1619, %v1651
    %v1684 = vmax.f32 %v1620, %v1652
    %v1685 = vmax.f32 %v1621, %v1653
    %v1686 = vmax.f32 %v1622, %v1654
    %v1687 = vmax.f32 %v1623, %v1655
    %v1688 = vmax.f32 %v1624, %v1656
    %v1689 = vmax.f32 %v1625, %v1657
    %v1690 = vmax.f32 %v1626, %v1658
    %v1691 = vmax.f32 %v1627, %v1659
    %v1692 = vmax.f32 %v1628, %v1660
    %v1693 = vmax.f32 %v1629, %v1661
    %v1694 = vmax.f32 %v1630, %v1662
    %v1695 = vmax.f32 %v1631, %v1663
    %v1696 = vmax.f32 %v1632, %v1664
    %v1697 = vmax.f32 %v1633, %v1665
    %v1698 = vmax.f32 %v1634, %v1666
    %v1699 = vmax.f32 %v1635, %v1667
    %v1700 = vmax.f32 %v1636, %v1668
    %v1701 = vmax.f32 %v1637, %v1669
    %v1702 = vmax.f32 %v1638, %v1670
    %v1703 = vmax.f32 %v1639, %v1671
    %v1704 = vmax.f32 %v1640, %v1672
    %v1705 = vmax.f32 %v1641, %v1673
    %v1706 = vmax.f32 %v1642, %v1674
    %v1707 = vmax.f32 %v1643, %v1675
    %v1708 = vmax.f32 %v1644, %v1676
    %v1709 = vmax.f32 %v1645, %v1677
    %v1710 = vmax.f32 %v1646, %v1678
    %v1711 = vmax.f32 %v1647, %v1679
    %v1712 = vmax.f32 %v1648, %v1680
    %v1713 = vmax.f32 %v1649, %v1681
    %s1714 = smul.u32 4, 64
    %s1715 = smul.u32 %s1714, 8
    %s1716 = sshll.u32 %s1715, 4
    %1717 = dma.done [#allocation4], %s1716
    %v1718 = vpack.c.bf16 %v1686, %v1682
    %v1719 = vpack.c.bf16 %v1687, %v1683
    %v1720 = vpack.c.bf16 %v1688, %v1684
    %v1721 = vpack.c.bf16 %v1689, %v1685
    %v1722 = vpack.c.bf16 %v1694, %v1690
    %v1723 = vpack.c.bf16 %v1695, %v1691
    %v1724 = vpack.c.bf16 %v1696, %v1692
    %v1725 = vpack.c.bf16 %v1697, %v1693
    %v1726 = vpack.c.bf16 %v1702, %v1698
    %v1727 = vpack.c.bf16 %v1703, %v1699
    %v1728 = vpack.c.bf16 %v1704, %v1700
    %v1729 = vpack.c.bf16 %v1705, %v1701
    %v1730 = vpack.c.bf16 %v1710, %v1706
    %v1731 = vpack.c.bf16 %v1711, %v1707
    %v1732 = vpack.c.bf16 %v1712, %v1708
    %v1733 = vpack.c.bf16 %v1713, %v1709
    %v1734 = vld [vmem:[#allocation2] sm:$0xff]
    %v1735 = vld [vmem:[#allocation2 + $0x8] sm:$0xff]
    %v1736 = vld [vmem:[#allocation2 + $0x10] sm:$0xff]
    %v1737 = vld [vmem:[#allocation2 + $0x18] sm:$0xff]
    %v1738 = vld [vmem:[#allocation2 + $0x20] sm:$0xff]
    %v1739 = vld [vmem:[#allocation2 + $0x28] sm:$0xff]
    %v1740 = vld [vmem:[#allocation2 + $0x30] sm:$0xff]
    %v1741 = vld [vmem:[#allocation2 + $0x38] sm:$0xff]
    %v1742 = vld [vmem:[#allocation2 + $0x40] sm:$0xff]
    %v1743 = vld [vmem:[#allocation2 + $0x48] sm:$0xff]
    %v1744 = vld [vmem:[#allocation2 + $0x50] sm:$0xff]
    %v1745 = vld [vmem:[#allocation2 + $0x58] sm:$0xff]
    %v1746 = vld [vmem:[#allocation2 + $0x60] sm:$0xff]
    %v1747 = vld [vmem:[#allocation2 + $0x68] sm:$0xff]
    %v1748 = vld [vmem:[#allocation2 + $0x70] sm:$0xff]
    %v1749 = vld [vmem:[#allocation2 + $0x78] sm:$0xff]
    %v1750 = vld [vmem:[#allocation2 + $0x80] sm:$0xff]
    %v1751 = vld [vmem:[#allocation2 + $0x88] sm:$0xff]
    %v1752 = vld [vmem:[#allocation2 + $0x90] sm:$0xff]
    %v1753 = vld [vmem:[#allocation2 + $0x98] sm:$0xff]
    %v1754 = vld [vmem:[#allocation2 + $0xa0] sm:$0xff]
    %v1755 = vld [vmem:[#allocation2 + $0xa8] sm:$0xff]
    %v1756 = vld [vmem:[#allocation2 + $0xb0] sm:$0xff]
    %v1757 = vld [vmem:[#allocation2 + $0xb8] sm:$0xff]
    %v1758 = vld [vmem:[#allocation2 + $0xc0] sm:$0xff]
    %v1759 = vld [vmem:[#allocation2 + $0xc8] sm:$0xff]
    %v1760 = vld [vmem:[#allocation2 + $0xd0] sm:$0xff]
    %v1761 = vld [vmem:[#allocation2 + $0xd8] sm:$0xff]
    %v1762 = vld [vmem:[#allocation2 + $0xe0] sm:$0xff]
    %v1763 = vld [vmem:[#allocation2 + $0xe8] sm:$0xff]
    %v1764 = vld [vmem:[#allocation2 + $0xf0] sm:$0xff]
    %v1765 = vld [vmem:[#allocation2 + $0xf8] sm:$0xff]
    %v1766 = vld [vmem:[#allocation2 + $0x100] sm:$0xff]
    %v1767 = vld [vmem:[#allocation2 + $0x108] sm:$0xff]
    %v1768 = vld [vmem:[#allocation2 + $0x110] sm:$0xff]
    %v1769 = vld [vmem:[#allocation2 + $0x118] sm:$0xff]
    %v1770 = vld [vmem:[#allocation2 + $0x120] sm:$0xff]
    %v1771 = vld [vmem:[#allocation2 + $0x128] sm:$0xff]
    %v1772 = vld [vmem:[#allocation2 + $0x130] sm:$0xff]
    %v1773 = vld [vmem:[#allocation2 + $0x138] sm:$0xff]
    %v1774 = vld [vmem:[#allocation2 + $0x140] sm:$0xff]
    %v1775 = vld [vmem:[#allocation2 + $0x148] sm:$0xff]
    %v1776 = vld [vmem:[#allocation2 + $0x150] sm:$0xff]
    %v1777 = vld [vmem:[#allocation2 + $0x158] sm:$0xff]
    %v1778 = vld [vmem:[#allocation2 + $0x160] sm:$0xff]
    %v1779 = vld [vmem:[#allocation2 + $0x168] sm:$0xff]
    %v1780 = vld [vmem:[#allocation2 + $0x170] sm:$0xff]
    %v1781 = vld [vmem:[#allocation2 + $0x178] sm:$0xff]
    %v1782 = vld [vmem:[#allocation2 + $0x180] sm:$0xff]
    %v1783 = vld [vmem:[#allocation2 + $0x188] sm:$0xff]
    %v1784 = vld [vmem:[#allocation2 + $0x190] sm:$0xff]
    %v1785 = vld [vmem:[#allocation2 + $0x198] sm:$0xff]
    %v1786 = vld [vmem:[#allocation2 + $0x1a0] sm:$0xff]
    %v1787 = vld [vmem:[#allocation2 + $0x1a8] sm:$0xff]
    %v1788 = vld [vmem:[#allocation2 + $0x1b0] sm:$0xff]
    %v1789 = vld [vmem:[#allocation2 + $0x1b8] sm:$0xff]
    %v1790 = vld [vmem:[#allocation2 + $0x1c0] sm:$0xff]
    %v1791 = vld [vmem:[#allocation2 + $0x1c8] sm:$0xff]
    %v1792 = vld [vmem:[#allocation2 + $0x1d0] sm:$0xff]
    %v1793 = vld [vmem:[#allocation2 + $0x1d8] sm:$0xff]
    %v1794 = vld [vmem:[#allocation2 + $0x1e0] sm:$0xff]
    %v1795 = vld [vmem:[#allocation2 + $0x1e8] sm:$0xff]
    %v1796 = vld [vmem:[#allocation2 + $0x1f0] sm:$0xff]
    %v1797 = vld [vmem:[#allocation2 + $0x1f8] sm:$0xff]
    %v1798 = vld [vmem:[#allocation2 + $0x200] sm:$0xff]
    %v1799 = vld [vmem:[#allocation2 + $0x208] sm:$0xff]
    %v1800 = vld [vmem:[#allocation2 + $0x210] sm:$0xff]
    %v1801 = vld [vmem:[#allocation2 + $0x218] sm:$0xff]
    %v1802 = vld [vmem:[#allocation2 + $0x220] sm:$0xff]
    %v1803 = vld [vmem:[#allocation2 + $0x228] sm:$0xff]
    %v1804 = vld [vmem:[#allocation2 + $0x230] sm:$0xff]
    %v1805 = vld [vmem:[#allocation2 + $0x238] sm:$0xff]
    %v1806 = vld [vmem:[#allocation2 + $0x240] sm:$0xff]
    %v1807 = vld [vmem:[#allocation2 + $0x248] sm:$0xff]
    %v1808 = vld [vmem:[#allocation2 + $0x250] sm:$0xff]
    %v1809 = vld [vmem:[#allocation2 + $0x258] sm:$0xff]
    %v1810 = vld [vmem:[#allocation2 + $0x260] sm:$0xff]
    %v1811 = vld [vmem:[#allocation2 + $0x268] sm:$0xff]
    %v1812 = vld [vmem:[#allocation2 + $0x270] sm:$0xff]
    %v1813 = vld [vmem:[#allocation2 + $0x278] sm:$0xff]
    %v1814 = vld [vmem:[#allocation2 + $0x280] sm:$0xff]
    %v1815 = vld [vmem:[#allocation2 + $0x288] sm:$0xff]
    %v1816 = vld [vmem:[#allocation2 + $0x290] sm:$0xff]
    %v1817 = vld [vmem:[#allocation2 + $0x298] sm:$0xff]
    %v1818 = vld [vmem:[#allocation2 + $0x2a0] sm:$0xff]
    %v1819 = vld [vmem:[#allocation2 + $0x2a8] sm:$0xff]
    %v1820 = vld [vmem:[#allocation2 + $0x2b0] sm:$0xff]
    %v1821 = vld [vmem:[#allocation2 + $0x2b8] sm:$0xff]
    %v1822 = vld [vmem:[#allocation2 + $0x2c0] sm:$0xff]
    %v1823 = vld [vmem:[#allocation2 + $0x2c8] sm:$0xff]
    %v1824 = vld [vmem:[#allocation2 + $0x2d0] sm:$0xff]
    %v1825 = vld [vmem:[#allocation2 + $0x2d8] sm:$0xff]
    %v1826 = vld [vmem:[#allocation2 + $0x2e0] sm:$0xff]
    %v1827 = vld [vmem:[#allocation2 + $0x2e8] sm:$0xff]
    %v1828 = vld [vmem:[#allocation2 + $0x2f0] sm:$0xff]
    %v1829 = vld [vmem:[#allocation2 + $0x2f8] sm:$0xff]
    %v1830 = vld [vmem:[#allocation2 + $0x300] sm:$0xff]
    %v1831 = vld [vmem:[#allocation2 + $0x308] sm:$0xff]
    %v1832 = vld [vmem:[#allocation2 + $0x310] sm:$0xff]
    %v1833 = vld [vmem:[#allocation2 + $0x318] sm:$0xff]
    %v1834 = vld [vmem:[#allocation2 + $0x320] sm:$0xff]
    %v1835 = vld [vmem:[#allocation2 + $0x328] sm:$0xff]
    %v1836 = vld [vmem:[#allocation2 + $0x330] sm:$0xff]
    %v1837 = vld [vmem:[#allocation2 + $0x338] sm:$0xff]
    %v1838 = vld [vmem:[#allocation2 + $0x340] sm:$0xff]
    %v1839 = vld [vmem:[#allocation2 + $0x348] sm:$0xff]
    %v1840 = vld [vmem:[#allocation2 + $0x350] sm:$0xff]
    %v1841 = vld [vmem:[#allocation2 + $0x358] sm:$0xff]
    %v1842 = vld [vmem:[#allocation2 + $0x360] sm:$0xff]
    %v1843 = vld [vmem:[#allocation2 + $0x368] sm:$0xff]
    %v1844 = vld [vmem:[#allocation2 + $0x370] sm:$0xff]
    %v1845 = vld [vmem:[#allocation2 + $0x378] sm:$0xff]
    %v1846 = vld [vmem:[#allocation2 + $0x380] sm:$0xff]
    %v1847 = vld [vmem:[#allocation2 + $0x388] sm:$0xff]
    %v1848 = vld [vmem:[#allocation2 + $0x390] sm:$0xff]
    %v1849 = vld [vmem:[#allocation2 + $0x398] sm:$0xff]
    %v1850 = vld [vmem:[#allocation2 + $0x3a0] sm:$0xff]
    %v1851 = vld [vmem:[#allocation2 + $0x3a8] sm:$0xff]
    %v1852 = vld [vmem:[#allocation2 + $0x3b0] sm:$0xff]
    %v1853 = vld [vmem:[#allocation2 + $0x3b8] sm:$0xff]
    %v1854 = vld [vmem:[#allocation2 + $0x3c0] sm:$0xff]
    %v1855 = vld [vmem:[#allocation2 + $0x3c8] sm:$0xff]
    %v1856 = vld [vmem:[#allocation2 + $0x3d0] sm:$0xff]
    %v1857 = vld [vmem:[#allocation2 + $0x3d8] sm:$0xff]
    %v1858 = vld [vmem:[#allocation2 + $0x3e0] sm:$0xff]
    %v1859 = vld [vmem:[#allocation2 + $0x3e8] sm:$0xff]
    %v1860 = vld [vmem:[#allocation2 + $0x3f0] sm:$0xff]
    %v1861 = vld [vmem:[#allocation2 + $0x3f8] sm:$0xff]
    %v1862 = vld [vmem:[#allocation2 + $0x400] sm:$0xff]
    %v1863 = vld [vmem:[#allocation2 + $0x408] sm:$0xff]
    %v1864 = vld [vmem:[#allocation2 + $0x410] sm:$0xff]
    %v1865 = vld [vmem:[#allocation2 + $0x418] sm:$0xff]
    %v1866 = vld [vmem:[#allocation2 + $0x420] sm:$0xff]
    %v1867 = vld [vmem:[#allocation2 + $0x428] sm:$0xff]
    %v1868 = vld [vmem:[#allocation2 + $0x430] sm:$0xff]
    %v1869 = vld [vmem:[#allocation2 + $0x438] sm:$0xff]
    %v1870 = vld [vmem:[#allocation2 + $0x440] sm:$0xff]
    %v1871 = vld [vmem:[#allocation2 + $0x448] sm:$0xff]
    %v1872 = vld [vmem:[#allocation2 + $0x450] sm:$0xff]
    %v1873 = vld [vmem:[#allocation2 + $0x458] sm:$0xff]
    %v1874 = vld [vmem:[#allocation2 + $0x460] sm:$0xff]
    %v1875 = vld [vmem:[#allocation2 + $0x468] sm:$0xff]
    %v1876 = vld [vmem:[#allocation2 + $0x470] sm:$0xff]
    %v1877 = vld [vmem:[#allocation2 + $0x478] sm:$0xff]
    %v1878 = vld [vmem:[#allocation2 + $0x480] sm:$0xff]
    %v1879 = vld [vmem:[#allocation2 + $0x488] sm:$0xff]
    %v1880 = vld [vmem:[#allocation2 + $0x490] sm:$0xff]
    %v1881 = vld [vmem:[#allocation2 + $0x498] sm:$0xff]
    %v1882 = vld [vmem:[#allocation2 + $0x4a0] sm:$0xff]
    %v1883 = vld [vmem:[#allocation2 + $0x4a8] sm:$0xff]
    %v1884 = vld [vmem:[#allocation2 + $0x4b0] sm:$0xff]
    %v1885 = vld [vmem:[#allocation2 + $0x4b8] sm:$0xff]
    %v1886 = vld [vmem:[#allocation2 + $0x4c0] sm:$0xff]
    %v1887 = vld [vmem:[#allocation2 + $0x4c8] sm:$0xff]
    %v1888 = vld [vmem:[#allocation2 + $0x4d0] sm:$0xff]
    %v1889 = vld [vmem:[#allocation2 + $0x4d8] sm:$0xff]
    %v1890 = vld [vmem:[#allocation2 + $0x4e0] sm:$0xff]
    %v1891 = vld [vmem:[#allocation2 + $0x4e8] sm:$0xff]
    %v1892 = vld [vmem:[#allocation2 + $0x4f0] sm:$0xff]
    %v1893 = vld [vmem:[#allocation2 + $0x4f8] sm:$0xff]
    %v1894 = vld [vmem:[#allocation2 + $0x500] sm:$0xff]
    %v1895 = vld [vmem:[#allocation2 + $0x508] sm:$0xff]
    %v1896 = vld [vmem:[#allocation2 + $0x510] sm:$0xff]
    %v1897 = vld [vmem:[#allocation2 + $0x518] sm:$0xff]
    %v1898 = vld [vmem:[#allocation2 + $0x520] sm:$0xff]
    %v1899 = vld [vmem:[#allocation2 + $0x528] sm:$0xff]
    %v1900 = vld [vmem:[#allocation2 + $0x530] sm:$0xff]
    %v1901 = vld [vmem:[#allocation2 + $0x538] sm:$0xff]
    %v1902 = vld [vmem:[#allocation2 + $0x540] sm:$0xff]
    %v1903 = vld [vmem:[#allocation2 + $0x548] sm:$0xff]
    %v1904 = vld [vmem:[#allocation2 + $0x550] sm:$0xff]
    %v1905 = vld [vmem:[#allocation2 + $0x558] sm:$0xff]
    %v1906 = vld [vmem:[#allocation2 + $0x560] sm:$0xff]
    %v1907 = vld [vmem:[#allocation2 + $0x568] sm:$0xff]
    %v1908 = vld [vmem:[#allocation2 + $0x570] sm:$0xff]
    %v1909 = vld [vmem:[#allocation2 + $0x578] sm:$0xff]
    %v1910 = vld [vmem:[#allocation2 + $0x580] sm:$0xff]
    %v1911 = vld [vmem:[#allocation2 + $0x588] sm:$0xff]
    %v1912 = vld [vmem:[#allocation2 + $0x590] sm:$0xff]
    %v1913 = vld [vmem:[#allocation2 + $0x598] sm:$0xff]
    %v1914 = vld [vmem:[#allocation2 + $0x5a0] sm:$0xff]
    %v1915 = vld [vmem:[#allocation2 + $0x5a8] sm:$0xff]
    %v1916 = vld [vmem:[#allocation2 + $0x5b0] sm:$0xff]
    %v1917 = vld [vmem:[#allocation2 + $0x5b8] sm:$0xff]
    %v1918 = vld [vmem:[#allocation2 + $0x5c0] sm:$0xff]
    %v1919 = vld [vmem:[#allocation2 + $0x5c8] sm:$0xff]
    %v1920 = vld [vmem:[#allocation2 + $0x5d0] sm:$0xff]
    %v1921 = vld [vmem:[#allocation2 + $0x5d8] sm:$0xff]
    %v1922 = vld [vmem:[#allocation2 + $0x5e0] sm:$0xff]
    %v1923 = vld [vmem:[#allocation2 + $0x5e8] sm:$0xff]
    %v1924 = vld [vmem:[#allocation2 + $0x5f0] sm:$0xff]
    %v1925 = vld [vmem:[#allocation2 + $0x5f8] sm:$0xff]
    %v1926 = vld [vmem:[#allocation2 + $0x600] sm:$0xff]
    %v1927 = vld [vmem:[#allocation2 + $0x608] sm:$0xff]
    %v1928 = vld [vmem:[#allocation2 + $0x610] sm:$0xff]
    %v1929 = vld [vmem:[#allocation2 + $0x618] sm:$0xff]
    %v1930 = vld [vmem:[#allocation2 + $0x620] sm:$0xff]
    %v1931 = vld [vmem:[#allocation2 + $0x628] sm:$0xff]
    %v1932 = vld [vmem:[#allocation2 + $0x630] sm:$0xff]
    %v1933 = vld [vmem:[#allocation2 + $0x638] sm:$0xff]
    %v1934 = vld [vmem:[#allocation2 + $0x640] sm:$0xff]
    %v1935 = vld [vmem:[#allocation2 + $0x648] sm:$0xff]
    %v1936 = vld [vmem:[#allocation2 + $0x650] sm:$0xff]
    %v1937 = vld [vmem:[#allocation2 + $0x658] sm:$0xff]
    %v1938 = vld [vmem:[#allocation2 + $0x660] sm:$0xff]
    %v1939 = vld [vmem:[#allocation2 + $0x668] sm:$0xff]
    %v1940 = vld [vmem:[#allocation2 + $0x670] sm:$0xff]
    %v1941 = vld [vmem:[#allocation2 + $0x678] sm:$0xff]
    %v1942 = vld [vmem:[#allocation2 + $0x680] sm:$0xff]
    %v1943 = vld [vmem:[#allocation2 + $0x688] sm:$0xff]
    %v1944 = vld [vmem:[#allocation2 + $0x690] sm:$0xff]
    %v1945 = vld [vmem:[#allocation2 + $0x698] sm:$0xff]
    %v1946 = vld [vmem:[#allocation2 + $0x6a0] sm:$0xff]
    %v1947 = vld [vmem:[#allocation2 + $0x6a8] sm:$0xff]
    %v1948 = vld [vmem:[#allocation2 + $0x6b0] sm:$0xff]
    %v1949 = vld [vmem:[#allocation2 + $0x6b8] sm:$0xff]
    %v1950 = vld [vmem:[#allocation2 + $0x6c0] sm:$0xff]
    %v1951 = vld [vmem:[#allocation2 + $0x6c8] sm:$0xff]
    %v1952 = vld [vmem:[#allocation2 + $0x6d0] sm:$0xff]
    %v1953 = vld [vmem:[#allocation2 + $0x6d8] sm:$0xff]
    %v1954 = vld [vmem:[#allocation2 + $0x6e0] sm:$0xff]
    %v1955 = vld [vmem:[#allocation2 + $0x6e8] sm:$0xff]
    %v1956 = vld [vmem:[#allocation2 + $0x6f0] sm:$0xff]
    %v1957 = vld [vmem:[#allocation2 + $0x6f8] sm:$0xff]
    %v1958 = vld [vmem:[#allocation2 + $0x700] sm:$0xff]
    %v1959 = vld [vmem:[#allocation2 + $0x708] sm:$0xff]
    %v1960 = vld [vmem:[#allocation2 + $0x710] sm:$0xff]
    %v1961 = vld [vmem:[#allocation2 + $0x718] sm:$0xff]
    %v1962 = vld [vmem:[#allocation2 + $0x720] sm:$0xff]
    %v1963 = vld [vmem:[#allocation2 + $0x728] sm:$0xff]
    %v1964 = vld [vmem:[#allocation2 + $0x730] sm:$0xff]
    %v1965 = vld [vmem:[#allocation2 + $0x738] sm:$0xff]
    %v1966 = vld [vmem:[#allocation2 + $0x740] sm:$0xff]
    %v1967 = vld [vmem:[#allocation2 + $0x748] sm:$0xff]
    %v1968 = vld [vmem:[#allocation2 + $0x750] sm:$0xff]
    %v1969 = vld [vmem:[#allocation2 + $0x758] sm:$0xff]
    %v1970 = vld [vmem:[#allocation2 + $0x760] sm:$0xff]
    %v1971 = vld [vmem:[#allocation2 + $0x768] sm:$0xff]
    %v1972 = vld [vmem:[#allocation2 + $0x770] sm:$0xff]
    %v1973 = vld [vmem:[#allocation2 + $0x778] sm:$0xff]
    %v1974 = vld [vmem:[#allocation2 + $0x780] sm:$0xff]
    %v1975 = vld [vmem:[#allocation2 + $0x788] sm:$0xff]
    %v1976 = vld [vmem:[#allocation2 + $0x790] sm:$0xff]
    %v1977 = vld [vmem:[#allocation2 + $0x798] sm:$0xff]
    %v1978 = vld [vmem:[#allocation2 + $0x7a0] sm:$0xff]
    %v1979 = vld [vmem:[#allocation2 + $0x7a8] sm:$0xff]
    %v1980 = vld [vmem:[#allocation2 + $0x7b0] sm:$0xff]
    %v1981 = vld [vmem:[#allocation2 + $0x7b8] sm:$0xff]
    %v1982 = vld [vmem:[#allocation2 + $0x7c0] sm:$0xff]
    %v1983 = vld [vmem:[#allocation2 + $0x7c8] sm:$0xff]
    %v1984 = vld [vmem:[#allocation2 + $0x7d0] sm:$0xff]
    %v1985 = vld [vmem:[#allocation2 + $0x7d8] sm:$0xff]
    %v1986 = vld [vmem:[#allocation2 + $0x7e0] sm:$0xff]
    %v1987 = vld [vmem:[#allocation2 + $0x7e8] sm:$0xff]
    %v1988 = vld [vmem:[#allocation2 + $0x7f0] sm:$0xff]
    %v1989 = vld [vmem:[#allocation2 + $0x7f8] sm:$0xff]
    %1990 = vmatprep.subr.bf16.mxu0 %v1735
    %1991 = vmatpush1.bf16.msra.mxu0 %v1734
    %1992 = vmatprep.subr.bf16.mxu0 %v1743
    %1993 = vmatpush1.bf16.msra.mxu0 %v1742
    %1994 = vmatprep.subr.bf16.mxu0 %v1751
    %1995 = vmatpush1.bf16.msra.mxu0 %v1750
    %1996 = vmatprep.subr.bf16.mxu0 %v1759
    %1997 = vmatpush1.bf16.msra.mxu0 %v1758
    %1998 = vmatprep.subr.bf16.mxu0 %v1767
    %1999 = vmatpush1.bf16.msra.mxu0 %v1766
    %2000 = vmatprep.subr.bf16.mxu0 %v1775
    %2001 = vmatpush1.bf16.msra.mxu0 %v1774
    %2002 = vmatprep.subr.bf16.mxu0 %v1783
    %2003 = vmatpush1.bf16.msra.mxu0 %v1782
    %2004 = vmatprep.subr.bf16.mxu0 %v1791
    %2005 = vmatpush1.bf16.msra.mxu0 %v1790
    %2006 = vmatprep.subr.bf16.mxu0 %v1799
    %2007 = vmatpush1.bf16.msra.mxu0 %v1798
    %2008 = vmatprep.subr.bf16.mxu0 %v1807
    %2009 = vmatpush1.bf16.msra.mxu0 %v1806
    %2010 = vmatprep.subr.bf16.mxu0 %v1815
    %2011 = vmatpush1.bf16.msra.mxu0 %v1814
    %2012 = vmatprep.subr.bf16.mxu0 %v1823
    %2013 = vmatpush1.bf16.msra.mxu0 %v1822
    %2014 = vmatprep.subr.bf16.mxu0 %v1831
    %2015 = vmatpush1.bf16.msra.mxu0 %v1830
    %2016 = vmatprep.subr.bf16.mxu0 %v1839
    %2017 = vmatpush1.bf16.msra.mxu0 %v1838
    %2018 = vmatprep.subr.bf16.mxu0 %v1847
    %2019 = vmatpush1.bf16.msra.mxu0 %v1846
    %2020 = vmatprep.subr.bf16.mxu0 %v1855
    %2021 = vmatpush1.bf16.msra.mxu0 %v1854
    %2022 = vmatprep.mubr.bf16.mxu0 %v1719
    %2023 = vmatmul.mubr.bf16.gmra.mrb[0].mxu0 %v1718
    %v2024 = vpop.f32.mrb[0].mxu0
    %v2025 = vadd.f32 0.0, %v2024
    %v2026 = vpop.f32.mrb[0].mxu0
    %v2027 = vadd.f32 0.0, %v2026
    %v2028 = vpop.f32.mrb[0].mxu0
    %v2029 = vadd.f32 0.0, %v2028
    %v2030 = vpop.f32.mrb[0].mxu0
    %v2031 = vadd.f32 0.0, %v2030
    %2032 = vmatprep.mubr.bf16.mxu0 %v1723
    %2033 = vmatmul.mubr.bf16.gmra.mrb[0].mxu0 %v1722
    %v2034 = vpop.f32.mrb[0].mxu0
    %v2035 = vadd.f32 0.0, %v2034
    %v2036 = vpop.f32.mrb[0].mxu0
    %v2037 = vadd.f32 0.0, %v2036
    %v2038 = vpop.f32.mrb[0].mxu0
    %v2039 = vadd.f32 0.0, %v2038
    %v2040 = vpop.f32.mrb[0].mxu0
    %v2041 = vadd.f32 0.0, %v2040
    %2042 = vmatprep.mubr.bf16.mxu0 %v1727
    %2043 = vmatmul.mubr.bf16.gmra.mrb[0].mxu0 %v1726
    %v2044 = vpop.f32.mrb[0].mxu0
    %v2045 = vadd.f32 0.0, %v2044
    %v2046 = vpop.f32.mrb[0].mxu0
    %v2047 = vadd.f32 0.0, %v2046
    %v2048 = vpop.f32.mrb[0].mxu0
    %v2049 = vadd.f32 0.0, %v2048
    %v2050 = vpop.f32.mrb[0].mxu0
    %v2051 = vadd.f32 0.0, %v2050
    %2052 = vmatprep.mubr.bf16.mxu0 %v1731
    %2053 = vmatmul.mubr.bf16.gmra.mrb[0].mxu0 %v1730
    %v2054 = vpop.f32.mrb[0].mxu0
    %v2055 = vadd.f32 0.0, %v2054
    %v2056 = vpop.f32.mrb[0].mxu0
    %v2057 = vadd.f32 0.0, %v2056
    %v2058 = vpop.f32.mrb[0].mxu0
    %v2059 = vadd.f32 0.0, %v2058
    %v2060 = vpop.f32.mrb[0].mxu0
    %v2061 = vadd.f32 0.0, %v2060
    %2062 = vdwg.mxu0
    %2063 = vmatprep.subr.bf16.mxu0 %v1863
    %2064 = vmatpush1.bf16.msra.mxu0 %v1862
    %2065 = vmatprep.subr.bf16.mxu0 %v1871
    %2066 = vmatpush1.bf16.msra.mxu0 %v1870
    %2067 = vmatprep.subr.bf16.mxu0 %v1879
    %2068 = vmatpush1.bf16.msra.mxu0 %v1878
    %2069 = vmatprep.subr.bf16.mxu0 %v1887
    %2070 = vmatpush1.bf16.msra.mxu0 %v1886
    %2071 = vmatprep.subr.bf16.mxu0 %v1895
    %2072 = vmatpush1.bf16.msra.mxu0 %v1894
    %2073 = vmatprep.subr.bf16.mxu0 %v1903
    %2074 = vmatpush1.bf16.msra.mxu0 %v1902
    %2075 = vmatprep.subr.bf16.mxu0 %v1911
    %2076 = vmatpush1.bf16.msra.mxu0 %v1910
    %2077 = vmatprep.subr.bf16.mxu0 %v1919
    %2078 = vmatpush1.bf16.msra.mxu0 %v1918
    %2079 = vmatprep.subr.bf16.mxu0 %v1927
    %2080 = vmatpush1.bf16.msra.mxu0 %v1926
    %2081 = vmatprep.subr.bf16.mxu0 %v1935
    %2082 = vmatpush1.bf16.msra.mxu0 %v1934
    %2083 = vmatprep.subr.bf16.mxu0 %v1943
    %2084 = vmatpush1.bf16.msra.mxu0 %v1942
    %2085 = vmatprep.subr.bf16.mxu0 %v1951
    %2086 = vmatpush1.bf16.msra.mxu0 %v1950
    %2087 = vmatprep.subr.bf16.mxu0 %v1959
    %2088 = vmatpush1.bf16.msra.mxu0 %v1958
    %2089 = vmatprep.subr.bf16.mxu0 %v1967
    %2090 = vmatpush1.bf16.msra.mxu0 %v1966
    %2091 = vmatprep.subr.bf16.mxu0 %v1975
    %2092 = vmatpush1.bf16.msra.mxu0 %v1974
    %2093 = vmatprep.subr.bf16.mxu0 %v1983
    %2094 = vmatpush1.bf16.msra.mxu0 %v1982
    %2095 = vmatprep.mubr.bf16.mxu0 %v1721
    %2096 = vmatmul.mubr.bf16.gmra.mrb[0].mxu0 %v1720
    %v2097 = vpop.f32.mrb[0].mxu0
    %v2098 = vadd.f32 %v2025, %v2097
    %v2099 = vpop.f32.mrb[0].mxu0
    %v2100 = vadd.f32 %v2027, %v2099
    %v2101 = vpop.f32.mrb[0].mxu0
    %v2102 = vadd.f32 %v2029, %v2101
    %v2103 = vpop.f32.mrb[0].mxu0
    %v2104 = vadd.f32 %v2031, %v2103
    %2105 = vmatprep.mubr.bf16.mxu0 %v1725
    %2106 = vmatmul.mubr.bf16.gmra.mrb[0].mxu0 %v1724
    %v2107 = vpop.f32.mrb[0].mxu0
    %v2108 = vadd.f32 %v2035, %v2107
    %v2109 = vpop.f32.mrb[0].mxu0
    %v2110 = vadd.f32 %v2037, %v2109
    %v2111 = vpop.f32.mrb[0].mxu0
    %v2112 = vadd.f32 %v2039, %v2111
    %v2113 = vpop.f32.mrb[0].mxu0
    %v2114 = vadd.f32 %v2041, %v2113
    %2115 = vmatprep.mubr.bf16.mxu0 %v1729
    %2116 = vmatmul.mubr.bf16.gmra.mrb[0].mxu0 %v1728
    %v2117 = vpop.f32.mrb[0].mxu0
    %v2118 = vadd.f32 %v2045, %v2117
    %v2119 = vpop.f32.mrb[0].mxu0
    %v2120 = vadd.f32 %v2047, %v2119
    %v2121 = vpop.f32.mrb[0].mxu0
    %v2122 = vadd.f32 %v2049, %v2121
    %v2123 = vpop.f32.mrb[0].mxu0
    %v2124 = vadd.f32 %v2051, %v2123
    %2125 = vmatprep.mubr.bf16.mxu0 %v1733
    %2126 = vmatmul.mubr.bf16.gmra.mrb[0].mxu0 %v1732
    %v2127 = vpop.f32.mrb[0].mxu0
    %v2128 = vadd.f32 %v2055, %v2127
    %v2129 = vpop.f32.mrb[0].mxu0
    %v2130 = vadd.f32 %v2057, %v2129
    %v2131 = vpop.f32.mrb[0].mxu0
    %v2132 = vadd.f32 %v2059, %v2131
    %v2133 = vpop.f32.mrb[0].mxu0
    %v2134 = vadd.f32 %v2061, %v2133
    %2135 = vdwg.mxu0
    %2136 = vmatprep.subr.bf16.mxu0 %v1737
    %2137 = vmatpush1.bf16.msra.mxu0 %v1736
    %2138 = vmatprep.subr.bf16.mxu0 %v1745
    %2139 = vmatpush1.bf16.msra.mxu0 %v1744
    %2140 = vmatprep.subr.bf16.mxu0 %v1753
    %2141 = vmatpush1.bf16.msra.mxu0 %v1752
    %2142 = vmatprep.subr.bf16.mxu0 %v1761
    %2143 = vmatpush1.bf16.msra.mxu0 %v1760
    %2144 = vmatprep.subr.bf16.mxu0 %v1769
    %2145 = vmatpush1.bf16.msra.mxu0 %v1768
    %2146 = vmatprep.subr.bf16.mxu0 %v1777
    %2147 = vmatpush1.bf16.msra.mxu0 %v1776
    %2148 = vmatprep.subr.bf16.mxu0 %v1785
    %2149 = vmatpush1.bf16.msra.mxu0 %v1784
    %2150 = vmatprep.subr.bf16.mxu0 %v1793
    %2151 = vmatpush1.bf16.msra.mxu0 %v1792
    %2152 = vmatprep.subr.bf16.mxu0 %v1801
    %2153 = vmatpush1.bf16.msra.mxu0 %v1800
    %2154 = vmatprep.subr.bf16.mxu0 %v1809
    %2155 = vmatpush1.bf16.msra.mxu0 %v1808
    %2156 = vmatprep.subr.bf16.mxu0 %v1817
    %2157 = vmatpush1.bf16.msra.mxu0 %v1816
    %2158 = vmatprep.subr.bf16.mxu0 %v1825
    %2159 = vmatpush1.bf16.msra.mxu0 %v1824
    %2160 = vmatprep.subr.bf16.mxu0 %v1833
    %2161 = vmatpush1.bf16.msra.mxu0 %v1832
    %2162 = vmatprep.subr.bf16.mxu0 %v1841
    %2163 = vmatpush1.bf16.msra.mxu0 %v1840
    %2164 = vmatprep.subr.bf16.mxu0 %v1849
    %2165 = vmatpush1.bf16.msra.mxu0 %v1848
    %2166 = vmatprep.subr.bf16.mxu0 %v1857
    %2167 = vmatpush1.bf16.msra.mxu0 %v1856
    %2168 = vmatprep.mubr.bf16.mxu0 %v1719
    %2169 = vmatmul.mubr.bf16.gmra.mrb[0].mxu0 %v1718
    %v2170 = vpop.f32.mrb[0].mxu0
    %v2171 = vadd.f32 0.0, %v2170
    %v2172 = vpop.f32.mrb[0].mxu0
    %v2173 = vadd.f32 0.0, %v2172
    %v2174 = vpop.f32.mrb[0].mxu0
    %v2175 = vadd.f32 0.0, %v2174
    %v2176 = vpop.f32.mrb[0].mxu0
    %v2177 = vadd.f32 0.0, %v2176
    %2178 = vmatprep.mubr.bf16.mxu0 %v1723
    %2179 = vmatmul.mubr.bf16.gmra.mrb[0].mxu0 %v1722
    %v2180 = vpop.f32.mrb[0].mxu0
    %v2181 = vadd.f32 0.0, %v2180
    %v2182 = vpop.f32.mrb[0].mxu0
    %v2183 = vadd.f32 0.0, %v2182
    %v2184 = vpop.f32.mrb[0].mxu0
    %v2185 = vadd.f32 0.0, %v2184
    %v2186 = vpop.f32.mrb[0].mxu0
    %v2187 = vadd.f32 0.0, %v2186
    %2188 = vmatprep.mubr.bf16.mxu0 %v1727
    %2189 = vmatmul.mubr.bf16.gmra.mrb[0].mxu0 %v1726
    %v2190 = vpop.f32.mrb[0].mxu0
    %v2191 = vadd.f32 0.0, %v2190
    %v2192 = vpop.f32.mrb[0].mxu0
    %v2193 = vadd.f32 0.0, %v2192
    %v2194 = vpop.f32.mrb[0].mxu0
    %v2195 = vadd.f32 0.0, %v2194
    %v2196 = vpop.f32.mrb[0].mxu0
    %v2197 = vadd.f32 0.0, %v2196
    %2198 = vmatprep.mubr.bf16.mxu0 %v1731
    %2199 = vmatmul.mubr.bf16.gmra.mrb[0].mxu0 %v1730
    %v2200 = vpop.f32.mrb[0].mxu0
    %v2201 = vadd.f32 0.0, %v2200
    %v2202 = vpop.f32.mrb[0].mxu0
    %v2203 = vadd.f32 0.0, %v2202
    %v2204 = vpop.f32.mrb[0].mxu0
    %v2205 = vadd.f32 0.0, %v2204
    %v2206 = vpop.f32.mrb[0].mxu0
    %v2207 = vadd.f32 0.0, %v2206
    %2208 = vdwg.mxu0
    %2209 = vmatprep.subr.bf16.mxu0 %v1865
    %2210 = vmatpush1.bf16.msra.mxu0 %v1864
    %2211 = vmatprep.subr.bf16.mxu0 %v1873
    %2212 = vmatpush1.bf16.msra.mxu0 %v1872
    %2213 = vmatprep.subr.bf16.mxu0 %v1881
    %2214 = vmatpush1.bf16.msra.mxu0 %v1880
    %2215 = vmatprep.subr.bf16.mxu0 %v1889
    %2216 = vmatpush1.bf16.msra.mxu0 %v1888
    %2217 = vmatprep.subr.bf16.mxu0 %v1897
    %2218 = vmatpush1.bf16.msra.mxu0 %v1896
    %2219 = vmatprep.subr.bf16.mxu0 %v1905
    %2220 = vmatpush1.bf16.msra.mxu0 %v1904
    %2221 = vmatprep.subr.bf16.mxu0 %v1913
    %2222 = vmatpush1.bf16.msra.mxu0 %v1912
    %2223 = vmatprep.subr.bf16.mxu0 %v1921
    %2224 = vmatpush1.bf16.msra.mxu0 %v1920
    %2225 = vmatprep.subr.bf16.mxu0 %v1929
    %2226 = vmatpush1.bf16.msra.mxu0 %v1928
    %2227 = vmatprep.subr.bf16.mxu0 %v1937
    %2228 = vmatpush1.bf16.msra.mxu0 %v1936
    %2229 = vmatprep.subr.bf16.mxu0 %v1945
    %2230 = vmatpush1.bf16.msra.mxu0 %v1944
    %2231 = vmatprep.subr.bf16.mxu0 %v1953
    %2232 = vmatpush1.bf16.msra.mxu0 %v1952
    %2233 = vmatprep.subr.bf16.mxu0 %v1961
    %2234 = vmatpush1.bf16.msra.mxu0 %v1960
    %2235 = vmatprep.subr.bf16.mxu0 %v1969
    %2236 = vmatpush1.bf16.msra.mxu0 %v1968
    %2237 = vmatprep.subr.bf16.mxu0 %v1977
    %2238 = vmatpush1.bf16.msra.mxu0 %v1976
    %2239 = vmatprep.subr.bf16.mxu0 %v1985
    %2240 = vmatpush1.bf16.msra.mxu0 %v1984
    %2241 = vmatprep.mubr.bf16.mxu0 %v1721
    %2242 = vmatmul.mubr.bf16.gmra.mrb[0].mxu0 %v1720
    %v2243 = vpop.f32.mrb[0].mxu0
    %v2244 = vadd.f32 %v2171, %v2243
    %v2245 = vpop.f32.mrb[0].mxu0
    %v2246 = vadd.f32 %v2173, %v2245
    %v2247 = vpop.f32.mrb[0].mxu0
    %v2248 = vadd.f32 %v2175, %v2247
    %v2249 = vpop.f32.mrb[0].mxu0
    %v2250 = vadd.f32 %v2177, %v2249
    %2251 = vmatprep.mubr.bf16.mxu0 %v1725
    %2252 = vmatmul.mubr.bf16.gmra.mrb[0].mxu0 %v1724
    %v2253 = vpop.f32.mrb[0].mxu0
    %v2254 = vadd.f32 %v2181, %v2253
    %v2255 = vpop.f32.mrb[0].mxu0
    %v2256 = vadd.f32 %v2183, %v2255
    %v2257 = vpop.f32.mrb[0].mxu0
    %v2258 = vadd.f32 %v2185, %v2257
    %v2259 = vpop.f32.mrb[0].mxu0
    %v2260 = vadd.f32 %v2187, %v2259
    %2261 = vmatprep.mubr.bf16.mxu0 %v1729
    %2262 = vmatmul.mubr.bf16.gmra.mrb[0].mxu0 %v1728
    %v2263 = vpop.f32.mrb[0].mxu0
    %v2264 = vadd.f32 %v2191, %v2263
    %v2265 = vpop.f32.mrb[0].mxu0
    %v2266 = vadd.f32 %v2193, %v2265
    %v2267 = vpop.f32.mrb[0].mxu0
    %v2268 = vadd.f32 %v2195, %v2267
    %v2269 = vpop.f32.mrb[0].mxu0
    %v2270 = vadd.f32 %v2197, %v2269
    %2271 = vmatprep.mubr.bf16.mxu0 %v1733
    %2272 = vmatmul.mubr.bf16.gmra.mrb[0].mxu0 %v1732
    %v2273 = vpop.f32.mrb[0].mxu0
    %v2274 = vadd.f32 %v2201, %v2273
    %v2275 = vpop.f32.mrb[0].mxu0
    %v2276 = vadd.f32 %v2203, %v2275
    %v2277 = vpop.f32.mrb[0].mxu0
    %v2278 = vadd.f32 %v2205, %v2277
    %v2279 = vpop.f32.mrb[0].mxu0
    %v2280 = vadd.f32 %v2207, %v2279
    %2281 = vdwg.mxu0
    %2282 = vmatprep.subr.bf16.mxu0 %v1739
    %2283 = vmatpush1.bf16.msra.mxu0 %v1738
    %2284 = vmatprep.subr.bf16.mxu0 %v1747
    %2285 = vmatpush1.bf16.msra.mxu0 %v1746
    %2286 = vmatprep.subr.bf16.mxu0 %v1755
    %2287 = vmatpush1.bf16.msra.mxu0 %v1754
    %2288 = vmatprep.subr.bf16.mxu0 %v1763
    %2289 = vmatpush1.bf16.msra.mxu0 %v1762
    %2290 = vmatprep.subr.bf16.mxu0 %v1771
    %2291 = vmatpush1.bf16.msra.mxu0 %v1770
    %2292 = vmatprep.subr.bf16.mxu0 %v1779
    %2293 = vmatpush1.bf16.msra.mxu0 %v1778
    %2294 = vmatprep.subr.bf16.mxu0 %v1787
    %2295 = vmatpush1.bf16.msra.mxu0 %v1786
    %2296 = vmatprep.subr.bf16.mxu0 %v1795
    %2297 = vmatpush1.bf16.msra.mxu0 %v1794
    %2298 = vmatprep.subr.bf16.mxu0 %v1803
    %2299 = vmatpush1.bf16.msra.mxu0 %v1802
    %2300 = vmatprep.subr.bf16.mxu0 %v1811
    %2301 = vmatpush1.bf16.msra.mxu0 %v1810
    %2302 = vmatprep.subr.bf16.mxu0 %v1819
    %2303 = vmatpush1.bf16.msra.mxu0 %v1818
    %2304 = vmatprep.subr.bf16.mxu0 %v1827
    %2305 = vmatpush1.bf16.msra.mxu0 %v1826
    %2306 = vmatprep.subr.bf16.mxu0 %v1835
    %2307 = vmatpush1.bf16.msra.mxu0 %v1834
    %2308 = vmatprep.subr.bf16.mxu0 %v1843
    %2309 = vmatpush1.bf16.msra.mxu0 %v1842
    %2310 = vmatprep.subr.bf16.mxu0 %v1851
    %2311 = vmatpush1.bf16.msra.mxu0 %v1850
    %2312 = vmatprep.subr.bf16.mxu0 %v1859
    %2313 = vmatpush1.bf16.msra.mxu0 %v1858
    %2314 = vmatprep.mubr.bf16.mxu0 %v1719
    %2315 = vmatmul.mubr.bf16.gmra.mrb[0].mxu0 %v1718
    %v2316 = vpop.f32.mrb[0].mxu0
    %v2317 = vadd.f32 0.0, %v2316
    %v2318 = vpop.f32.mrb[0].mxu0
    %v2319 = vadd.f32 0.0, %v2318
    %v2320 = vpop.f32.mrb[0].mxu0
    %v2321 = vadd.f32 0.0, %v2320
    %v2322 = vpop.f32.mrb[0].mxu0
    %v2323 = vadd.f32 0.0, %v2322
    %2324 = vmatprep.mubr.bf16.mxu0 %v1723
    %2325 = vmatmul.mubr.bf16.gmra.mrb[0].mxu0 %v1722
    %v2326 = vpop.f32.mrb[0].mxu0
    %v2327 = vadd.f32 0.0, %v2326
    %v2328 = vpop.f32.mrb[0].mxu0
    %v2329 = vadd.f32 0.0, %v2328
    %v2330 = vpop.f32.mrb[0].mxu0
    %v2331 = vadd.f32 0.0, %v2330
    %v2332 = vpop.f32.mrb[0].mxu0
    %v2333 = vadd.f32 0.0, %v2332
    %2334 = vmatprep.mubr.bf16.mxu0 %v1727
    %2335 = vmatmul.mubr.bf16.gmra.mrb[0].mxu0 %v1726
    %v2336 = vpop.f32.mrb[0].mxu0
    %v2337 = vadd.f32 0.0, %v2336
    %v2338 = vpop.f32.mrb[0].mxu0
    %v2339 = vadd.f32 0.0, %v2338
    %v2340 = vpop.f32.mrb[0].mxu0
    %v2341 = vadd.f32 0.0, %v2340
    %v2342 = vpop.f32.mrb[0].mxu0
    %v2343 = vadd.f32 0.0, %v2342
    %2344 = vmatprep.mubr.bf16.mxu0 %v1731
    %2345 = vmatmul.mubr.bf16.gmra.mrb[0].mxu0 %v1730
    %v2346 = vpop.f32.mrb[0].mxu0
    %v2347 = vadd.f32 0.0, %v2346
    %v2348 = vpop.f32.mrb[0].mxu0
    %v2349 = vadd.f32 0.0, %v2348
    %v2350 = vpop.f32.mrb[0].mxu0
    %v2351 = vadd.f32 0.0, %v2350
    %v2352 = vpop.f32.mrb[0].mxu0
    %v2353 = vadd.f32 0.0, %v2352
    %2354 = vdwg.mxu0
    %2355 = vmatprep.subr.bf16.mxu0 %v1867
    %2356 = vmatpush1.bf16.msra.mxu0 %v1866
    %2357 = vmatprep.subr.bf16.mxu0 %v1875
    %2358 = vmatpush1.bf16.msra.mxu0 %v1874
    %2359 = vmatprep.subr.bf16.mxu0 %v1883
    %2360 = vmatpush1.bf16.msra.mxu0 %v1882
    %2361 = vmatprep.subr.bf16.mxu0 %v1891
    %2362 = vmatpush1.bf16.msra.mxu0 %v1890
    %2363 = vmatprep.subr.bf16.mxu0 %v1899
    %2364 = vmatpush1.bf16.msra.mxu0 %v1898
    %2365 = vmatprep.subr.bf16.mxu0 %v1907
    %2366 = vmatpush1.bf16.msra.mxu0 %v1906
    %2367 = vmatprep.subr.bf16.mxu0 %v1915
    %2368 = vmatpush1.bf16.msra.mxu0 %v1914
    %2369 = vmatprep.subr.bf16.mxu0 %v1923
    %2370 = vmatpush1.bf16.msra.mxu0 %v1922
    %2371 = vmatprep.subr.bf16.mxu0 %v1931
    %2372 = vmatpush1.bf16.msra.mxu0 %v1930
    %2373 = vmatprep.subr.bf16.mxu0 %v1939
    %2374 = vmatpush1.bf16.msra.mxu0 %v1938
    %2375 = vmatprep.subr.bf16.mxu0 %v1947
    %2376 = vmatpush1.bf16.msra.mxu0 %v1946
    %2377 = vmatprep.subr.bf16.mxu0 %v1955
    %2378 = vmatpush1.bf16.msra.mxu0 %v1954
    %2379 = vmatprep.subr.bf16.mxu0 %v1963
    %2380 = vmatpush1.bf16.msra.mxu0 %v1962
    %2381 = vmatprep.subr.bf16.mxu0 %v1971
    %2382 = vmatpush1.bf16.msra.mxu0 %v1970
    %2383 = vmatprep.subr.bf16.mxu0 %v1979
    %2384 = vmatpush1.bf16.msra.mxu0 %v1978
    %2385 = vmatprep.subr.bf16.mxu0 %v1987
    %2386 = vmatpush1.bf16.msra.mxu0 %v1986
    %2387 = vmatprep.mubr.bf16.mxu0 %v1721
    %2388 = vmatmul.mubr.bf16.gmra.mrb[0].mxu0 %v1720
    %v2389 = vpop.f32.mrb[0].mxu0
    %v2390 = vadd.f32 %v2317, %v2389
    %v2391 = vpop.f32.mrb[0].mxu0
    %v2392 = vadd.f32 %v2319, %v2391
    %v2393 = vpop.f32.mrb[0].mxu0
    %v2394 = vadd.f32 %v2321, %v2393
    %v2395 = vpop.f32.mrb[0].mxu0
    %v2396 = vadd.f32 %v2323, %v2395
    %2397 = vmatprep.mubr.bf16.mxu0 %v1725
    %2398 = vmatmul.mubr.bf16.gmra.mrb[0].mxu0 %v1724
    %v2399 = vpop.f32.mrb[0].mxu0
    %v2400 = vadd.f32 %v2327, %v2399
    %v2401 = vpop.f32.mrb[0].mxu0
    %v2402 = vadd.f32 %v2329, %v2401
    %v2403 = vpop.f32.mrb[0].mxu0
    %v2404 = vadd.f32 %v2331, %v2403
    %v2405 = vpop.f32.mrb[0].mxu0
    %v2406 = vadd.f32 %v2333, %v2405
    %2407 = vmatprep.mubr.bf16.mxu0 %v1729
    %2408 = vmatmul.mubr.bf16.gmra.mrb[0].mxu0 %v1728
    %v2409 = vpop.f32.mrb[0].mxu0
    %v2410 = vadd.f32 %v2337, %v2409
    %v2411 = vpop.f32.mrb[0].mxu0
    %v2412 = vadd.f32 %v2339, %v2411
    %v2413 = vpop.f32.mrb[0].mxu0
    %v2414 = vadd.f32 %v2341, %v2413
    %v2415 = vpop.f32.mrb[0].mxu0
    %v2416 = vadd.f32 %v2343, %v2415
    %2417 = vmatprep.mubr.bf16.mxu0 %v1733
    %2418 = vmatmul.mubr.bf16.gmra.mrb[0].mxu0 %v1732
    %v2419 = vpop.f32.mrb[0].mxu0
    %v2420 = vadd.f32 %v2347, %v2419
    %v2421 = vpop.f32.mrb[0].mxu0
    %v2422 = vadd.f32 %v2349, %v2421
    %v2423 = vpop.f32.mrb[0].mxu0
    %v2424 = vadd.f32 %v2351, %v2423
    %v2425 = vpop.f32.mrb[0].mxu0
    %v2426 = vadd.f32 %v2353, %v2425
    %2427 = vdwg.mxu0
    %2428 = vmatprep.subr.bf16.mxu0 %v1741
    %2429 = vmatpush1.bf16.msra.mxu0 %v1740
    %2430 = vmatprep.subr.bf16.mxu0 %v1749
    %2431 = vmatpush1.bf16.msra.mxu0 %v1748
    %2432 = vmatprep.subr.bf16.mxu0 %v1757
    %2433 = vmatpush1.bf16.msra.mxu0 %v1756
    %2434 = vmatprep.subr.bf16.mxu0 %v1765
    %2435 = vmatpush1.bf16.msra.mxu0 %v1764
    %2436 = vmatprep.subr.bf16.mxu0 %v1773
    %2437 = vmatpush1.bf16.msra.mxu0 %v1772
    %2438 = vmatprep.subr.bf16.mxu0 %v1781
    %2439 = vmatpush1.bf16.msra.mxu0 %v1780
    %2440 = vmatprep.subr.bf16.mxu0 %v1789
    %2441 = vmatpush1.bf16.msra.mxu0 %v1788
    %2442 = vmatprep.subr.bf16.mxu0 %v1797
    %2443 = vmatpush1.bf16.msra.mxu0 %v1796
    %2444 = vmatprep.subr.bf16.mxu0 %v1805
    %2445 = vmatpush1.bf16.msra.mxu0 %v1804
    %2446 = vmatprep.subr.bf16.mxu0 %v1813
    %2447 = vmatpush1.bf16.msra.mxu0 %v1812
    %2448 = vmatprep.subr.bf16.mxu0 %v1821
    %2449 = vmatpush1.bf16.msra.mxu0 %v1820
    %2450 = vmatprep.subr.bf16.mxu0 %v1829
    %2451 = vmatpush1.bf16.msra.mxu0 %v1828
    %2452 = vmatprep.subr.bf16.mxu0 %v1837
    %2453 = vmatpush1.bf16.msra.mxu0 %v1836
    %2454 = vmatprep.subr.bf16.mxu0 %v1845
    %2455 = vmatpush1.bf16.msra.mxu0 %v1844
    %2456 = vmatprep.subr.bf16.mxu0 %v1853
    %2457 = vmatpush1.bf16.msra.mxu0 %v1852
    %2458 = vmatprep.subr.bf16.mxu0 %v1861
    %2459 = vmatpush1.bf16.msra.mxu0 %v1860
    %2460 = vmatprep.mubr.bf16.mxu0 %v1719
    %2461 = vmatmul.mubr.bf16.gmra.mrb[0].mxu0 %v1718
    %v2462 = vpop.f32.mrb[0].mxu0
    %v2463 = vadd.f32 0.0, %v2462
    %v2464 = vpop.f32.mrb[0].mxu0
    %v2465 = vadd.f32 0.0, %v2464
    %v2466 = vpop.f32.mrb[0].mxu0
    %v2467 = vadd.f32 0.0, %v2466
    %v2468 = vpop.f32.mrb[0].mxu0
    %v2469 = vadd.f32 0.0, %v2468
    %2470 = vmatprep.mubr.bf16.mxu0 %v1723
    %2471 = vmatmul.mubr.bf16.gmra.mrb[0].mxu0 %v1722
    %v2472 = vpop.f32.mrb[0].mxu0
    %v2473 = vadd.f32 0.0, %v2472
    %v2474 = vpop.f32.mrb[0].mxu0
    %v2475 = vadd.f32 0.0, %v2474
    %v2476 = vpop.f32.mrb[0].mxu0
    %v2477 = vadd.f32 0.0, %v2476
    %v2478 = vpop.f32.mrb[0].mxu0
    %v2479 = vadd.f32 0.0, %v2478
    %2480 = vmatprep.mubr.bf16.mxu0 %v1727
    %2481 = vmatmul.mubr.bf16.gmra.mrb[0].mxu0 %v1726
    %v2482 = vpop.f32.mrb[0].mxu0
    %v2483 = vadd.f32 0.0, %v2482
    %v2484 = vpop.f32.mrb[0].mxu0
    %v2485 = vadd.f32 0.0, %v2484
    %v2486 = vpop.f32.mrb[0].mxu0
    %v2487 = vadd.f32 0.0, %v2486
    %v2488 = vpop.f32.mrb[0].mxu0
    %v2489 = vadd.f32 0.0, %v2488
    %2490 = vmatprep.mubr.bf16.mxu0 %v1731
    %2491 = vmatmul.mubr.bf16.gmra.mrb[0].mxu0 %v1730
    %v2492 = vpop.f32.mrb[0].mxu0
    %v2493 = vadd.f32 0.0, %v2492
    %v2494 = vpop.f32.mrb[0].mxu0
    %v2495 = vadd.f32 0.0, %v2494
    %v2496 = vpop.f32.mrb[0].mxu0
    %v2497 = vadd.f32 0.0, %v2496
    %v2498 = vpop.f32.mrb[0].mxu0
    %v2499 = vadd.f32 0.0, %v2498
    %2500 = vdwg.mxu0
    %2501 = vmatprep.subr.bf16.mxu0 %v1869
    %2502 = vmatpush1.bf16.msra.mxu0 %v1868
    %2503 = vmatprep.subr.bf16.mxu0 %v1877
    %2504 = vmatpush1.bf16.msra.mxu0 %v1876
    %2505 = vmatprep.subr.bf16.mxu0 %v1885
    %2506 = vmatpush1.bf16.msra.mxu0 %v1884
    %2507 = vmatprep.subr.bf16.mxu0 %v1893
    %2508 = vmatpush1.bf16.msra.mxu0 %v1892
    %2509 = vmatprep.subr.bf16.mxu0 %v1901
    %2510 = vmatpush1.bf16.msra.mxu0 %v1900
    %2511 = vmatprep.subr.bf16.mxu0 %v1909
    %2512 = vmatpush1.bf16.msra.mxu0 %v1908
    %2513 = vmatprep.subr.bf16.mxu0 %v1917
    %2514 = vmatpush1.bf16.msra.mxu0 %v1916
    %2515 = vmatprep.subr.bf16.mxu0 %v1925
    %2516 = vmatpush1.bf16.msra.mxu0 %v1924
    %2517 = vmatprep.subr.bf16.mxu0 %v1933
    %2518 = vmatpush1.bf16.msra.mxu0 %v1932
    %2519 = vmatprep.subr.bf16.mxu0 %v1941
    %2520 = vmatpush1.bf16.msra.mxu0 %v1940
    %2521 = vmatprep.subr.bf16.mxu0 %v1949
    %2522 = vmatpush1.bf16.msra.mxu0 %v1948
    %2523 = vmatprep.subr.bf16.mxu0 %v1957
    %2524 = vmatpush1.bf16.msra.mxu0 %v1956
    %2525 = vmatprep.subr.bf16.mxu0 %v1965
    %2526 = vmatpush1.bf16.msra.mxu0 %v1964
    %2527 = vmatprep.subr.bf16.mxu0 %v1973
    %2528 = vmatpush1.bf16.msra.mxu0 %v1972
    %2529 = vmatprep.subr.bf16.mxu0 %v1981
    %2530 = vmatpush1.bf16.msra.mxu0 %v1980
    %2531 = vmatprep.subr.bf16.mxu0 %v1989
    %2532 = vmatpush1.bf16.msra.mxu0 %v1988
    %2533 = vmatprep.mubr.bf16.mxu0 %v1721
    %2534 = vmatmul.mubr.bf16.gmra.mrb[0].mxu0 %v1720
    %v2535 = vpop.f32.mrb[0].mxu0
    %v2536 = vadd.f32 %v2463, %v2535
    %v2537 = vpop.f32.mrb[0].mxu0
    %v2538 = vadd.f32 %v2465, %v2537
    %v2539 = vpop.f32.mrb[0].mxu0
    %v2540 = vadd.f32 %v2467, %v2539
    %v2541 = vpop.f32.mrb[0].mxu0
    %v2542 = vadd.f32 %v2469, %v2541
    %2543 = vmatprep.mubr.bf16.mxu0 %v1725
    %2544 = vmatmul.mubr.bf16.gmra.mrb[0].mxu0 %v1724
    %v2545 = vpop.f32.mrb[0].mxu0
    %v2546 = vadd.f32 %v2473, %v2545
    %v2547 = vpop.f32.mrb[0].mxu0
    %v2548 = vadd.f32 %v2475, %v2547
    %v2549 = vpop.f32.mrb[0].mxu0
    %v2550 = vadd.f32 %v2477, %v2549
    %v2551 = vpop.f32.mrb[0].mxu0
    %v2552 = vadd.f32 %v2479, %v2551
    %2553 = vmatprep.mubr.bf16.mxu0 %v1729
    %2554 = vmatmul.mubr.bf16.gmra.mrb[0].mxu0 %v1728
    %v2555 = vpop.f32.mrb[0].mxu0
    %v2556 = vadd.f32 %v2483, %v2555
    %v2557 = vpop.f32.mrb[0].mxu0
    %v2558 = vadd.f32 %v2485, %v2557
    %v2559 = vpop.f32.mrb[0].mxu0
    %v2560 = vadd.f32 %v2487, %v2559
    %v2561 = vpop.f32.mrb[0].mxu0
    %v2562 = vadd.f32 %v2489, %v2561
    %2563 = vmatprep.mubr.bf16.mxu0 %v1733
    %2564 = vmatmul.mubr.bf16.gmra.mrb[0].mxu0 %v1732
    %v2565 = vpop.f32.mrb[0].mxu0
    %v2566 = vadd.f32 %v2493, %v2565
    %v2567 = vpop.f32.mrb[0].mxu0
    %v2568 = vadd.f32 %v2495, %v2567
    %v2569 = vpop.f32.mrb[0].mxu0
    %v2570 = vadd.f32 %v2497, %v2569
    %v2571 = vpop.f32.mrb[0].mxu0
    %v2572 = vadd.f32 %v2499, %v2571
    %2573 = vdwg.mxu0
    %v2574 = vld [vmem:[#allocation19] sm:$0xff]
    %v2575 = vld [vmem:[#allocation20] sm:$0xff]
    %v2576 = vadd.f32 %v2098, %v2102
    %v2577 = vadd.f32 %v2576, %v2108
    %v2578 = vadd.f32 %v2577, %v2112
    %v2579 = vadd.f32 %v2578, %v2118
    %v2580 = vadd.f32 %v2579, %v2122
    %v2581 = vadd.f32 %v2580, %v2128
    %v2582 = vadd.f32 %v2581, %v2132
    %v2583 = vrot.slane %v2582, 4
    %v2584 = vadd.f32 %v2582, %v2583
    %v2585 = vrot.slane %v2584, 2
    %v2586 = vadd.f32 %v2584, %v2585
    %v2587 = vrot.slane %v2586, 1
    %v2588 = vadd.f32 %v2586, %v2587
    %v2589 = vadd.f32 %v2100, %v2104
    %v2590 = vadd.f32 %v2589, %v2110
    %v2591 = vadd.f32 %v2590, %v2114
    %v2592 = vadd.f32 %v2591, %v2120
    %v2593 = vadd.f32 %v2592, %v2124
    %v2594 = vadd.f32 %v2593, %v2130
    %v2595 = vadd.f32 %v2594, %v2134
    %v2596 = vrot.slane %v2595, 4
    %v2597 = vadd.f32 %v2595, %v2596
    %v2598 = vrot.slane %v2597, 2
    %v2599 = vadd.f32 %v2597, %v2598
    %v2600 = vrot.slane %v2599, 1
    %v2601 = vadd.f32 %v2599, %v2600
    %v2602 = vadd.f32 %v2244, %v2248
    %v2603 = vadd.f32 %v2602, %v2254
    %v2604 = vadd.f32 %v2603, %v2258
    %v2605 = vadd.f32 %v2604, %v2264
    %v2606 = vadd.f32 %v2605, %v2268
    %v2607 = vadd.f32 %v2606, %v2274
    %v2608 = vadd.f32 %v2607, %v2278
    %v2609 = vrot.slane %v2608, 4
    %v2610 = vadd.f32 %v2608, %v2609
    %v2611 = vrot.slane %v2610, 2
    %v2612 = vadd.f32 %v2610, %v2611
    %v2613 = vrot.slane %v2612, 1
    %v2614 = vadd.f32 %v2612, %v2613
    %v2615 = vadd.f32 %v2246, %v2250
    %v2616 = vadd.f32 %v2615, %v2256
    %v2617 = vadd.f32 %v2616, %v2260
    %v2618 = vadd.f32 %v2617, %v2266
    %v2619 = vadd.f32 %v2618, %v2270
    %v2620 = vadd.f32 %v2619, %v2276
    %v2621 = vadd.f32 %v2620, %v2280
    %v2622 = vrot.slane %v2621, 4
    %v2623 = vadd.f32 %v2621, %v2622
    %v2624 = vrot.slane %v2623, 2
    %v2625 = vadd.f32 %v2623, %v2624
    %v2626 = vrot.slane %v2625, 1
    %v2627 = vadd.f32 %v2625, %v2626
    %v2628 = vadd.f32 %v2390, %v2394
    %v2629 = vadd.f32 %v2628, %v2400
    %v2630 = vadd.f32 %v2629, %v2404
    %v2631 = vadd.f32 %v2630, %v2410
    %v2632 = vadd.f32 %v2631, %v2414
    %v2633 = vadd.f32 %v2632, %v2420
    %v2634 = vadd.f32 %v2633, %v2424
    %v2635 = vrot.slane %v2634, 4
    %v2636 = vadd.f32 %v2634, %v2635
    %v2637 = vrot.slane %v2636, 2
    %v2638 = vadd.f32 %v2636, %v2637
    %v2639 = vrot.slane %v2638, 1
    %v2640 = vadd.f32 %v2638, %v2639
    %v2641 = vadd.f32 %v2392, %v2396
    %v2642 = vadd.f32 %v2641, %v2402
    %v2643 = vadd.f32 %v2642, %v2406
    %v2644 = vadd.f32 %v2643, %v2412
    %v2645 = vadd.f32 %v2644, %v2416
    %v2646 = vadd.f32 %v2645, %v2422
    %v2647 = vadd.f32 %v2646, %v2426
    %v2648 = vrot.slane %v2647, 4
    %v2649 = vadd.f32 %v2647, %v2648
    %v2650 = vrot.slane %v2649, 2
    %v2651 = vadd.f32 %v2649, %v2650
    %v2652 = vrot.slane %v2651, 1
    %v2653 = vadd.f32 %v2651, %v2652
    %v2654 = vadd.f32 %v2536, %v2540
    %v2655 = vadd.f32 %v2654, %v2546
    %v2656 = vadd.f32 %v2655, %v2550
    %v2657 = vadd.f32 %v2656, %v2556
    %v2658 = vadd.f32 %v2657, %v2560
    %v2659 = vadd.f32 %v2658, %v2566
    %v2660 = vadd.f32 %v2659, %v2570
    %v2661 = vrot.slane %v2660, 4
    %v2662 = vadd.f32 %v2660, %v2661
    %v2663 = vrot.slane %v2662, 2
    %v2664 = vadd.f32 %v2662, %v2663
    %v2665 = vrot.slane %v2664, 1
    %v2666 = vadd.f32 %v2664, %v2665
    %v2667 = vadd.f32 %v2538, %v2542
    %v2668 = vadd.f32 %v2667, %v2548
    %v2669 = vadd.f32 %v2668, %v2552
    %v2670 = vadd.f32 %v2669, %v2558
    %v2671 = vadd.f32 %v2670, %v2562
    %v2672 = vadd.f32 %v2671, %v2568
    %v2673 = vadd.f32 %v2672, %v2572
    %v2674 = vrot.slane %v2673, 4
    %v2675 = vadd.f32 %v2673, %v2674
    %v2676 = vrot.slane %v2675, 2
    %v2677 = vadd.f32 %v2675, %v2676
    %v2678 = vrot.slane %v2677, 1
    %v2679 = vadd.f32 %v2677, %v2678
    %v2680 = vmul.f32 %v2588, 0.015625
    %v2681 = vmul.f32 %v2601, 0.015625
    %v2682 = vmul.f32 %v2614, 0.015625
    %v2683 = vmul.f32 %v2627, 0.015625
    %v2684 = vmul.f32 %v2640, 0.015625
    %v2685 = vmul.f32 %v2653, 0.015625
    %v2686 = vmul.f32 %v2666, 0.015625
    %v2687 = vmul.f32 %v2679, 0.015625
    %v2688 = vmul.f32 %v2098, %v2098
    %v2689 = vmul.f32 %v2100, %v2100
    %v2690 = vmul.f32 %v2244, %v2244
    %v2691 = vmul.f32 %v2246, %v2246
    %v2692 = vmul.f32 %v2390, %v2390
    %v2693 = vmul.f32 %v2392, %v2392
    %v2694 = vmul.f32 %v2536, %v2536
    %v2695 = vmul.f32 %v2538, %v2538
    %v2696 = vmul.f32 %v2102, %v2102
    %v2697 = vmul.f32 %v2104, %v2104
    %v2698 = vmul.f32 %v2248, %v2248
    %v2699 = vmul.f32 %v2250, %v2250
    %v2700 = vmul.f32 %v2394, %v2394
    %v2701 = vmul.f32 %v2396, %v2396
    %v2702 = vmul.f32 %v2540, %v2540
    %v2703 = vmul.f32 %v2542, %v2542
    %v2704 = vmul.f32 %v2108, %v2108
    %v2705 = vmul.f32 %v2110, %v2110
    %v2706 = vmul.f32 %v2254, %v2254
    %v2707 = vmul.f32 %v2256, %v2256
    %v2708 = vmul.f32 %v2400, %v2400
    %v2709 = vmul.f32 %v2402, %v2402
    %v2710 = vmul.f32 %v2546, %v2546
    %v2711 = vmul.f32 %v2548, %v2548
    %v2712 = vmul.f32 %v2112, %v2112
    %v2713 = vmul.f32 %v2114, %v2114
    %v2714 = vmul.f32 %v2258, %v2258
    %v2715 = vmul.f32 %v2260, %v2260
    %v2716 = vmul.f32 %v2404, %v2404
    %v2717 = vmul.f32 %v2406, %v2406
    %v2718 = vmul.f32 %v2550, %v2550
    %v2719 = vmul.f32 %v2552, %v2552
    %v2720 = vmul.f32 %v2118, %v2118
    %v2721 = vmul.f32 %v2120, %v2120
    %v2722 = vmul.f32 %v2264, %v2264
    %v2723 = vmul.f32 %v2266, %v2266
    %v2724 = vmul.f32 %v2410, %v2410
    %v2725 = vmul.f32 %v2412, %v2412
    %v2726 = vmul.f32 %v2556, %v2556
    %v2727 = vmul.f32 %v2558, %v2558
    %v2728 = vmul.f32 %v2122, %v2122
    %v2729 = vmul.f32 %v2124, %v2124
    %v2730 = vmul.f32 %v2268, %v2268
    %v2731 = vmul.f32 %v2270, %v2270
    %v2732 = vmul.f32 %v2414, %v2414
    %v2733 = vmul.f32 %v2416, %v2416
    %v2734 = vmul.f32 %v2560, %v2560
    %v2735 = vmul.f32 %v2562, %v2562
    %v2736 = vmul.f32 %v2128, %v2128
    %v2737 = vmul.f32 %v2130, %v2130
    %v2738 = vmul.f32 %v2274, %v2274
    %v2739 = vmul.f32 %v2276, %v2276
    %v2740 = vmul.f32 %v2420, %v2420
    %v2741 = vmul.f32 %v2422, %v2422
    %v2742 = vmul.f32 %v2566, %v2566
    %v2743 = vmul.f32 %v2568, %v2568
    %v2744 = vmul.f32 %v2132, %v2132
    %v2745 = vmul.f32 %v2134, %v2134
    %v2746 = vmul.f32 %v2278, %v2278
    %v2747 = vmul.f32 %v2280, %v2280
    %v2748 = vmul.f32 %v2424, %v2424
    %v2749 = vmul.f32 %v2426, %v2426
    %v2750 = vmul.f32 %v2570, %v2570
    %v2751 = vmul.f32 %v2572, %v2572
    %v2752 = vadd.f32 %v2688, %v2696
    %v2753 = vadd.f32 %v2752, %v2704
    %v2754 = vadd.f32 %v2753, %v2712
    %v2755 = vadd.f32 %v2754, %v2720
    %v2756 = vadd.f32 %v2755, %v2728
    %v2757 = vadd.f32 %v2756, %v2736
    %v2758 = vadd.f32 %v2757, %v2744
    %v2759 = vrot.slane %v2758, 4
    %v2760 = vadd.f32 %v2758, %v2759
    %v2761 = vrot.slane %v2760, 2
    %v2762 = vadd.f32 %v2760, %v2761
    %v2763 = vrot.slane %v2762, 1
    %v2764 = vadd.f32 %v2762, %v2763
    %v2765 = vadd.f32 %v2689, %v2697
    %v2766 = vadd.f32 %v2765, %v2705
    %v2767 = vadd.f32 %v2766, %v2713
    %v2768 = vadd.f32 %v2767, %v2721
    %v2769 = vadd.f32 %v2768, %v2729
    %v2770 = vadd.f32 %v2769, %v2737
    %v2771 = vadd.f32 %v2770, %v2745
    %v2772 = vrot.slane %v2771, 4
    %v2773 = vadd.f32 %v2771, %v2772
    %v2774 = vrot.slane %v2773, 2
    %v2775 = vadd.f32 %v2773, %v2774
    %v2776 = vrot.slane %v2775, 1
    %v2777 = vadd.f32 %v2775, %v2776
    %v2778 = vadd.f32 %v2690, %v2698
    %v2779 = vadd.f32 %v2778, %v2706
    %v2780 = vadd.f32 %v2779, %v2714
    %v2781 = vadd.f32 %v2780, %v2722
    %v2782 = vadd.f32 %v2781, %v2730
    %v2783 = vadd.f32 %v2782, %v2738
    %v2784 = vadd.f32 %v2783, %v2746
    %v2785 = vrot.slane %v2784, 4
    %v2786 = vadd.f32 %v2784, %v2785
    %v2787 = vrot.slane %v2786, 2
    %v2788 = vadd.f32 %v2786, %v2787
    %v2789 = vrot.slane %v2788, 1
    %v2790 = vadd.f32 %v2788, %v2789
    %v2791 = vadd.f32 %v2691, %v2699
    %v2792 = vadd.f32 %v2791, %v2707
    %v2793 = vadd.f32 %v2792, %v2715
    %v2794 = vadd.f32 %v2793, %v2723
    %v2795 = vadd.f32 %v2794, %v2731
    %v2796 = vadd.f32 %v2795, %v2739
    %v2797 = vadd.f32 %v2796, %v2747
    %v2798 = vrot.slane %v2797, 4
    %v2799 = vadd.f32 %v2797, %v2798
    %v2800 = vrot.slane %v2799, 2
    %v2801 = vadd.f32 %v2799, %v2800
    %v2802 = vrot.slane %v2801, 1
    %v2803 = vadd.f32 %v2801, %v2802
    %v2804 = vadd.f32 %v2692, %v2700
    %v2805 = vadd.f32 %v2804, %v2708
    %v2806 = vadd.f32 %v2805, %v2716
    %v2807 = vadd.f32 %v2806, %v2724
    %v2808 = vadd.f32 %v2807, %v2732
    %v2809 = vadd.f32 %v2808, %v2740
    %v2810 = vadd.f32 %v2809, %v2748
    %v2811 = vrot.slane %v2810, 4
    %v2812 = vadd.f32 %v2810, %v2811
    %v2813 = vrot.slane %v2812, 2
    %v2814 = vadd.f32 %v2812, %v2813
    %v2815 = vrot.slane %v2814, 1
    %v2816 = vadd.f32 %v2814, %v2815
    %v2817 = vadd.f32 %v2693, %v2701
    %v2818 = vadd.f32 %v2817, %v2709
    %v2819 = vadd.f32 %v2818, %v2717
    %v2820 = vadd.f32 %v2819, %v2725
    %v2821 = vadd.f32 %v2820, %v2733
    %v2822 = vadd.f32 %v2821, %v2741
    %v2823 = vadd.f32 %v2822, %v2749
    %v2824 = vrot.slane %v2823, 4
    %v2825 = vadd.f32 %v2823, %v2824
    %v2826 = vrot.slane %v2825, 2
    %v2827 = vadd.f32 %v2825, %v2826
    %v2828 = vrot.slane %v2827, 1
    %v2829 = vadd.f32 %v2827, %v2828
    %v2830 = vadd.f32 %v2694, %v2702
    %v2831 = vadd.f32 %v2830, %v2710
    %v2832 = vadd.f32 %v2831, %v2718
    %v2833 = vadd.f32 %v2832, %v2726
    %v2834 = vadd.f32 %v2833, %v2734
    %v2835 = vadd.f32 %v2834, %v2742
    %v2836 = vadd.f32 %v2835, %v2750
    %v2837 = vrot.slane %v2836, 4
    %v2838 = vadd.f32 %v2836, %v2837
    %v2839 = vrot.slane %v2838, 2
    %v2840 = vadd.f32 %v2838, %v2839
    %v2841 = vrot.slane %v2840, 1
    %v2842 = vadd.f32 %v2840, %v2841
    %v2843 = vadd.f32 %v2695, %v2703
    %v2844 = vadd.f32 %v2843, %v2711
    %v2845 = vadd.f32 %v2844, %v2719
    %v2846 = vadd.f32 %v2845, %v2727
    %v2847 = vadd.f32 %v2846, %v2735
    %v2848 = vadd.f32 %v2847, %v2743
    %v2849 = vadd.f32 %v2848, %v2751
    %v2850 = vrot.slane %v2849, 4
    %v2851 = vadd.f32 %v2849, %v2850
    %v2852 = vrot.slane %v2851, 2
    %v2853 = vadd.f32 %v2851, %v2852
    %v2854 = vrot.slane %v2853, 1
    %v2855 = vadd.f32 %v2853, %v2854
    %v2856 = vmul.f32 %v2764, 0.015625
    %v2857 = vmul.f32 %v2777, 0.015625
    %v2858 = vmul.f32 %v2790, 0.015625
    %v2859 = vmul.f32 %v2803, 0.015625
    %v2860 = vmul.f32 %v2816, 0.015625
    %v2861 = vmul.f32 %v2829, 0.015625
    %v2862 = vmul.f32 %v2842, 0.015625
    %v2863 = vmul.f32 %v2855, 0.015625
    %v2864 = vmul.f32 %v2680, %v2680
    %v2865 = vmul.f32 %v2681, %v2681
    %v2866 = vmul.f32 %v2682, %v2682
    %v2867 = vmul.f32 %v2683, %v2683
    %v2868 = vmul.f32 %v2684, %v2684
    %v2869 = vmul.f32 %v2685, %v2685
    %v2870 = vmul.f32 %v2686, %v2686
    %v2871 = vmul.f32 %v2687, %v2687
    %v2872 = vsub.f32 %v2856, %v2864
    %v2873 = vsub.f32 %v2857, %v2865
    %v2874 = vsub.f32 %v2858, %v2866
    %v2875 = vsub.f32 %v2859, %v2867
    %v2876 = vsub.f32 %v2860, %v2868
    %v2877 = vsub.f32 %v2861, %v2869
    %v2878 = vsub.f32 %v2862, %v2870
    %v2879 = vsub.f32 %v2863, %v2871
    %v2880 = vmax.f32 %v2872, 0.0
    %v2881 = vmax.f32 %v2873, 0.0
    %v2882 = vmax.f32 %v2874, 0.0
    %v2883 = vmax.f32 %v2875, 0.0
    %v2884 = vmax.f32 %v2876, 0.0
    %v2885 = vmax.f32 %v2877, 0.0
    %v2886 = vmax.f32 %v2878, 0.0
    %v2887 = vmax.f32 %v2879, 0.0
    %v2888 = vadd.f32 %v2880, 1e-05
    %v2889 = vadd.f32 %v2881, 1e-05
    %v2890 = vadd.f32 %v2882, 1e-05
    %v2891 = vadd.f32 %v2883, 1e-05
    %v2892 = vadd.f32 %v2884, 1e-05
    %v2893 = vadd.f32 %v2885, 1e-05
    %v2894 = vadd.f32 %v2886, 1e-05
    %v2895 = vadd.f32 %v2887, 1e-05
    %v2896 = vrsqrt.pop %v2888
    %v2897 = vrsqrt.pop %v2889
    %v2898 = vrsqrt.pop %v2890
    %v2899 = vrsqrt.pop %v2891
    %v2900 = vrsqrt.pop %v2892
    %v2901 = vrsqrt.pop %v2893
    %v2902 = vrsqrt.pop %v2894
    %v2903 = vrsqrt.pop %v2895
    %v2912 = vcombine.low %v2896, %v2897
    %v2913 = vcombine.low %v2898, %v2899
    %v2914 = vcombine.low %v2900, %v2901
    %v2915 = vcombine.low %v2902, %v2903
    %v2917 = vunpack.c.l.s4 1966171168
    %v2918 = vunpack.c.0.s8 %v2917
    %v2919 = vlaneseq
    %v2920 = vshrl.u32 %v2919, 7
    %v2921 = vsub.s32 %v2918, %v2920
    %v2922 = vrot.slane %v2912, %v2921
    %v2924 = vunpack.c.l.s4 1966171168
    %v2925 = vunpack.c.0.s8 %v2924
    %v2926 = vlaneseq
    %v2927 = vshrl.u32 %v2926, 7
    %v2928 = vsub.s32 %v2925, %v2927
    %v2929 = vrot.slane %v2913, %v2928
    %v2931 = vunpack.c.l.s4 1966171168
    %v2932 = vunpack.c.0.s8 %v2931
    %v2933 = vlaneseq
    %v2934 = vshrl.u32 %v2933, 7
    %v2935 = vsub.s32 %v2932, %v2934
    %v2936 = vrot.slane %v2914, %v2935
    %v2938 = vunpack.c.l.s4 1966171168
    %v2939 = vunpack.c.0.s8 %v2938
    %v2940 = vlaneseq
    %v2941 = vshrl.u32 %v2940, 7
    %v2942 = vsub.s32 %v2939, %v2941
    %v2943 = vrot.slane %v2915, %v2942
    %v2944 = vcombine.low %v2922, %v2929
    %v2945 = vcombine.low %v2936, %v2943
    %v2947 = vunpack.c.l.s4 1966171168
    %v2948 = vunpack.c.0.s8 %v2947
    %v2949 = vlaneseq
    %v2950 = vshrl.u32 %v2949, 7
    %v2951 = vsub.s32 %v2948, %v2950
    %v2952 = vrot.slane %v2944, %v2951
    %v2954 = vunpack.c.l.s4 1966171168
    %v2955 = vunpack.c.0.s8 %v2954
    %v2956 = vlaneseq
    %v2957 = vshrl.u32 %v2956, 7
    %v2958 = vsub.s32 %v2955, %v2957
    %v2959 = vrot.slane %v2945, %v2958
    %v2960 = vcombine.low %v2952, %v2959
    %v2962 = vmul.f32 %v2574, %v2960
    %v2964 = vlaneseq
    %v2965 = vshrl.u32 %v2964, 7
    %v2966 = vsub.s32 0, %v2965
    %v2967 = vrot.slane %v2962, %v2966
    %v2968 = vlaneseq
    %v2969 = vshrl.u32 %v2968, 7
    %v2970 = vsub.s32 1, %v2969
    %v2971 = vrot.slane %v2962, %v2970
    %v2972 = vlaneseq
    %v2973 = vshrl.u32 %v2972, 7
    %v2974 = vsub.s32 2, %v2973
    %v2975 = vrot.slane %v2962, %v2974
    %v2976 = vlaneseq
    %v2977 = vshrl.u32 %v2976, 7
    %v2978 = vsub.s32 3, %v2977
    %v2979 = vrot.slane %v2962, %v2978
    %v2980 = vlaneseq
    %v2981 = vshrl.u32 %v2980, 7
    %v2982 = vsub.s32 4, %v2981
    %v2983 = vrot.slane %v2962, %v2982
    %v2984 = vlaneseq
    %v2985 = vshrl.u32 %v2984, 7
    %v2986 = vsub.s32 5, %v2985
    %v2987 = vrot.slane %v2962, %v2986
    %v2988 = vlaneseq
    %v2989 = vshrl.u32 %v2988, 7
    %v2990 = vsub.s32 6, %v2989
    %v2991 = vrot.slane %v2962, %v2990
    %v2992 = vlaneseq
    %v2993 = vshrl.u32 %v2992, 7
    %v2994 = vsub.s32 7, %v2993
    %v2995 = vrot.slane %v2962, %v2994
    %v3004 = vmul.f32 %v2680, %v2967
    %v3005 = vmul.f32 %v2681, %v2971
    %v3006 = vmul.f32 %v2682, %v2975
    %v3007 = vmul.f32 %v2683, %v2979
    %v3008 = vmul.f32 %v2684, %v2983
    %v3009 = vmul.f32 %v2685, %v2987
    %v3010 = vmul.f32 %v2686, %v2991
    %v3011 = vmul.f32 %v2687, %v2995
    %v3020 = vcombine.low %v3004, %v3005
    %v3021 = vcombine.low %v3006, %v3007
    %v3022 = vcombine.low %v3008, %v3009
    %v3023 = vcombine.low %v3010, %v3011
    %v3025 = vunpack.c.l.s4 1966171168
    %v3026 = vunpack.c.0.s8 %v3025
    %v3027 = vlaneseq
    %v3028 = vshrl.u32 %v3027, 7
    %v3029 = vsub.s32 %v3026, %v3028
    %v3030 = vrot.slane %v3020, %v3029
    %v3032 = vunpack.c.l.s4 1966171168
    %v3033 = vunpack.c.0.s8 %v3032
    %v3034 = vlaneseq
    %v3035 = vshrl.u32 %v3034, 7
    %v3036 = vsub.s32 %v3033, %v3035
    %v3037 = vrot.slane %v3021, %v3036
    %v3039 = vunpack.c.l.s4 1966171168
    %v3040 = vunpack.c.0.s8 %v3039
    %v3041 = vlaneseq
    %v3042 = vshrl.u32 %v3041, 7
    %v3043 = vsub.s32 %v3040, %v3042
    %v3044 = vrot.slane %v3022, %v3043
    %v3046 = vunpack.c.l.s4 1966171168
    %v3047 = vunpack.c.0.s8 %v3046
    %v3048 = vlaneseq
    %v3049 = vshrl.u32 %v3048, 7
    %v3050 = vsub.s32 %v3047, %v3049
    %v3051 = vrot.slane %v3023, %v3050
    %v3052 = vcombine.low %v3030, %v3037
    %v3053 = vcombine.low %v3044, %v3051
    %v3055 = vunpack.c.l.s4 1966171168
    %v3056 = vunpack.c.0.s8 %v3055
    %v3057 = vlaneseq
    %v3058 = vshrl.u32 %v3057, 7
    %v3059 = vsub.s32 %v3056, %v3058
    %v3060 = vrot.slane %v3052, %v3059
    %v3062 = vunpack.c.l.s4 1966171168
    %v3063 = vunpack.c.0.s8 %v3062
    %v3064 = vlaneseq
    %v3065 = vshrl.u32 %v3064, 7
    %v3066 = vsub.s32 %v3063, %v3065
    %v3067 = vrot.slane %v3053, %v3066
    %v3068 = vcombine.low %v3060, %v3067
    %v3070 = vsub.f32 %v2575, %v3068
    %v3071 = vmul.f32 %v2098, %v2967
    %v3072 = vmul.f32 %v2100, %v2971
    %v3073 = vmul.f32 %v2244, %v2975
    %v3074 = vmul.f32 %v2246, %v2979
    %v3075 = vmul.f32 %v2390, %v2983
    %v3076 = vmul.f32 %v2392, %v2987
    %v3077 = vmul.f32 %v2536, %v2991
    %v3078 = vmul.f32 %v2538, %v2995
    %v3079 = vmul.f32 %v2102, %v2967
    %v3080 = vmul.f32 %v2104, %v2971
    %v3081 = vmul.f32 %v2248, %v2975
    %v3082 = vmul.f32 %v2250, %v2979
    %v3083 = vmul.f32 %v2394, %v2983
    %v3084 = vmul.f32 %v2396, %v2987
    %v3085 = vmul.f32 %v2540, %v2991
    %v3086 = vmul.f32 %v2542, %v2995
    %v3087 = vmul.f32 %v2108, %v2967
    %v3088 = vmul.f32 %v2110, %v2971
    %v3089 = vmul.f32 %v2254, %v2975
    %v3090 = vmul.f32 %v2256, %v2979
    %v3091 = vmul.f32 %v2400, %v2983
    %v3092 = vmul.f32 %v2402, %v2987
    %v3093 = vmul.f32 %v2546, %v2991
    %v3094 = vmul.f32 %v2548, %v2995
    %v3095 = vmul.f32 %v2112, %v2967
    %v3096 = vmul.f32 %v2114, %v2971
    %v3097 = vmul.f32 %v2258, %v2975
    %v3098 = vmul.f32 %v2260, %v2979
    %v3099 = vmul.f32 %v2404, %v2983
    %v3100 = vmul.f32 %v2406, %v2987
    %v3101 = vmul.f32 %v2550, %v2991
    %v3102 = vmul.f32 %v2552, %v2995
    %v3103 = vmul.f32 %v2118, %v2967
    %v3104 = vmul.f32 %v2120, %v2971
    %v3105 = vmul.f32 %v2264, %v2975
    %v3106 = vmul.f32 %v2266, %v2979
    %v3107 = vmul.f32 %v2410, %v2983
    %v3108 = vmul.f32 %v2412, %v2987
    %v3109 = vmul.f32 %v2556, %v2991
    %v3110 = vmul.f32 %v2558, %v2995
    %v3111 = vmul.f32 %v2122, %v2967
    %v3112 = vmul.f32 %v2124, %v2971
    %v3113 = vmul.f32 %v2268, %v2975
    %v3114 = vmul.f32 %v2270, %v2979
    %v3115 = vmul.f32 %v2414, %v2983
    %v3116 = vmul.f32 %v2416, %v2987
    %v3117 = vmul.f32 %v2560, %v2991
    %v3118 = vmul.f32 %v2562, %v2995
    %v3119 = vmul.f32 %v2128, %v2967
    %v3120 = vmul.f32 %v2130, %v2971
    %v3121 = vmul.f32 %v2274, %v2975
    %v3122 = vmul.f32 %v2276, %v2979
    %v3123 = vmul.f32 %v2420, %v2983
    %v3124 = vmul.f32 %v2422, %v2987
    %v3125 = vmul.f32 %v2566, %v2991
    %v3126 = vmul.f32 %v2568, %v2995
    %v3127 = vmul.f32 %v2132, %v2967
    %v3128 = vmul.f32 %v2134, %v2971
    %v3129 = vmul.f32 %v2278, %v2975
    %v3130 = vmul.f32 %v2280, %v2979
    %v3131 = vmul.f32 %v2424, %v2983
    %v3132 = vmul.f32 %v2426, %v2987
    %v3133 = vmul.f32 %v2570, %v2991
    %v3134 = vmul.f32 %v2572, %v2995
    %v3136 = vlaneseq
    %v3137 = vshrl.u32 %v3136, 7
    %v3138 = vsub.s32 0, %v3137
    %v3139 = vrot.slane %v3070, %v3138
    %v3140 = vlaneseq
    %v3141 = vshrl.u32 %v3140, 7
    %v3142 = vsub.s32 1, %v3141
    %v3143 = vrot.slane %v3070, %v3142
    %v3144 = vlaneseq
    %v3145 = vshrl.u32 %v3144, 7
    %v3146 = vsub.s32 2, %v3145
    %v3147 = vrot.slane %v3070, %v3146
    %v3148 = vlaneseq
    %v3149 = vshrl.u32 %v3148, 7
    %v3150 = vsub.s32 3, %v3149
    %v3151 = vrot.slane %v3070, %v3150
    %v3152 = vlaneseq
    %v3153 = vshrl.u32 %v3152, 7
    %v3154 = vsub.s32 4, %v3153
    %v3155 = vrot.slane %v3070, %v3154
    %v3156 = vlaneseq
    %v3157 = vshrl.u32 %v3156, 7
    %v3158 = vsub.s32 5, %v3157
    %v3159 = vrot.slane %v3070, %v3158
    %v3160 = vlaneseq
    %v3161 = vshrl.u32 %v3160, 7
    %v3162 = vsub.s32 6, %v3161
    %v3163 = vrot.slane %v3070, %v3162
    %v3164 = vlaneseq
    %v3165 = vshrl.u32 %v3164, 7
    %v3166 = vsub.s32 7, %v3165
    %v3167 = vrot.slane %v3070, %v3166
    %v3176 = vadd.f32 %v3071, %v3139
    %v3177 = vadd.f32 %v3072, %v3143
    %v3178 = vadd.f32 %v3073, %v3147
    %v3179 = vadd.f32 %v3074, %v3151
    %v3180 = vadd.f32 %v3075, %v3155
    %v3181 = vadd.f32 %v3076, %v3159
    %v3182 = vadd.f32 %v3077, %v3163
    %v3183 = vadd.f32 %v3078, %v3167
    %v3184 = vadd.f32 %v3079, %v3139
    %v3185 = vadd.f32 %v3080, %v3143
    %v3186 = vadd.f32 %v3081, %v3147
    %v3187 = vadd.f32 %v3082, %v3151
    %v3188 = vadd.f32 %v3083, %v3155
    %v3189 = vadd.f32 %v3084, %v3159
    %v3190 = vadd.f32 %v3085, %v3163
    %v3191 = vadd.f32 %v3086, %v3167
    %v3192 = vadd.f32 %v3087, %v3139
    %v3193 = vadd.f32 %v3088, %v3143
    %v3194 = vadd.f32 %v3089, %v3147
    %v3195 = vadd.f32 %v3090, %v3151
    %v3196 = vadd.f32 %v3091, %v3155
    %v3197 = vadd.f32 %v3092, %v3159
    %v3198 = vadd.f32 %v3093, %v3163
    %v3199 = vadd.f32 %v3094, %v3167
    %v3200 = vadd.f32 %v3095, %v3139
    %v3201 = vadd.f32 %v3096, %v3143
    %v3202 = vadd.f32 %v3097, %v3147
    %v3203 = vadd.f32 %v3098, %v3151
    %v3204 = vadd.f32 %v3099, %v3155
    %v3205 = vadd.f32 %v3100, %v3159
    %v3206 = vadd.f32 %v3101, %v3163
    %v3207 = vadd.f32 %v3102, %v3167
    %v3208 = vadd.f32 %v3103, %v3139
    %v3209 = vadd.f32 %v3104, %v3143
    %v3210 = vadd.f32 %v3105, %v3147
    %v3211 = vadd.f32 %v3106, %v3151
    %v3212 = vadd.f32 %v3107, %v3155
    %v3213 = vadd.f32 %v3108, %v3159
    %v3214 = vadd.f32 %v3109, %v3163
    %v3215 = vadd.f32 %v3110, %v3167
    %v3216 = vadd.f32 %v3111, %v3139
    %v3217 = vadd.f32 %v3112, %v3143
    %v3218 = vadd.f32 %v3113, %v3147
    %v3219 = vadd.f32 %v3114, %v3151
    %v3220 = vadd.f32 %v3115, %v3155
    %v3221 = vadd.f32 %v3116, %v3159
    %v3222 = vadd.f32 %v3117, %v3163
    %v3223 = vadd.f32 %v3118, %v3167
    %v3224 = vadd.f32 %v3119, %v3139
    %v3225 = vadd.f32 %v3120, %v3143
    %v3226 = vadd.f32 %v3121, %v3147
    %v3227 = vadd.f32 %v3122, %v3151
    %v3228 = vadd.f32 %v3123, %v3155
    %v3229 = vadd.f32 %v3124, %v3159
    %v3230 = vadd.f32 %v3125, %v3163
    %v3231 = vadd.f32 %v3126, %v3167
    %v3232 = vadd.f32 %v3127, %v3139
    %v3233 = vadd.f32 %v3128, %v3143
    %v3234 = vadd.f32 %v3129, %v3147
    %v3235 = vadd.f32 %v3130, %v3151
    %v3236 = vadd.f32 %v3131, %v3155
    %v3237 = vadd.f32 %v3132, %v3159
    %v3238 = vadd.f32 %v3133, %v3163
    %v3239 = vadd.f32 %v3134, %v3167
    %v3240 = vmul.f32 %v3176, 0.2
    %v3241 = vmul.f32 %v3177, 0.2
    %v3242 = vmul.f32 %v3178, 0.2
    %v3243 = vmul.f32 %v3179, 0.2
    %v3244 = vmul.f32 %v3180, 0.2
    %v3245 = vmul.f32 %v3181, 0.2
    %v3246 = vmul.f32 %v3182, 0.2
    %v3247 = vmul.f32 %v3183, 0.2
    %v3248 = vmul.f32 %v3184, 0.2
    %v3249 = vmul.f32 %v3185, 0.2
    %v3250 = vmul.f32 %v3186, 0.2
    %v3251 = vmul.f32 %v3187, 0.2
    %v3252 = vmul.f32 %v3188, 0.2
    %v3253 = vmul.f32 %v3189, 0.2
    %v3254 = vmul.f32 %v3190, 0.2
    %v3255 = vmul.f32 %v3191, 0.2
    %v3256 = vmul.f32 %v3192, 0.2
    %v3257 = vmul.f32 %v3193, 0.2
    %v3258 = vmul.f32 %v3194, 0.2
    %v3259 = vmul.f32 %v3195, 0.2
    %v3260 = vmul.f32 %v3196, 0.2
    %v3261 = vmul.f32 %v3197, 0.2
    %v3262 = vmul.f32 %v3198, 0.2
    %v3263 = vmul.f32 %v3199, 0.2
    %v3264 = vmul.f32 %v3200, 0.2
    %v3265 = vmul.f32 %v3201, 0.2
    %v3266 = vmul.f32 %v3202, 0.2
    %v3267 = vmul.f32 %v3203, 0.2
    %v3268 = vmul.f32 %v3204, 0.2
    %v3269 = vmul.f32 %v3205, 0.2
    %v3270 = vmul.f32 %v3206, 0.2
    %v3271 = vmul.f32 %v3207, 0.2
    %v3272 = vmul.f32 %v3208, 0.2
    %v3273 = vmul.f32 %v3209, 0.2
    %v3274 = vmul.f32 %v3210, 0.2
    %v3275 = vmul.f32 %v3211, 0.2
    %v3276 = vmul.f32 %v3212, 0.2
    %v3277 = vmul.f32 %v3213, 0.2
    %v3278 = vmul.f32 %v3214, 0.2
    %v3279 = vmul.f32 %v3215, 0.2
    %v3280 = vmul.f32 %v3216, 0.2
    %v3281 = vmul.f32 %v3217, 0.2
    %v3282 = vmul.f32 %v3218, 0.2
    %v3283 = vmul.f32 %v3219, 0.2
    %v3284 = vmul.f32 %v3220, 0.2
    %v3285 = vmul.f32 %v3221, 0.2
    %v3286 = vmul.f32 %v3222, 0.2
    %v3287 = vmul.f32 %v3223, 0.2
    %v3288 = vmul.f32 %v3224, 0.2
    %v3289 = vmul.f32 %v3225, 0.2
    %v3290 = vmul.f32 %v3226, 0.2
    %v3291 = vmul.f32 %v3227, 0.2
    %v3292 = vmul.f32 %v3228, 0.2
    %v3293 = vmul.f32 %v3229, 0.2
    %v3294 = vmul.f32 %v3230, 0.2
    %v3295 = vmul.f32 %v3231, 0.2
    %v3296 = vmul.f32 %v3232, 0.2
    %v3297 = vmul.f32 %v3233, 0.2
    %v3298 = vmul.f32 %v3234, 0.2
    %v3299 = vmul.f32 %v3235, 0.2
    %v3300 = vmul.f32 %v3236, 0.2
    %v3301 = vmul.f32 %v3237, 0.2
    %v3302 = vmul.f32 %v3238, 0.2
    %v3303 = vmul.f32 %v3239, 0.2
    %v3304 = vmax.f32 %v3176, %v3240
    %v3305 = vmax.f32 %v3177, %v3241
    %v3306 = vmax.f32 %v3178, %v3242
    %v3307 = vmax.f32 %v3179, %v3243
    %v3308 = vmax.f32 %v3180, %v3244
    %v3309 = vmax.f32 %v3181, %v3245
    %v3310 = vmax.f32 %v3182, %v3246
    %v3311 = vmax.f32 %v3183, %v3247
    %v3312 = vmax.f32 %v3184, %v3248
    %v3313 = vmax.f32 %v3185, %v3249
    %v3314 = vmax.f32 %v3186, %v3250
    %v3315 = vmax.f32 %v3187, %v3251
    %v3316 = vmax.f32 %v3188, %v3252
    %v3317 = vmax.f32 %v3189, %v3253
    %v3318 = vmax.f32 %v3190, %v3254
    %v3319 = vmax.f32 %v3191, %v3255
    %v3320 = vmax.f32 %v3192, %v3256
    %v3321 = vmax.f32 %v3193, %v3257
    %v3322 = vmax.f32 %v3194, %v3258
    %v3323 = vmax.f32 %v3195, %v3259
    %v3324 = vmax.f32 %v3196, %v3260
    %v3325 = vmax.f32 %v3197, %v3261
    %v3326 = vmax.f32 %v3198, %v3262
    %v3327 = vmax.f32 %v3199, %v3263
    %v3328 = vmax.f32 %v3200, %v3264
    %v3329 = vmax.f32 %v3201, %v3265
    %v3330 = vmax.f32 %v3202, %v3266
    %v3331 = vmax.f32 %v3203, %v3267
    %v3332 = vmax.f32 %v3204, %v3268
    %v3333 = vmax.f32 %v3205, %v3269
    %v3334 = vmax.f32 %v3206, %v3270
    %v3335 = vmax.f32 %v3207, %v3271
    %v3336 = vmax.f32 %v3208, %v3272
    %v3337 = vmax.f32 %v3209, %v3273
    %v3338 = vmax.f32 %v3210, %v3274
    %v3339 = vmax.f32 %v3211, %v3275
    %v3340 = vmax.f32 %v3212, %v3276
    %v3341 = vmax.f32 %v3213, %v3277
    %v3342 = vmax.f32 %v3214, %v3278
    %v3343 = vmax.f32 %v3215, %v3279
    %v3344 = vmax.f32 %v3216, %v3280
    %v3345 = vmax.f32 %v3217, %v3281
    %v3346 = vmax.f32 %v3218, %v3282
    %v3347 = vmax.f32 %v3219, %v3283
    %v3348 = vmax.f32 %v3220, %v3284
    %v3349 = vmax.f32 %v3221, %v3285
    %v3350 = vmax.f32 %v3222, %v3286
    %v3351 = vmax.f32 %v3223, %v3287
    %v3352 = vmax.f32 %v3224, %v3288
    %v3353 = vmax.f32 %v3225, %v3289
    %v3354 = vmax.f32 %v3226, %v3290
    %v3355 = vmax.f32 %v3227, %v3291
    %v3356 = vmax.f32 %v3228, %v3292
    %v3357 = vmax.f32 %v3229, %v3293
    %v3358 = vmax.f32 %v3230, %v3294
    %v3359 = vmax.f32 %v3231, %v3295
    %v3360 = vmax.f32 %v3232, %v3296
    %v3361 = vmax.f32 %v3233, %v3297
    %v3362 = vmax.f32 %v3234, %v3298
    %v3363 = vmax.f32 %v3235, %v3299
    %v3364 = vmax.f32 %v3236, %v3300
    %v3365 = vmax.f32 %v3237, %v3301
    %v3366 = vmax.f32 %v3238, %v3302
    %v3367 = vmax.f32 %v3239, %v3303
    %s3368 = smul.u32 4, 128
    %s3369 = smul.u32 %s3368, 7
    %s3370 = sshll.u32 %s3369, 4
    %3371 = dma.done %s213, %s3370
    %v3372 = vpack.c.bf16 %v3312, %v3304
    %v3373 = vpack.c.bf16 %v3313, %v3305
    %v3374 = vpack.c.bf16 %v3314, %v3306
    %v3375 = vpack.c.bf16 %v3315, %v3307
    %v3376 = vpack.c.bf16 %v3316, %v3308
    %v3377 = vpack.c.bf16 %v3317, %v3309
    %v3378 = vpack.c.bf16 %v3318, %v3310
    %v3379 = vpack.c.bf16 %v3319, %v3311
    %v3380 = vpack.c.bf16 %v3328, %v3320
    %v3381 = vpack.c.bf16 %v3329, %v3321
    %v3382 = vpack.c.bf16 %v3330, %v3322
    %v3383 = vpack.c.bf16 %v3331, %v3323
    %v3384 = vpack.c.bf16 %v3332, %v3324
    %v3385 = vpack.c.bf16 %v3333, %v3325
    %v3386 = vpack.c.bf16 %v3334, %v3326
    %v3387 = vpack.c.bf16 %v3335, %v3327
    %v3388 = vpack.c.bf16 %v3344, %v3336
    %v3389 = vpack.c.bf16 %v3345, %v3337
    %v3390 = vpack.c.bf16 %v3346, %v3338
    %v3391 = vpack.c.bf16 %v3347, %v3339
    %v3392 = vpack.c.bf16 %v3348, %v3340
    %v3393 = vpack.c.bf16 %v3349, %v3341
    %v3394 = vpack.c.bf16 %v3350, %v3342
    %v3395 = vpack.c.bf16 %v3351, %v3343
    %v3396 = vpack.c.bf16 %v3360, %v3352
    %v3397 = vpack.c.bf16 %v3361, %v3353
    %v3398 = vpack.c.bf16 %v3362, %v3354
    %v3399 = vpack.c.bf16 %v3363, %v3355
    %v3400 = vpack.c.bf16 %v3364, %v3356
    %v3401 = vpack.c.bf16 %v3365, %v3357
    %v3402 = vpack.c.bf16 %v3366, %v3358
    %v3403 = vpack.c.bf16 %v3367, %v3359
    %v3404 = vld [vmem:[#allocation3] sm:$0xff]
    %v3405 = vld [vmem:[#allocation3 + $0x8] sm:$0xff]
    %v3406 = vld [vmem:[#allocation3 + $0x10] sm:$0xff]
    %v3407 = vld [vmem:[#allocation3 + $0x18] sm:$0xff]
    %v3408 = vld [vmem:[#allocation3 + $0x20] sm:$0xff]
    %v3409 = vld [vmem:[#allocation3 + $0x28] sm:$0xff]
    %v3410 = vld [vmem:[#allocation3 + $0x30] sm:$0xff]
    %v3411 = vld [vmem:[#allocation3 + $0x38] sm:$0xff]
    %v3412 = vld [vmem:[#allocation3 + $0x40] sm:$0xff]
    %v3413 = vld [vmem:[#allocation3 + $0x48] sm:$0xff]
    %v3414 = vld [vmem:[#allocation3 + $0x50] sm:$0xff]
    %v3415 = vld [vmem:[#allocation3 + $0x58] sm:$0xff]
    %v3416 = vld [vmem:[#allocation3 + $0x60] sm:$0xff]
    %v3417 = vld [vmem:[#allocation3 + $0x68] sm:$0xff]
    %v3418 = vld [vmem:[#allocation3 + $0x70] sm:$0xff]
    %v3419 = vld [vmem:[#allocation3 + $0x78] sm:$0xff]
    %v3420 = vld [vmem:[#allocation3 + $0x80] sm:$0xff]
    %v3421 = vld [vmem:[#allocation3 + $0x88] sm:$0xff]
    %v3422 = vld [vmem:[#allocation3 + $0x90] sm:$0xff]
    %v3423 = vld [vmem:[#allocation3 + $0x98] sm:$0xff]
    %v3424 = vld [vmem:[#allocation3 + $0xa0] sm:$0xff]
    %v3425 = vld [vmem:[#allocation3 + $0xa8] sm:$0xff]
    %v3426 = vld [vmem:[#allocation3 + $0xb0] sm:$0xff]
    %v3427 = vld [vmem:[#allocation3 + $0xb8] sm:$0xff]
    %v3428 = vld [vmem:[#allocation3 + $0xc0] sm:$0xff]
    %v3429 = vld [vmem:[#allocation3 + $0xc8] sm:$0xff]
    %v3430 = vld [vmem:[#allocation3 + $0xd0] sm:$0xff]
    %v3431 = vld [vmem:[#allocation3 + $0xd8] sm:$0xff]
    %v3432 = vld [vmem:[#allocation3 + $0xe0] sm:$0xff]
    %v3433 = vld [vmem:[#allocation3 + $0xe8] sm:$0xff]
    %v3434 = vld [vmem:[#allocation3 + $0xf0] sm:$0xff]
    %v3435 = vld [vmem:[#allocation3 + $0xf8] sm:$0xff]
    %v3436 = vld [vmem:[#allocation3 + $0x100] sm:$0xff]
    %v3437 = vld [vmem:[#allocation3 + $0x108] sm:$0xff]
    %v3438 = vld [vmem:[#allocation3 + $0x110] sm:$0xff]
    %v3439 = vld [vmem:[#allocation3 + $0x118] sm:$0xff]
    %v3440 = vld [vmem:[#allocation3 + $0x120] sm:$0xff]
    %v3441 = vld [vmem:[#allocation3 + $0x128] sm:$0xff]
    %v3442 = vld [vmem:[#allocation3 + $0x130] sm:$0xff]
    %v3443 = vld [vmem:[#allocation3 + $0x138] sm:$0xff]
    %v3444 = vld [vmem:[#allocation3 + $0x140] sm:$0xff]
    %v3445 = vld [vmem:[#allocation3 + $0x148] sm:$0xff]
    %v3446 = vld [vmem:[#allocation3 + $0x150] sm:$0xff]
    %v3447 = vld [vmem:[#allocation3 + $0x158] sm:$0xff]
    %v3448 = vld [vmem:[#allocation3 + $0x160] sm:$0xff]
    %v3449 = vld [vmem:[#allocation3 + $0x168] sm:$0xff]
    %v3450 = vld [vmem:[#allocation3 + $0x170] sm:$0xff]
    %v3451 = vld [vmem:[#allocation3 + $0x178] sm:$0xff]
    %v3452 = vld [vmem:[#allocation3 + $0x180] sm:$0xff]
    %v3453 = vld [vmem:[#allocation3 + $0x188] sm:$0xff]
    %v3454 = vld [vmem:[#allocation3 + $0x190] sm:$0xff]
    %v3455 = vld [vmem:[#allocation3 + $0x198] sm:$0xff]
    %v3456 = vld [vmem:[#allocation3 + $0x1a0] sm:$0xff]
    %v3457 = vld [vmem:[#allocation3 + $0x1a8] sm:$0xff]
    %v3458 = vld [vmem:[#allocation3 + $0x1b0] sm:$0xff]
    %v3459 = vld [vmem:[#allocation3 + $0x1b8] sm:$0xff]
    %v3460 = vld [vmem:[#allocation3 + $0x1c0] sm:$0xff]
    %v3461 = vld [vmem:[#allocation3 + $0x1c8] sm:$0xff]
    %v3462 = vld [vmem:[#allocation3 + $0x1d0] sm:$0xff]
    %v3463 = vld [vmem:[#allocation3 + $0x1d8] sm:$0xff]
    %v3464 = vld [vmem:[#allocation3 + $0x1e0] sm:$0xff]
    %v3465 = vld [vmem:[#allocation3 + $0x1e8] sm:$0xff]
    %v3466 = vld [vmem:[#allocation3 + $0x1f0] sm:$0xff]
    %v3467 = vld [vmem:[#allocation3 + $0x1f8] sm:$0xff]
    %v3468 = vld [vmem:[#allocation3 + $0x200] sm:$0xff]
    %v3469 = vld [vmem:[#allocation3 + $0x208] sm:$0xff]
    %v3470 = vld [vmem:[#allocation3 + $0x210] sm:$0xff]
    %v3471 = vld [vmem:[#allocation3 + $0x218] sm:$0xff]
    %v3472 = vld [vmem:[#allocation3 + $0x220] sm:$0xff]
    %v3473 = vld [vmem:[#allocation3 + $0x228] sm:$0xff]
    %v3474 = vld [vmem:[#allocation3 + $0x230] sm:$0xff]
    %v3475 = vld [vmem:[#allocation3 + $0x238] sm:$0xff]
    %v3476 = vld [vmem:[#allocation3 + $0x240] sm:$0xff]
    %v3477 = vld [vmem:[#allocation3 + $0x248] sm:$0xff]
    %v3478 = vld [vmem:[#allocation3 + $0x250] sm:$0xff]
    %v3479 = vld [vmem:[#allocation3 + $0x258] sm:$0xff]
    %v3480 = vld [vmem:[#allocation3 + $0x260] sm:$0xff]
    %v3481 = vld [vmem:[#allocation3 + $0x268] sm:$0xff]
    %v3482 = vld [vmem:[#allocation3 + $0x270] sm:$0xff]
    %v3483 = vld [vmem:[#allocation3 + $0x278] sm:$0xff]
    %v3484 = vld [vmem:[#allocation3 + $0x280] sm:$0xff]
    %v3485 = vld [vmem:[#allocation3 + $0x288] sm:$0xff]
    %v3486 = vld [vmem:[#allocation3 + $0x290] sm:$0xff]
    %v3487 = vld [vmem:[#allocation3 + $0x298] sm:$0xff]
    %v3488 = vld [vmem:[#allocation3 + $0x2a0] sm:$0xff]
    %v3489 = vld [vmem:[#allocation3 + $0x2a8] sm:$0xff]
    %v3490 = vld [vmem:[#allocation3 + $0x2b0] sm:$0xff]
    %v3491 = vld [vmem:[#allocation3 + $0x2b8] sm:$0xff]
    %v3492 = vld [vmem:[#allocation3 + $0x2c0] sm:$0xff]
    %v3493 = vld [vmem:[#allocation3 + $0x2c8] sm:$0xff]
    %v3494 = vld [vmem:[#allocation3 + $0x2d0] sm:$0xff]
    %v3495 = vld [vmem:[#allocation3 + $0x2d8] sm:$0xff]
    %v3496 = vld [vmem:[#allocation3 + $0x2e0] sm:$0xff]
    %v3497 = vld [vmem:[#allocation3 + $0x2e8] sm:$0xff]
    %v3498 = vld [vmem:[#allocation3 + $0x2f0] sm:$0xff]
    %v3499 = vld [vmem:[#allocation3 + $0x2f8] sm:$0xff]
    %v3500 = vld [vmem:[#allocation3 + $0x300] sm:$0xff]
    %v3501 = vld [vmem:[#allocation3 + $0x308] sm:$0xff]
    %v3502 = vld [vmem:[#allocation3 + $0x310] sm:$0xff]
    %v3503 = vld [vmem:[#allocation3 + $0x318] sm:$0xff]
    %v3504 = vld [vmem:[#allocation3 + $0x320] sm:$0xff]
    %v3505 = vld [vmem:[#allocation3 + $0x328] sm:$0xff]
    %v3506 = vld [vmem:[#allocation3 + $0x330] sm:$0xff]
    %v3507 = vld [vmem:[#allocation3 + $0x338] sm:$0xff]
    %v3508 = vld [vmem:[#allocation3 + $0x340] sm:$0xff]
    %v3509 = vld [vmem:[#allocation3 + $0x348] sm:$0xff]
    %v3510 = vld [vmem:[#allocation3 + $0x350] sm:$0xff]
    %v3511 = vld [vmem:[#allocation3 + $0x358] sm:$0xff]
    %v3512 = vld [vmem:[#allocation3 + $0x360] sm:$0xff]
    %v3513 = vld [vmem:[#allocation3 + $0x368] sm:$0xff]
    %v3514 = vld [vmem:[#allocation3 + $0x370] sm:$0xff]
    %v3515 = vld [vmem:[#allocation3 + $0x378] sm:$0xff]
    %v3516 = vld [vmem:[#allocation3 + $0x380] sm:$0xff]
    %v3517 = vld [vmem:[#allocation3 + $0x388] sm:$0xff]
    %v3518 = vld [vmem:[#allocation3 + $0x390] sm:$0xff]
    %v3519 = vld [vmem:[#allocation3 + $0x398] sm:$0xff]
    %v3520 = vld [vmem:[#allocation3 + $0x3a0] sm:$0xff]
    %v3521 = vld [vmem:[#allocation3 + $0x3a8] sm:$0xff]
    %v3522 = vld [vmem:[#allocation3 + $0x3b0] sm:$0xff]
    %v3523 = vld [vmem:[#allocation3 + $0x3b8] sm:$0xff]
    %v3524 = vld [vmem:[#allocation3 + $0x3c0] sm:$0xff]
    %v3525 = vld [vmem:[#allocation3 + $0x3c8] sm:$0xff]
    %v3526 = vld [vmem:[#allocation3 + $0x3d0] sm:$0xff]
    %v3527 = vld [vmem:[#allocation3 + $0x3d8] sm:$0xff]
    %v3528 = vld [vmem:[#allocation3 + $0x3e0] sm:$0xff]
    %v3529 = vld [vmem:[#allocation3 + $0x3e8] sm:$0xff]
    %v3530 = vld [vmem:[#allocation3 + $0x3f0] sm:$0xff]
    %v3531 = vld [vmem:[#allocation3 + $0x3f8] sm:$0xff]
    %v3532 = vld [vmem:[#allocation3 + $0x400] sm:$0xff]
    %v3533 = vld [vmem:[#allocation3 + $0x408] sm:$0xff]
    %v3534 = vld [vmem:[#allocation3 + $0x410] sm:$0xff]
    %v3535 = vld [vmem:[#allocation3 + $0x418] sm:$0xff]
    %v3536 = vld [vmem:[#allocation3 + $0x420] sm:$0xff]
    %v3537 = vld [vmem:[#allocation3 + $0x428] sm:$0xff]
    %v3538 = vld [vmem:[#allocation3 + $0x430] sm:$0xff]
    %v3539 = vld [vmem:[#allocation3 + $0x438] sm:$0xff]
    %v3540 = vld [vmem:[#allocation3 + $0x440] sm:$0xff]
    %v3541 = vld [vmem:[#allocation3 + $0x448] sm:$0xff]
    %v3542 = vld [vmem:[#allocation3 + $0x450] sm:$0xff]
    %v3543 = vld [vmem:[#allocation3 + $0x458] sm:$0xff]
    %v3544 = vld [vmem:[#allocation3 + $0x460] sm:$0xff]
    %v3545 = vld [vmem:[#allocation3 + $0x468] sm:$0xff]
    %v3546 = vld [vmem:[#allocation3 + $0x470] sm:$0xff]
    %v3547 = vld [vmem:[#allocation3 + $0x478] sm:$0xff]
    %v3548 = vld [vmem:[#allocation3 + $0x480] sm:$0xff]
    %v3549 = vld [vmem:[#allocation3 + $0x488] sm:$0xff]
    %v3550 = vld [vmem:[#allocation3 + $0x490] sm:$0xff]
    %v3551 = vld [vmem:[#allocation3 + $0x498] sm:$0xff]
    %v3552 = vld [vmem:[#allocation3 + $0x4a0] sm:$0xff]
    %v3553 = vld [vmem:[#allocation3 + $0x4a8] sm:$0xff]
    %v3554 = vld [vmem:[#allocation3 + $0x4b0] sm:$0xff]
    %v3555 = vld [vmem:[#allocation3 + $0x4b8] sm:$0xff]
    %v3556 = vld [vmem:[#allocation3 + $0x4c0] sm:$0xff]
    %v3557 = vld [vmem:[#allocation3 + $0x4c8] sm:$0xff]
    %v3558 = vld [vmem:[#allocation3 + $0x4d0] sm:$0xff]
    %v3559 = vld [vmem:[#allocation3 + $0x4d8] sm:$0xff]
    %v3560 = vld [vmem:[#allocation3 + $0x4e0] sm:$0xff]
    %v3561 = vld [vmem:[#allocation3 + $0x4e8] sm:$0xff]
    %v3562 = vld [vmem:[#allocation3 + $0x4f0] sm:$0xff]
    %v3563 = vld [vmem:[#allocation3 + $0x4f8] sm:$0xff]
    %v3564 = vld [vmem:[#allocation3 + $0x500] sm:$0xff]
    %v3565 = vld [vmem:[#allocation3 + $0x508] sm:$0xff]
    %v3566 = vld [vmem:[#allocation3 + $0x510] sm:$0xff]
    %v3567 = vld [vmem:[#allocation3 + $0x518] sm:$0xff]
    %v3568 = vld [vmem:[#allocation3 + $0x520] sm:$0xff]
    %v3569 = vld [vmem:[#allocation3 + $0x528] sm:$0xff]
    %v3570 = vld [vmem:[#allocation3 + $0x530] sm:$0xff]
    %v3571 = vld [vmem:[#allocation3 + $0x538] sm:$0xff]
    %v3572 = vld [vmem:[#allocation3 + $0x540] sm:$0xff]
    %v3573 = vld [vmem:[#allocation3 + $0x548] sm:$0xff]
    %v3574 = vld [vmem:[#allocation3 + $0x550] sm:$0xff]
    %v3575 = vld [vmem:[#allocation3 + $0x558] sm:$0xff]
    %v3576 = vld [vmem:[#allocation3 + $0x560] sm:$0xff]
    %v3577 = vld [vmem:[#allocation3 + $0x568] sm:$0xff]
    %v3578 = vld [vmem:[#allocation3 + $0x570] sm:$0xff]
    %v3579 = vld [vmem:[#allocation3 + $0x578] sm:$0xff]
    %v3580 = vld [vmem:[#allocation3 + $0x580] sm:$0xff]
    %v3581 = vld [vmem:[#allocation3 + $0x588] sm:$0xff]
    %v3582 = vld [vmem:[#allocation3 + $0x590] sm:$0xff]
    %v3583 = vld [vmem:[#allocation3 + $0x598] sm:$0xff]
    %v3584 = vld [vmem:[#allocation3 + $0x5a0] sm:$0xff]
    %v3585 = vld [vmem:[#allocation3 + $0x5a8] sm:$0xff]
    %v3586 = vld [vmem:[#allocation3 + $0x5b0] sm:$0xff]
    %v3587 = vld [vmem:[#allocation3 + $0x5b8] sm:$0xff]
    %v3588 = vld [vmem:[#allocation3 + $0x5c0] sm:$0xff]
    %v3589 = vld [vmem:[#allocation3 + $0x5c8] sm:$0xff]
    %v3590 = vld [vmem:[#allocation3 + $0x5d0] sm:$0xff]
    %v3591 = vld [vmem:[#allocation3 + $0x5d8] sm:$0xff]
    %v3592 = vld [vmem:[#allocation3 + $0x5e0] sm:$0xff]
    %v3593 = vld [vmem:[#allocation3 + $0x5e8] sm:$0xff]
    %v3594 = vld [vmem:[#allocation3 + $0x5f0] sm:$0xff]
    %v3595 = vld [vmem:[#allocation3 + $0x5f8] sm:$0xff]
    %v3596 = vld [vmem:[#allocation3 + $0x600] sm:$0xff]
    %v3597 = vld [vmem:[#allocation3 + $0x608] sm:$0xff]
    %v3598 = vld [vmem:[#allocation3 + $0x610] sm:$0xff]
    %v3599 = vld [vmem:[#allocation3 + $0x618] sm:$0xff]
    %v3600 = vld [vmem:[#allocation3 + $0x620] sm:$0xff]
    %v3601 = vld [vmem:[#allocation3 + $0x628] sm:$0xff]
    %v3602 = vld [vmem:[#allocation3 + $0x630] sm:$0xff]
    %v3603 = vld [vmem:[#allocation3 + $0x638] sm:$0xff]
    %v3604 = vld [vmem:[#allocation3 + $0x640] sm:$0xff]
    %v3605 = vld [vmem:[#allocation3 + $0x648] sm:$0xff]
    %v3606 = vld [vmem:[#allocation3 + $0x650] sm:$0xff]
    %v3607 = vld [vmem:[#allocation3 + $0x658] sm:$0xff]
    %v3608 = vld [vmem:[#allocation3 + $0x660] sm:$0xff]
    %v3609 = vld [vmem:[#allocation3 + $0x668] sm:$0xff]
    %v3610 = vld [vmem:[#allocation3 + $0x670] sm:$0xff]
    %v3611 = vld [vmem:[#allocation3 + $0x678] sm:$0xff]
    %v3612 = vld [vmem:[#allocation3 + $0x680] sm:$0xff]
    %v3613 = vld [vmem:[#allocation3 + $0x688] sm:$0xff]
    %v3614 = vld [vmem:[#allocation3 + $0x690] sm:$0xff]
    %v3615 = vld [vmem:[#allocation3 + $0x698] sm:$0xff]
    %v3616 = vld [vmem:[#allocation3 + $0x6a0] sm:$0xff]
    %v3617 = vld [vmem:[#allocation3 + $0x6a8] sm:$0xff]
    %v3618 = vld [vmem:[#allocation3 + $0x6b0] sm:$0xff]
    %v3619 = vld [vmem:[#allocation3 + $0x6b8] sm:$0xff]
    %v3620 = vld [vmem:[#allocation3 + $0x6c0] sm:$0xff]
    %v3621 = vld [vmem:[#allocation3 + $0x6c8] sm:$0xff]
    %v3622 = vld [vmem:[#allocation3 + $0x6d0] sm:$0xff]
    %v3623 = vld [vmem:[#allocation3 + $0x6d8] sm:$0xff]
    %v3624 = vld [vmem:[#allocation3 + $0x6e0] sm:$0xff]
    %v3625 = vld [vmem:[#allocation3 + $0x6e8] sm:$0xff]
    %v3626 = vld [vmem:[#allocation3 + $0x6f0] sm:$0xff]
    %v3627 = vld [vmem:[#allocation3 + $0x6f8] sm:$0xff]
    %v3628 = vld [vmem:[#allocation3 + $0x700] sm:$0xff]
    %v3629 = vld [vmem:[#allocation3 + $0x708] sm:$0xff]
    %v3630 = vld [vmem:[#allocation3 + $0x710] sm:$0xff]
    %v3631 = vld [vmem:[#allocation3 + $0x718] sm:$0xff]
    %v3632 = vld [vmem:[#allocation3 + $0x720] sm:$0xff]
    %v3633 = vld [vmem:[#allocation3 + $0x728] sm:$0xff]
    %v3634 = vld [vmem:[#allocation3 + $0x730] sm:$0xff]
    %v3635 = vld [vmem:[#allocation3 + $0x738] sm:$0xff]
    %v3636 = vld [vmem:[#allocation3 + $0x740] sm:$0xff]
    %v3637 = vld [vmem:[#allocation3 + $0x748] sm:$0xff]
    %v3638 = vld [vmem:[#allocation3 + $0x750] sm:$0xff]
    %v3639 = vld [vmem:[#allocation3 + $0x758] sm:$0xff]
    %v3640 = vld [vmem:[#allocation3 + $0x760] sm:$0xff]
    %v3641 = vld [vmem:[#allocation3 + $0x768] sm:$0xff]
    %v3642 = vld [vmem:[#allocation3 + $0x770] sm:$0xff]
    %v3643 = vld [vmem:[#allocation3 + $0x778] sm:$0xff]
    %v3644 = vld [vmem:[#allocation3 + $0x780] sm:$0xff]
    %v3645 = vld [vmem:[#allocation3 + $0x788] sm:$0xff]
    %v3646 = vld [vmem:[#allocation3 + $0x790] sm:$0xff]
    %v3647 = vld [vmem:[#allocation3 + $0x798] sm:$0xff]
    %v3648 = vld [vmem:[#allocation3 + $0x7a0] sm:$0xff]
    %v3649 = vld [vmem:[#allocation3 + $0x7a8] sm:$0xff]
    %v3650 = vld [vmem:[#allocation3 + $0x7b0] sm:$0xff]
    %v3651 = vld [vmem:[#allocation3 + $0x7b8] sm:$0xff]
    %v3652 = vld [vmem:[#allocation3 + $0x7c0] sm:$0xff]
    %v3653 = vld [vmem:[#allocation3 + $0x7c8] sm:$0xff]
    %v3654 = vld [vmem:[#allocation3 + $0x7d0] sm:$0xff]
    %v3655 = vld [vmem:[#allocation3 + $0x7d8] sm:$0xff]
    %v3656 = vld [vmem:[#allocation3 + $0x7e0] sm:$0xff]
    %v3657 = vld [vmem:[#allocation3 + $0x7e8] sm:$0xff]
    %v3658 = vld [vmem:[#allocation3 + $0x7f0] sm:$0xff]
    %v3659 = vld [vmem:[#allocation3 + $0x7f8] sm:$0xff]
    %v3660 = vld [vmem:[#allocation3 + $0x800] sm:$0xff]
    %v3661 = vld [vmem:[#allocation3 + $0x808] sm:$0xff]
    %v3662 = vld [vmem:[#allocation3 + $0x810] sm:$0xff]
    %v3663 = vld [vmem:[#allocation3 + $0x818] sm:$0xff]
    %v3664 = vld [vmem:[#allocation3 + $0x820] sm:$0xff]
    %v3665 = vld [vmem:[#allocation3 + $0x828] sm:$0xff]
    %v3666 = vld [vmem:[#allocation3 + $0x830] sm:$0xff]
    %v3667 = vld [vmem:[#allocation3 + $0x838] sm:$0xff]
    %v3668 = vld [vmem:[#allocation3 + $0x840] sm:$0xff]
    %v3669 = vld [vmem:[#allocation3 + $0x848] sm:$0xff]
    %v3670 = vld [vmem:[#allocation3 + $0x850] sm:$0xff]
    %v3671 = vld [vmem:[#allocation3 + $0x858] sm:$0xff]
    %v3672 = vld [vmem:[#allocation3 + $0x860] sm:$0xff]
    %v3673 = vld [vmem:[#allocation3 + $0x868] sm:$0xff]
    %v3674 = vld [vmem:[#allocation3 + $0x870] sm:$0xff]
    %v3675 = vld [vmem:[#allocation3 + $0x878] sm:$0xff]
    %v3676 = vld [vmem:[#allocation3 + $0x880] sm:$0xff]
    %v3677 = vld [vmem:[#allocation3 + $0x888] sm:$0xff]
    %v3678 = vld [vmem:[#allocation3 + $0x890] sm:$0xff]
    %v3679 = vld [vmem:[#allocation3 + $0x898] sm:$0xff]
    %v3680 = vld [vmem:[#allocation3 + $0x8a0] sm:$0xff]
    %v3681 = vld [vmem:[#allocation3 + $0x8a8] sm:$0xff]
    %v3682 = vld [vmem:[#allocation3 + $0x8b0] sm:$0xff]
    %v3683 = vld [vmem:[#allocation3 + $0x8b8] sm:$0xff]
    %v3684 = vld [vmem:[#allocation3 + $0x8c0] sm:$0xff]
    %v3685 = vld [vmem:[#allocation3 + $0x8c8] sm:$0xff]
    %v3686 = vld [vmem:[#allocation3 + $0x8d0] sm:$0xff]
    %v3687 = vld [vmem:[#allocation3 + $0x8d8] sm:$0xff]
    %v3688 = vld [vmem:[#allocation3 + $0x8e0] sm:$0xff]
    %v3689 = vld [vmem:[#allocation3 + $0x8e8] sm:$0xff]
    %v3690 = vld [vmem:[#allocation3 + $0x8f0] sm:$0xff]
    %v3691 = vld [vmem:[#allocation3 + $0x8f8] sm:$0xff]
    %v3692 = vld [vmem:[#allocation3 + $0x900] sm:$0xff]
    %v3693 = vld [vmem:[#allocation3 + $0x908] sm:$0xff]
    %v3694 = vld [vmem:[#allocation3 + $0x910] sm:$0xff]
    %v3695 = vld [vmem:[#allocation3 + $0x918] sm:$0xff]
    %v3696 = vld [vmem:[#allocation3 + $0x920] sm:$0xff]
    %v3697 = vld [vmem:[#allocation3 + $0x928] sm:$0xff]
    %v3698 = vld [vmem:[#allocation3 + $0x930] sm:$0xff]
    %v3699 = vld [vmem:[#allocation3 + $0x938] sm:$0xff]
    %v3700 = vld [vmem:[#allocation3 + $0x940] sm:$0xff]
    %v3701 = vld [vmem:[#allocation3 + $0x948] sm:$0xff]
    %v3702 = vld [vmem:[#allocation3 + $0x950] sm:$0xff]
    %v3703 = vld [vmem:[#allocation3 + $0x958] sm:$0xff]
    %v3704 = vld [vmem:[#allocation3 + $0x960] sm:$0xff]
    %v3705 = vld [vmem:[#allocation3 + $0x968] sm:$0xff]
    %v3706 = vld [vmem:[#allocation3 + $0x970] sm:$0xff]
    %v3707 = vld [vmem:[#allocation3 + $0x978] sm:$0xff]
    %v3708 = vld [vmem:[#allocation3 + $0x980] sm:$0xff]
    %v3709 = vld [vmem:[#allocation3 + $0x988] sm:$0xff]
    %v3710 = vld [vmem:[#allocation3 + $0x990] sm:$0xff]
    %v3711 = vld [vmem:[#allocation3 + $0x998] sm:$0xff]
    %v3712 = vld [vmem:[#allocation3 + $0x9a0] sm:$0xff]
    %v3713 = vld [vmem:[#allocation3 + $0x9a8] sm:$0xff]
    %v3714 = vld [vmem:[#allocation3 + $0x9b0] sm:$0xff]
    %v3715 = vld [vmem:[#allocation3 + $0x9b8] sm:$0xff]
    %v3716 = vld [vmem:[#allocation3 + $0x9c0] sm:$0xff]
    %v3717 = vld [vmem:[#allocation3 + $0x9c8] sm:$0xff]
    %v3718 = vld [vmem:[#allocation3 + $0x9d0] sm:$0xff]
    %v3719 = vld [vmem:[#allocation3 + $0x9d8] sm:$0xff]
    %v3720 = vld [vmem:[#allocation3 + $0x9e0] sm:$0xff]
    %v3721 = vld [vmem:[#allocation3 + $0x9e8] sm:$0xff]
    %v3722 = vld [vmem:[#allocation3 + $0x9f0] sm:$0xff]
    %v3723 = vld [vmem:[#allocation3 + $0x9f8] sm:$0xff]
    %v3724 = vld [vmem:[#allocation3 + $0xa00] sm:$0xff]
    %v3725 = vld [vmem:[#allocation3 + $0xa08] sm:$0xff]
    %v3726 = vld [vmem:[#allocation3 + $0xa10] sm:$0xff]
    %v3727 = vld [vmem:[#allocation3 + $0xa18] sm:$0xff]
    %v3728 = vld [vmem:[#allocation3 + $0xa20] sm:$0xff]
    %v3729 = vld [vmem:[#allocation3 + $0xa28] sm:$0xff]
    %v3730 = vld [vmem:[#allocation3 + $0xa30] sm:$0xff]
    %v3731 = vld [vmem:[#allocation3 + $0xa38] sm:$0xff]
    %v3732 = vld [vmem:[#allocation3 + $0xa40] sm:$0xff]
    %v3733 = vld [vmem:[#allocation3 + $0xa48] sm:$0xff]
    %v3734 = vld [vmem:[#allocation3 + $0xa50] sm:$0xff]
    %v3735 = vld [vmem:[#allocation3 + $0xa58] sm:$0xff]
    %v3736 = vld [vmem:[#allocation3 + $0xa60] sm:$0xff]
    %v3737 = vld [vmem:[#allocation3 + $0xa68] sm:$0xff]
    %v3738 = vld [vmem:[#allocation3 + $0xa70] sm:$0xff]
    %v3739 = vld [vmem:[#allocation3 + $0xa78] sm:$0xff]
    %v3740 = vld [vmem:[#allocation3 + $0xa80] sm:$0xff]
    %v3741 = vld [vmem:[#allocation3 + $0xa88] sm:$0xff]
    %v3742 = vld [vmem:[#allocation3 + $0xa90] sm:$0xff]
    %v3743 = vld [vmem:[#allocation3 + $0xa98] sm:$0xff]
    %v3744 = vld [vmem:[#allocation3 + $0xaa0] sm:$0xff]
    %v3745 = vld [vmem:[#allocation3 + $0xaa8] sm:$0xff]
    %v3746 = vld [vmem:[#allocation3 + $0xab0] sm:$0xff]
    %v3747 = vld [vmem:[#allocation3 + $0xab8] sm:$0xff]
    %v3748 = vld [vmem:[#allocation3 + $0xac0] sm:$0xff]
    %v3749 = vld [vmem:[#allocation3 + $0xac8] sm:$0xff]
    %v3750 = vld [vmem:[#allocation3 + $0xad0] sm:$0xff]
    %v3751 = vld [vmem:[#allocation3 + $0xad8] sm:$0xff]
    %v3752 = vld [vmem:[#allocation3 + $0xae0] sm:$0xff]
    %v3753 = vld [vmem:[#allocation3 + $0xae8] sm:$0xff]
    %v3754 = vld [vmem:[#allocation3 + $0xaf0] sm:$0xff]
    %v3755 = vld [vmem:[#allocation3 + $0xaf8] sm:$0xff]
    %v3756 = vld [vmem:[#allocation3 + $0xb00] sm:$0xff]
    %v3757 = vld [vmem:[#allocation3 + $0xb08] sm:$0xff]
    %v3758 = vld [vmem:[#allocation3 + $0xb10] sm:$0xff]
    %v3759 = vld [vmem:[#allocation3 + $0xb18] sm:$0xff]
    %v3760 = vld [vmem:[#allocation3 + $0xb20] sm:$0xff]
    %v3761 = vld [vmem:[#allocation3 + $0xb28] sm:$0xff]
    %v3762 = vld [vmem:[#allocation3 + $0xb30] sm:$0xff]
    %v3763 = vld [vmem:[#allocation3 + $0xb38] sm:$0xff]
    %v3764 = vld [vmem:[#allocation3 + $0xb40] sm:$0xff]
    %v3765 = vld [vmem:[#allocation3 + $0xb48] sm:$0xff]
    %v3766 = vld [vmem:[#allocation3 + $0xb50] sm:$0xff]
    %v3767 = vld [vmem:[#allocation3 + $0xb58] sm:$0xff]
    %v3768 = vld [vmem:[#allocation3 + $0xb60] sm:$0xff]
    %v3769 = vld [vmem:[#allocation3 + $0xb68] sm:$0xff]
    %v3770 = vld [vmem:[#allocation3 + $0xb70] sm:$0xff]
    %v3771 = vld [vmem:[#allocation3 + $0xb78] sm:$0xff]
    %v3772 = vld [vmem:[#allocation3 + $0xb80] sm:$0xff]
    %v3773 = vld [vmem:[#allocation3 + $0xb88] sm:$0xff]
    %v3774 = vld [vmem:[#allocation3 + $0xb90] sm:$0xff]
    %v3775 = vld [vmem:[#allocation3 + $0xb98] sm:$0xff]
    %v3776 = vld [vmem:[#allocation3 + $0xba0] sm:$0xff]
    %v3777 = vld [vmem:[#allocation3 + $0xba8] sm:$0xff]
    %v3778 = vld [vmem:[#allocation3 + $0xbb0] sm:$0xff]
    %v3779 = vld [vmem:[#allocation3 + $0xbb8] sm:$0xff]
    %v3780 = vld [vmem:[#allocation3 + $0xbc0] sm:$0xff]
    %v3781 = vld [vmem:[#allocation3 + $0xbc8] sm:$0xff]
    %v3782 = vld [vmem:[#allocation3 + $0xbd0] sm:$0xff]
    %v3783 = vld [vmem:[#allocation3 + $0xbd8] sm:$0xff]
    %v3784 = vld [vmem:[#allocation3 + $0xbe0] sm:$0xff]
    %v3785 = vld [vmem:[#allocation3 + $0xbe8] sm:$0xff]
    %v3786 = vld [vmem:[#allocation3 + $0xbf0] sm:$0xff]
    %v3787 = vld [vmem:[#allocation3 + $0xbf8] sm:$0xff]
    %v3788 = vld [vmem:[#allocation3 + $0xc00] sm:$0xff]
    %v3789 = vld [vmem:[#allocation3 + $0xc08] sm:$0xff]
    %v3790 = vld [vmem:[#allocation3 + $0xc10] sm:$0xff]
    %v3791 = vld [vmem:[#allocation3 + $0xc18] sm:$0xff]
    %v3792 = vld [vmem:[#allocation3 + $0xc20] sm:$0xff]
    %v3793 = vld [vmem:[#allocation3 + $0xc28] sm:$0xff]
    %v3794 = vld [vmem:[#allocation3 + $0xc30] sm:$0xff]
    %v3795 = vld [vmem:[#allocation3 + $0xc38] sm:$0xff]
    %v3796 = vld [vmem:[#allocation3 + $0xc40] sm:$0xff]
    %v3797 = vld [vmem:[#allocation3 + $0xc48] sm:$0xff]
    %v3798 = vld [vmem:[#allocation3 + $0xc50] sm:$0xff]
    %v3799 = vld [vmem:[#allocation3 + $0xc58] sm:$0xff]
    %v3800 = vld [vmem:[#allocation3 + $0xc60] sm:$0xff]
    %v3801 = vld [vmem:[#allocation3 + $0xc68] sm:$0xff]
    %v3802 = vld [vmem:[#allocation3 + $0xc70] sm:$0xff]
    %v3803 = vld [vmem:[#allocation3 + $0xc78] sm:$0xff]
    %v3804 = vld [vmem:[#allocation3 + $0xc80] sm:$0xff]
    %v3805 = vld [vmem:[#allocation3 + $0xc88] sm:$0xff]
    %v3806 = vld [vmem:[#allocation3 + $0xc90] sm:$0xff]
    %v3807 = vld [vmem:[#allocation3 + $0xc98] sm:$0xff]
    %v3808 = vld [vmem:[#allocation3 + $0xca0] sm:$0xff]
    %v3809 = vld [vmem:[#allocation3 + $0xca8] sm:$0xff]
    %v3810 = vld [vmem:[#allocation3 + $0xcb0] sm:$0xff]
    %v3811 = vld [vmem:[#allocation3 + $0xcb8] sm:$0xff]
    %v3812 = vld [vmem:[#allocation3 + $0xcc0] sm:$0xff]
    %v3813 = vld [vmem:[#allocation3 + $0xcc8] sm:$0xff]
    %v3814 = vld [vmem:[#allocation3 + $0xcd0] sm:$0xff]
    %v3815 = vld [vmem:[#allocation3 + $0xcd8] sm:$0xff]
    %v3816 = vld [vmem:[#allocation3 + $0xce0] sm:$0xff]
    %v3817 = vld [vmem:[#allocation3 + $0xce8] sm:$0xff]
    %v3818 = vld [vmem:[#allocation3 + $0xcf0] sm:$0xff]
    %v3819 = vld [vmem:[#allocation3 + $0xcf8] sm:$0xff]
    %v3820 = vld [vmem:[#allocation3 + $0xd00] sm:$0xff]
    %v3821 = vld [vmem:[#allocation3 + $0xd08] sm:$0xff]
    %v3822 = vld [vmem:[#allocation3 + $0xd10] sm:$0xff]
    %v3823 = vld [vmem:[#allocation3 + $0xd18] sm:$0xff]
    %v3824 = vld [vmem:[#allocation3 + $0xd20] sm:$0xff]
    %v3825 = vld [vmem:[#allocation3 + $0xd28] sm:$0xff]
    %v3826 = vld [vmem:[#allocation3 + $0xd30] sm:$0xff]
    %v3827 = vld [vmem:[#allocation3 + $0xd38] sm:$0xff]
    %v3828 = vld [vmem:[#allocation3 + $0xd40] sm:$0xff]
    %v3829 = vld [vmem:[#allocation3 + $0xd48] sm:$0xff]
    %v3830 = vld [vmem:[#allocation3 + $0xd50] sm:$0xff]
    %v3831 = vld [vmem:[#allocation3 + $0xd58] sm:$0xff]
    %v3832 = vld [vmem:[#allocation3 + $0xd60] sm:$0xff]
    %v3833 = vld [vmem:[#allocation3 + $0xd68] sm:$0xff]
    %v3834 = vld [vmem:[#allocation3 + $0xd70] sm:$0xff]
    %v3835 = vld [vmem:[#allocation3 + $0xd78] sm:$0xff]
    %v3836 = vld [vmem:[#allocation3 + $0xd80] sm:$0xff]
    %v3837 = vld [vmem:[#allocation3 + $0xd88] sm:$0xff]
    %v3838 = vld [vmem:[#allocation3 + $0xd90] sm:$0xff]
    %v3839 = vld [vmem:[#allocation3 + $0xd98] sm:$0xff]
    %v3840 = vld [vmem:[#allocation3 + $0xda0] sm:$0xff]
    %v3841 = vld [vmem:[#allocation3 + $0xda8] sm:$0xff]
    %v3842 = vld [vmem:[#allocation3 + $0xdb0] sm:$0xff]
    %v3843 = vld [vmem:[#allocation3 + $0xdb8] sm:$0xff]
    %v3844 = vld [vmem:[#allocation3 + $0xdc0] sm:$0xff]
    %v3845 = vld [vmem:[#allocation3 + $0xdc8] sm:$0xff]
    %v3846 = vld [vmem:[#allocation3 + $0xdd0] sm:$0xff]
    %v3847 = vld [vmem:[#allocation3 + $0xdd8] sm:$0xff]
    %v3848 = vld [vmem:[#allocation3 + $0xde0] sm:$0xff]
    %v3849 = vld [vmem:[#allocation3 + $0xde8] sm:$0xff]
    %v3850 = vld [vmem:[#allocation3 + $0xdf0] sm:$0xff]
    %v3851 = vld [vmem:[#allocation3 + $0xdf8] sm:$0xff]
    %v3852 = vld [vmem:[#allocation22] sm:$0xff]
    %v3854 = vlaneseq
    %v3855 = vshrl.u32 %v3854, 7
    %v3856 = vsub.s32 0, %v3855
    %v3857 = vrot.slane %v3852, %v3856
    %v3858 = vlaneseq
    %v3859 = vshrl.u32 %v3858, 7
    %v3860 = vsub.s32 1, %v3859
    %v3861 = vrot.slane %v3852, %v3860
    %v3862 = vlaneseq
    %v3863 = vshrl.u32 %v3862, 7
    %v3864 = vsub.s32 2, %v3863
    %v3865 = vrot.slane %v3852, %v3864
    %v3866 = vlaneseq
    %v3867 = vshrl.u32 %v3866, 7
    %v3868 = vsub.s32 3, %v3867
    %v3869 = vrot.slane %v3852, %v3868
    %v3870 = vlaneseq
    %v3871 = vshrl.u32 %v3870, 7
    %v3872 = vsub.s32 4, %v3871
    %v3873 = vrot.slane %v3852, %v3872
    %v3874 = vlaneseq
    %v3875 = vshrl.u32 %v3874, 7
    %v3876 = vsub.s32 5, %v3875
    %v3877 = vrot.slane %v3852, %v3876
    %v3878 = vlaneseq
    %v3879 = vshrl.u32 %v3878, 7
    %v3880 = vsub.s32 6, %v3879
    %v3881 = vrot.slane %v3852, %v3880
    %3889 = vmatprep.subr.bf16.mxu0 %v3405
    %3890 = vmatpush1.bf16.msra.mxu0 %v3404
    %3891 = vmatprep.subr.bf16.mxu0 %v3412
    %3892 = vmatpush1.bf16.msra.mxu0 %v3411
    %3893 = vmatprep.subr.bf16.mxu0 %v3419
    %3894 = vmatpush1.bf16.msra.mxu0 %v3418
    %3895 = vmatprep.subr.bf16.mxu0 %v3426
    %3896 = vmatpush1.bf16.msra.mxu0 %v3425
    %3897 = vmatprep.subr.bf16.mxu0 %v3433
    %3898 = vmatpush1.bf16.msra.mxu0 %v3432
    %3899 = vmatprep.subr.bf16.mxu0 %v3440
    %3900 = vmatpush1.bf16.msra.mxu0 %v3439
    %3901 = vmatprep.subr.bf16.mxu0 %v3447
    %3902 = vmatpush1.bf16.msra.mxu0 %v3446
    %3903 = vmatprep.subr.bf16.mxu0 %v3454
    %3904 = vmatpush1.bf16.msra.mxu0 %v3453
    %3905 = vmatprep.subr.bf16.mxu0 %v3461
    %3906 = vmatpush1.bf16.msra.mxu0 %v3460
    %3907 = vmatprep.subr.bf16.mxu0 %v3468
    %3908 = vmatpush1.bf16.msra.mxu0 %v3467
    %3909 = vmatprep.subr.bf16.mxu0 %v3475
    %3910 = vmatpush1.bf16.msra.mxu0 %v3474
    %3911 = vmatprep.subr.bf16.mxu0 %v3482
    %3912 = vmatpush1.bf16.msra.mxu0 %v3481
    %3913 = vmatprep.subr.bf16.mxu0 %v3489
    %3914 = vmatpush1.bf16.msra.mxu0 %v3488
    %3915 = vmatprep.subr.bf16.mxu0 %v3496
    %3916 = vmatpush1.bf16.msra.mxu0 %v3495
    %3917 = vmatprep.subr.bf16.mxu0 %v3503
    %3918 = vmatpush1.bf16.msra.mxu0 %v3502
    %3919 = vmatprep.subr.bf16.mxu0 %v3510
    %3920 = vmatpush1.bf16.msra.mxu0 %v3509
    %3921 = vmatprep.mubr.bf16.mxu0 %v3373
    %3922 = vmatmul.mubr.bf16.gmra.mrb[0].mxu0 %v3372
    %v3923 = vpop.f32.mrb[0].mxu0
    %v3924 = vadd.f32 %v3857, %v3923
    %v3925 = vpop.f32.mrb[0].mxu0
    %v3926 = vadd.f32 %v3861, %v3925
    %v3927 = vpop.f32.mrb[0].mxu0
    %v3928 = vadd.f32 %v3857, %v3927
    %v3929 = vpop.f32.mrb[0].mxu0
    %v3930 = vadd.f32 %v3861, %v3929
    %3931 = vmatprep.mubr.bf16.mxu0 %v3381
    %3932 = vmatmul.mubr.bf16.gmra.mrb[0].mxu0 %v3380
    %v3933 = vpop.f32.mrb[0].mxu0
    %v3934 = vadd.f32 %v3857, %v3933
    %v3935 = vpop.f32.mrb[0].mxu0
    %v3936 = vadd.f32 %v3861, %v3935
    %v3937 = vpop.f32.mrb[0].mxu0
    %v3938 = vadd.f32 %v3857, %v3937
    %v3939 = vpop.f32.mrb[0].mxu0
    %v3940 = vadd.f32 %v3861, %v3939
    %3941 = vmatprep.mubr.bf16.mxu0 %v3389
    %3942 = vmatmul.mubr.bf16.gmra.mrb[0].mxu0 %v3388
    %v3943 = vpop.f32.mrb[0].mxu0
    %v3944 = vadd.f32 %v3857, %v3943
    %v3945 = vpop.f32.mrb[0].mxu0
    %v3946 = vadd.f32 %v3861, %v3945
    %v3947 = vpop.f32.mrb[0].mxu0
    %v3948 = vadd.f32 %v3857, %v3947
    %v3949 = vpop.f32.mrb[0].mxu0
    %v3950 = vadd.f32 %v3861, %v3949
    %3951 = vmatprep.mubr.bf16.mxu0 %v3397
    %3952 = vmatmul.mubr.bf16.gmra.mrb[0].mxu0 %v3396
    %v3953 = vpop.f32.mrb[0].mxu0
    %v3954 = vadd.f32 %v3857, %v3953
    %v3955 = vpop.f32.mrb[0].mxu0
    %v3956 = vadd.f32 %v3861, %v3955
    %v3957 = vpop.f32.mrb[0].mxu0
    %v3958 = vadd.f32 %v3857, %v3957
    %v3959 = vpop.f32.mrb[0].mxu0
    %v3960 = vadd.f32 %v3861, %v3959
    %3961 = vdwg.mxu0
    %3962 = vmatprep.subr.bf16.mxu0 %v3517
    %3963 = vmatpush1.bf16.msra.mxu0 %v3516
    %3964 = vmatprep.subr.bf16.mxu0 %v3524
    %3965 = vmatpush1.bf16.msra.mxu0 %v3523
    %3966 = vmatprep.subr.bf16.mxu0 %v3531
    %3967 = vmatpush1.bf16.msra.mxu0 %v3530
    %3968 = vmatprep.subr.bf16.mxu0 %v3538
    %3969 = vmatpush1.bf16.msra.mxu0 %v3537
    %3970 = vmatprep.subr.bf16.mxu0 %v3545
    %3971 = vmatpush1.bf16.msra.mxu0 %v3544
    %3972 = vmatprep.subr.bf16.mxu0 %v3552
    %3973 = vmatpush1.bf16.msra.mxu0 %v3551
    %3974 = vmatprep.subr.bf16.mxu0 %v3559
    %3975 = vmatpush1.bf16.msra.mxu0 %v3558
    %3976 = vmatprep.subr.bf16.mxu0 %v3566
    %3977 = vmatpush1.bf16.msra.mxu0 %v3565
    %3978 = vmatprep.subr.bf16.mxu0 %v3573
    %3979 = vmatpush1.bf16.msra.mxu0 %v3572
    %3980 = vmatprep.subr.bf16.mxu0 %v3580
    %3981 = vmatpush1.bf16.msra.mxu0 %v3579
    %3982 = vmatprep.subr.bf16.mxu0 %v3587
    %3983 = vmatpush1.bf16.msra.mxu0 %v3586
    %3984 = vmatprep.subr.bf16.mxu0 %v3594
    %3985 = vmatpush1.bf16.msra.mxu0 %v3593
    %3986 = vmatprep.subr.bf16.mxu0 %v3601
    %3987 = vmatpush1.bf16.msra.mxu0 %v3600
    %3988 = vmatprep.subr.bf16.mxu0 %v3608
    %3989 = vmatpush1.bf16.msra.mxu0 %v3607
    %3990 = vmatprep.subr.bf16.mxu0 %v3615
    %3991 = vmatpush1.bf16.msra.mxu0 %v3614
    %3992 = vmatprep.subr.bf16.mxu0 %v3622
    %3993 = vmatpush1.bf16.msra.mxu0 %v3621
    %3994 = vmatprep.mubr.bf16.mxu0 %v3375
    %3995 = vmatmul.mubr.bf16.gmra.mrb[0].mxu0 %v3374
    %v3996 = vpop.f32.mrb[0].mxu0
    %v3997 = vadd.f32 %v3924, %v3996
    %v3998 = vpop.f32.mrb[0].mxu0
    %v3999 = vadd.f32 %v3926, %v3998
    %v4000 = vpop.f32.mrb[0].mxu0
    %v4001 = vadd.f32 %v3928, %v4000
    %v4002 = vpop.f32.mrb[0].mxu0
    %v4003 = vadd.f32 %v3930, %v4002
    %4004 = vmatprep.mubr.bf16.mxu0 %v3383
    %4005 = vmatmul.mubr.bf16.gmra.mrb[0].mxu0 %v3382
    %v4006 = vpop.f32.mrb[0].mxu0
    %v4007 = vadd.f32 %v3934, %v4006
    %v4008 = vpop.f32.mrb[0].mxu0
    %v4009 = vadd.f32 %v3936, %v4008
    %v4010 = vpop.f32.mrb[0].mxu0
    %v4011 = vadd.f32 %v3938, %v4010
    %v4012 = vpop.f32.mrb[0].mxu0
    %v4013 = vadd.f32 %v3940, %v4012
    %4014 = vmatprep.mubr.bf16.mxu0 %v3391
    %4015 = vmatmul.mubr.bf16.gmra.mrb[0].mxu0 %v3390
    %v4016 = vpop.f32.mrb[0].mxu0
    %v4017 = vadd.f32 %v3944, %v4016
    %v4018 = vpop.f32.mrb[0].mxu0
    %v4019 = vadd.f32 %v3946, %v4018
    %v4020 = vpop.f32.mrb[0].mxu0
    %v4021 = vadd.f32 %v3948, %v4020
    %v4022 = vpop.f32.mrb[0].mxu0
    %v4023 = vadd.f32 %v3950, %v4022
    %4024 = vmatprep.mubr.bf16.mxu0 %v3399
    %4025 = vmatmul.mubr.bf16.gmra.mrb[0].mxu0 %v3398
    %v4026 = vpop.f32.mrb[0].mxu0
    %v4027 = vadd.f32 %v3954, %v4026
    %v4028 = vpop.f32.mrb[0].mxu0
    %v4029 = vadd.f32 %v3956, %v4028
    %v4030 = vpop.f32.mrb[0].mxu0
    %v4031 = vadd.f32 %v3958, %v4030
    %v4032 = vpop.f32.mrb[0].mxu0
    %v4033 = vadd.f32 %v3960, %v4032
    %4034 = vdwg.mxu0
    %4035 = vmatprep.subr.bf16.mxu0 %v3629
    %4036 = vmatpush1.bf16.msra.mxu0 %v3628
    %4037 = vmatprep.subr.bf16.mxu0 %v3636
    %4038 = vmatpush1.bf16.msra.mxu0 %v3635
    %4039 = vmatprep.subr.bf16.mxu0 %v3643
    %4040 = vmatpush1.bf16.msra.mxu0 %v3642
    %4041 = vmatprep.subr.bf16.mxu0 %v3650
    %4042 = vmatpush1.bf16.msra.mxu0 %v3649
    %4043 = vmatprep.subr.bf16.mxu0 %v3657
    %4044 = vmatpush1.bf16.msra.mxu0 %v3656
    %4045 = vmatprep.subr.bf16.mxu0 %v3664
    %4046 = vmatpush1.bf16.msra.mxu0 %v3663
    %4047 = vmatprep.subr.bf16.mxu0 %v3671
    %4048 = vmatpush1.bf16.msra.mxu0 %v3670
    %4049 = vmatprep.subr.bf16.mxu0 %v3678
    %4050 = vmatpush1.bf16.msra.mxu0 %v3677
    %4051 = vmatprep.subr.bf16.mxu0 %v3685
    %4052 = vmatpush1.bf16.msra.mxu0 %v3684
    %4053 = vmatprep.subr.bf16.mxu0 %v3692
    %4054 = vmatpush1.bf16.msra.mxu0 %v3691
    %4055 = vmatprep.subr.bf16.mxu0 %v3699
    %4056 = vmatpush1.bf16.msra.mxu0 %v3698
    %4057 = vmatprep.subr.bf16.mxu0 %v3706
    %4058 = vmatpush1.bf16.msra.mxu0 %v3705
    %4059 = vmatprep.subr.bf16.mxu0 %v3713
    %4060 = vmatpush1.bf16.msra.mxu0 %v3712
    %4061 = vmatprep.subr.bf16.mxu0 %v3720
    %4062 = vmatpush1.bf16.msra.mxu0 %v3719
    %4063 = vmatprep.subr.bf16.mxu0 %v3727
    %4064 = vmatpush1.bf16.msra.mxu0 %v3726
    %4065 = vmatprep.subr.bf16.mxu0 %v3734
    %4066 = vmatpush1.bf16.msra.mxu0 %v3733
    %4067 = vmatprep.mubr.bf16.mxu0 %v3377
    %4068 = vmatmul.mubr.bf16.gmra.mrb[0].mxu0 %v3376
    %v4069 = vpop.f32.mrb[0].mxu0
    %v4070 = vadd.f32 %v3997, %v4069
    %v4071 = vpop.f32.mrb[0].mxu0
    %v4072 = vadd.f32 %v3999, %v4071
    %v4073 = vpop.f32.mrb[0].mxu0
    %v4074 = vadd.f32 %v4001, %v4073
    %v4075 = vpop.f32.mrb[0].mxu0
    %v4076 = vadd.f32 %v4003, %v4075
    %4077 = vmatprep.mubr.bf16.mxu0 %v3385
    %4078 = vmatmul.mubr.bf16.gmra.mrb[0].mxu0 %v3384
    %v4079 = vpop.f32.mrb[0].mxu0
    %v4080 = vadd.f32 %v4007, %v4079
    %v4081 = vpop.f32.mrb[0].mxu0
    %v4082 = vadd.f32 %v4009, %v4081
    %v4083 = vpop.f32.mrb[0].mxu0
    %v4084 = vadd.f32 %v4011, %v4083
    %v4085 = vpop.f32.mrb[0].mxu0
    %v4086 = vadd.f32 %v4013, %v4085
    %4087 = vmatprep.mubr.bf16.mxu0 %v3393
    %4088 = vmatmul.mubr.bf16.gmra.mrb[0].mxu0 %v3392
    %v4089 = vpop.f32.mrb[0].mxu0
    %v4090 = vadd.f32 %v4017, %v4089
    %v4091 = vpop.f32.mrb[0].mxu0
    %v4092 = vadd.f32 %v4019, %v4091
    %v4093 = vpop.f32.mrb[0].mxu0
    %v4094 = vadd.f32 %v4021, %v4093
    %v4095 = vpop.f32.mrb[0].mxu0
    %v4096 = vadd.f32 %v4023, %v4095
    %4097 = vmatprep.mubr.bf16.mxu0 %v3401
    %4098 = vmatmul.mubr.bf16.gmra.mrb[0].mxu0 %v3400
    %v4099 = vpop.f32.mrb[0].mxu0
    %v4100 = vadd.f32 %v4027, %v4099
    %v4101 = vpop.f32.mrb[0].mxu0
    %v4102 = vadd.f32 %v4029, %v4101
    %v4103 = vpop.f32.mrb[0].mxu0
    %v4104 = vadd.f32 %v4031, %v4103
    %v4105 = vpop.f32.mrb[0].mxu0
    %v4106 = vadd.f32 %v4033, %v4105
    %4107 = vdwg.mxu0
    %4108 = vmatprep.subr.bf16.mxu0 %v3741
    %4109 = vmatpush1.bf16.msra.mxu0 %v3740
    %4110 = vmatprep.subr.bf16.mxu0 %v3748
    %4111 = vmatpush1.bf16.msra.mxu0 %v3747
    %4112 = vmatprep.subr.bf16.mxu0 %v3755
    %4113 = vmatpush1.bf16.msra.mxu0 %v3754
    %4114 = vmatprep.subr.bf16.mxu0 %v3762
    %4115 = vmatpush1.bf16.msra.mxu0 %v3761
    %4116 = vmatprep.subr.bf16.mxu0 %v3769
    %4117 = vmatpush1.bf16.msra.mxu0 %v3768
    %4118 = vmatprep.subr.bf16.mxu0 %v3776
    %4119 = vmatpush1.bf16.msra.mxu0 %v3775
    %4120 = vmatprep.subr.bf16.mxu0 %v3783
    %4121 = vmatpush1.bf16.msra.mxu0 %v3782
    %4122 = vmatprep.subr.bf16.mxu0 %v3790
    %4123 = vmatpush1.bf16.msra.mxu0 %v3789
    %4124 = vmatprep.subr.bf16.mxu0 %v3797
    %4125 = vmatpush1.bf16.msra.mxu0 %v3796
    %4126 = vmatprep.subr.bf16.mxu0 %v3804
    %4127 = vmatpush1.bf16.msra.mxu0 %v3803
    %4128 = vmatprep.subr.bf16.mxu0 %v3811
    %4129 = vmatpush1.bf16.msra.mxu0 %v3810
    %4130 = vmatprep.subr.bf16.mxu0 %v3818
    %4131 = vmatpush1.bf16.msra.mxu0 %v3817
    %4132 = vmatprep.subr.bf16.mxu0 %v3825
    %4133 = vmatpush1.bf16.msra.mxu0 %v3824
    %4134 = vmatprep.subr.bf16.mxu0 %v3832
    %4135 = vmatpush1.bf16.msra.mxu0 %v3831
    %4136 = vmatprep.subr.bf16.mxu0 %v3839
    %4137 = vmatpush1.bf16.msra.mxu0 %v3838
    %4138 = vmatprep.subr.bf16.mxu0 %v3846
    %4139 = vmatpush1.bf16.msra.mxu0 %v3845
    %4140 = vmatprep.mubr.bf16.mxu0 %v3379
    %4141 = vmatmul.mubr.bf16.gmra.mrb[0].mxu0 %v3378
    %v4142 = vpop.f32.mrb[0].mxu0
    %v4143 = vadd.f32 %v4070, %v4142
    %v4144 = vpop.f32.mrb[0].mxu0
    %v4145 = vadd.f32 %v4072, %v4144
    %v4146 = vpop.f32.mrb[0].mxu0
    %v4147 = vadd.f32 %v4074, %v4146
    %v4148 = vpop.f32.mrb[0].mxu0
    %v4149 = vadd.f32 %v4076, %v4148
    %4150 = vmatprep.mubr.bf16.mxu0 %v3387
    %4151 = vmatmul.mubr.bf16.gmra.mrb[0].mxu0 %v3386
    %v4152 = vpop.f32.mrb[0].mxu0
    %v4153 = vadd.f32 %v4080, %v4152
    %v4154 = vpop.f32.mrb[0].mxu0
    %v4155 = vadd.f32 %v4082, %v4154
    %v4156 = vpop.f32.mrb[0].mxu0
    %v4157 = vadd.f32 %v4084, %v4156
    %v4158 = vpop.f32.mrb[0].mxu0
    %v4159 = vadd.f32 %v4086, %v4158
    %4160 = vmatprep.mubr.bf16.mxu0 %v3395
    %4161 = vmatmul.mubr.bf16.gmra.mrb[0].mxu0 %v3394
    %v4162 = vpop.f32.mrb[0].mxu0
    %v4163 = vadd.f32 %v4090, %v4162
    %v4164 = vpop.f32.mrb[0].mxu0
    %v4165 = vadd.f32 %v4092, %v4164
    %v4166 = vpop.f32.mrb[0].mxu0
    %v4167 = vadd.f32 %v4094, %v4166
    %v4168 = vpop.f32.mrb[0].mxu0
    %v4169 = vadd.f32 %v4096, %v4168
    %4170 = vmatprep.mubr.bf16.mxu0 %v3403
    %4171 = vmatmul.mubr.bf16.gmra.mrb[0].mxu0 %v3402
    %v4172 = vpop.f32.mrb[0].mxu0
    %v4173 = vadd.f32 %v4100, %v4172
    %v4174 = vpop.f32.mrb[0].mxu0
    %v4175 = vadd.f32 %v4102, %v4174
    %v4176 = vpop.f32.mrb[0].mxu0
    %v4177 = vadd.f32 %v4104, %v4176
    %v4178 = vpop.f32.mrb[0].mxu0
    %v4179 = vadd.f32 %v4106, %v4178
    %4180 = vdwg.mxu0
    %4181 = vmatprep.subr.bf16.mxu0 %v3407
    %4182 = vmatpush1.bf16.msra.mxu0 %v3406
    %4183 = vmatprep.subr.bf16.mxu0 %v3414
    %4184 = vmatpush1.bf16.msra.mxu0 %v3413
    %4185 = vmatprep.subr.bf16.mxu0 %v3421
    %4186 = vmatpush1.bf16.msra.mxu0 %v3420
    %4187 = vmatprep.subr.bf16.mxu0 %v3428
    %4188 = vmatpush1.bf16.msra.mxu0 %v3427
    %4189 = vmatprep.subr.bf16.mxu0 %v3435
    %4190 = vmatpush1.bf16.msra.mxu0 %v3434
    %4191 = vmatprep.subr.bf16.mxu0 %v3442
    %4192 = vmatpush1.bf16.msra.mxu0 %v3441
    %4193 = vmatprep.subr.bf16.mxu0 %v3449
    %4194 = vmatpush1.bf16.msra.mxu0 %v3448
    %4195 = vmatprep.subr.bf16.mxu0 %v3456
    %4196 = vmatpush1.bf16.msra.mxu0 %v3455
    %4197 = vmatprep.subr.bf16.mxu0 %v3463
    %4198 = vmatpush1.bf16.msra.mxu0 %v3462
    %4199 = vmatprep.subr.bf16.mxu0 %v3470
    %4200 = vmatpush1.bf16.msra.mxu0 %v3469
    %4201 = vmatprep.subr.bf16.mxu0 %v3477
    %4202 = vmatpush1.bf16.msra.mxu0 %v3476
    %4203 = vmatprep.subr.bf16.mxu0 %v3484
    %4204 = vmatpush1.bf16.msra.mxu0 %v3483
    %4205 = vmatprep.subr.bf16.mxu0 %v3491
    %4206 = vmatpush1.bf16.msra.mxu0 %v3490
    %4207 = vmatprep.subr.bf16.mxu0 %v3498
    %4208 = vmatpush1.bf16.msra.mxu0 %v3497
    %4209 = vmatprep.subr.bf16.mxu0 %v3505
    %4210 = vmatpush1.bf16.msra.mxu0 %v3504
    %4211 = vmatprep.subr.bf16.mxu0 %v3512
    %4212 = vmatpush1.bf16.msra.mxu0 %v3511
    %4213 = vmatprep.mubr.bf16.mxu0 %v3373
    %4214 = vmatmul.mubr.bf16.gmra.mrb[0].mxu0 %v3372
    %v4215 = vpop.f32.mrb[0].mxu0
    %v4216 = vadd.f32 %v3865, %v4215
    %v4217 = vpop.f32.mrb[0].mxu0
    %v4218 = vadd.f32 %v3869, %v4217
    %v4219 = vpop.f32.mrb[0].mxu0
    %v4220 = vadd.f32 %v3865, %v4219
    %v4221 = vpop.f32.mrb[0].mxu0
    %v4222 = vadd.f32 %v3869, %v4221
    %4223 = vmatprep.mubr.bf16.mxu0 %v3381
    %4224 = vmatmul.mubr.bf16.gmra.mrb[0].mxu0 %v3380
    %v4225 = vpop.f32.mrb[0].mxu0
    %v4226 = vadd.f32 %v3865, %v4225
    %v4227 = vpop.f32.mrb[0].mxu0
    %v4228 = vadd.f32 %v3869, %v4227
    %v4229 = vpop.f32.mrb[0].mxu0
    %v4230 = vadd.f32 %v3865, %v4229
    %v4231 = vpop.f32.mrb[0].mxu0
    %v4232 = vadd.f32 %v3869, %v4231
    %4233 = vmatprep.mubr.bf16.mxu0 %v3389
    %4234 = vmatmul.mubr.bf16.gmra.mrb[0].mxu0 %v3388
    %v4235 = vpop.f32.mrb[0].mxu0
    %v4236 = vadd.f32 %v3865, %v4235
    %v4237 = vpop.f32.mrb[0].mxu0
    %v4238 = vadd.f32 %v3869, %v4237
    %v4239 = vpop.f32.mrb[0].mxu0
    %v4240 = vadd.f32 %v3865, %v4239
    %v4241 = vpop.f32.mrb[0].mxu0
    %v4242 = vadd.f32 %v3869, %v4241
    %4243 = vmatprep.mubr.bf16.mxu0 %v3397
    %4244 = vmatmul.mubr.bf16.gmra.mrb[0].mxu0 %v3396
    %v4245 = vpop.f32.mrb[0].mxu0
    %v4246 = vadd.f32 %v3865, %v4245
    %v4247 = vpop.f32.mrb[0].mxu0
    %v4248 = vadd.f32 %v3869, %v4247
    %v4249 = vpop.f32.mrb[0].mxu0
    %v4250 = vadd.f32 %v3865, %v4249
    %v4251 = vpop.f32.mrb[0].mxu0
    %v4252 = vadd.f32 %v3869, %v4251
    %4253 = vdwg.mxu0
    %4254 = vmatprep.subr.bf16.mxu0 %v3519
    %4255 = vmatpush1.bf16.msra.mxu0 %v3518
    %4256 = vmatprep.subr.bf16.mxu0 %v3526
    %4257 = vmatpush1.bf16.msra.mxu0 %v3525
    %4258 = vmatprep.subr.bf16.mxu0 %v3533
    %4259 = vmatpush1.bf16.msra.mxu0 %v3532
    %4260 = vmatprep.subr.bf16.mxu0 %v3540
    %4261 = vmatpush1.bf16.msra.mxu0 %v3539
    %4262 = vmatprep.subr.bf16.mxu0 %v3547
    %4263 = vmatpush1.bf16.msra.mxu0 %v3546
    %4264 = vmatprep.subr.bf16.mxu0 %v3554
    %4265 = vmatpush1.bf16.msra.mxu0 %v3553
    %4266 = vmatprep.subr.bf16.mxu0 %v3561
    %4267 = vmatpush1.bf16.msra.mxu0 %v3560
    %4268 = vmatprep.subr.bf16.mxu0 %v3568
    %4269 = vmatpush1.bf16.msra.mxu0 %v3567
    %4270 = vmatprep.subr.bf16.mxu0 %v3575
    %4271 = vmatpush1.bf16.msra.mxu0 %v3574
    %4272 = vmatprep.subr.bf16.mxu0 %v3582
    %4273 = vmatpush1.bf16.msra.mxu0 %v3581
    %4274 = vmatprep.subr.bf16.mxu0 %v3589
    %4275 = vmatpush1.bf16.msra.mxu0 %v3588
    %4276 = vmatprep.subr.bf16.mxu0 %v3596
    %4277 = vmatpush1.bf16.msra.mxu0 %v3595
    %4278 = vmatprep.subr.bf16.mxu0 %v3603
    %4279 = vmatpush1.bf16.msra.mxu0 %v3602
    %4280 = vmatprep.subr.bf16.mxu0 %v3610
    %4281 = vmatpush1.bf16.msra.mxu0 %v3609
    %4282 = vmatprep.subr.bf16.mxu0 %v3617
    %4283 = vmatpush1.bf16.msra.mxu0 %v3616
    %4284 = vmatprep.subr.bf16.mxu0 %v3624
    %4285 = vmatpush1.bf16.msra.mxu0 %v3623
    %4286 = vmatprep.mubr.bf16.mxu0 %v3375
    %4287 = vmatmul.mubr.bf16.gmra.mrb[0].mxu0 %v3374
    %v4288 = vpop.f32.mrb[0].mxu0
    %v4289 = vadd.f32 %v4216, %v4288
    %v4290 = vpop.f32.mrb[0].mxu0
    %v4291 = vadd.f32 %v4218, %v4290
    %v4292 = vpop.f32.mrb[0].mxu0
    %v4293 = vadd.f32 %v4220, %v4292
    %v4294 = vpop.f32.mrb[0].mxu0
    %v4295 = vadd.f32 %v4222, %v4294
    %4296 = vmatprep.mubr.bf16.mxu0 %v3383
    %4297 = vmatmul.mubr.bf16.gmra.mrb[0].mxu0 %v3382
    %v4298 = vpop.f32.mrb[0].mxu0
    %v4299 = vadd.f32 %v4226, %v4298
    %v4300 = vpop.f32.mrb[0].mxu0
    %v4301 = vadd.f32 %v4228, %v4300
    %v4302 = vpop.f32.mrb[0].mxu0
    %v4303 = vadd.f32 %v4230, %v4302
    %v4304 = vpop.f32.mrb[0].mxu0
    %v4305 = vadd.f32 %v4232, %v4304
    %4306 = vmatprep.mubr.bf16.mxu0 %v3391
    %4307 = vmatmul.mubr.bf16.gmra.mrb[0].mxu0 %v3390
    %v4308 = vpop.f32.mrb[0].mxu0
    %v4309 = vadd.f32 %v4236, %v4308
    %v4310 = vpop.f32.mrb[0].mxu0
    %v4311 = vadd.f32 %v4238, %v4310
    %v4312 = vpop.f32.mrb[0].mxu0
    %v4313 = vadd.f32 %v4240, %v4312
    %v4314 = vpop.f32.mrb[0].mxu0
    %v4315 = vadd.f32 %v4242, %v4314
    %4316 = vmatprep.mubr.bf16.mxu0 %v3399
    %4317 = vmatmul.mubr.bf16.gmra.mrb[0].mxu0 %v3398
    %v4318 = vpop.f32.mrb[0].mxu0
    %v4319 = vadd.f32 %v4246, %v4318
    %v4320 = vpop.f32.mrb[0].mxu0
    %v4321 = vadd.f32 %v4248, %v4320
    %v4322 = vpop.f32.mrb[0].mxu0
    %v4323 = vadd.f32 %v4250, %v4322
    %v4324 = vpop.f32.mrb[0].mxu0
    %v4325 = vadd.f32 %v4252, %v4324
    %4326 = vdwg.mxu0
    %4327 = vmatprep.subr.bf16.mxu0 %v3631
    %4328 = vmatpush1.bf16.msra.mxu0 %v3630
    %4329 = vmatprep.subr.bf16.mxu0 %v3638
    %4330 = vmatpush1.bf16.msra.mxu0 %v3637
    %4331 = vmatprep.subr.bf16.mxu0 %v3645
    %4332 = vmatpush1.bf16.msra.mxu0 %v3644
    %4333 = vmatprep.subr.bf16.mxu0 %v3652
    %4334 = vmatpush1.bf16.msra.mxu0 %v3651
    %4335 = vmatprep.subr.bf16.mxu0 %v3659
    %4336 = vmatpush1.bf16.msra.mxu0 %v3658
    %4337 = vmatprep.subr.bf16.mxu0 %v3666
    %4338 = vmatpush1.bf16.msra.mxu0 %v3665
    %4339 = vmatprep.subr.bf16.mxu0 %v3673
    %4340 = vmatpush1.bf16.msra.mxu0 %v3672
    %4341 = vmatprep.subr.bf16.mxu0 %v3680
    %4342 = vmatpush1.bf16.msra.mxu0 %v3679
    %4343 = vmatprep.subr.bf16.mxu0 %v3687
    %4344 = vmatpush1.bf16.msra.mxu0 %v3686
    %4345 = vmatprep.subr.bf16.mxu0 %v3694
    %4346 = vmatpush1.bf16.msra.mxu0 %v3693
    %4347 = vmatprep.subr.bf16.mxu0 %v3701
    %4348 = vmatpush1.bf16.msra.mxu0 %v3700
    %4349 = vmatprep.subr.bf16.mxu0 %v3708
    %4350 = vmatpush1.bf16.msra.mxu0 %v3707
    %4351 = vmatprep.subr.bf16.mxu0 %v3715
    %4352 = vmatpush1.bf16.msra.mxu0 %v3714
    %4353 = vmatprep.subr.bf16.mxu0 %v3722
    %4354 = vmatpush1.bf16.msra.mxu0 %v3721
    %4355 = vmatprep.subr.bf16.mxu0 %v3729
    %4356 = vmatpush1.bf16.msra.mxu0 %v3728
    %4357 = vmatprep.subr.bf16.mxu0 %v3736
    %4358 = vmatpush1.bf16.msra.mxu0 %v3735
    %4359 = vmatprep.mubr.bf16.mxu0 %v3377
    %4360 = vmatmul.mubr.bf16.gmra.mrb[0].mxu0 %v3376
    %v4361 = vpop.f32.mrb[0].mxu0
    %v4362 = vadd.f32 %v4289, %v4361
    %v4363 = vpop.f32.mrb[0].mxu0
    %v4364 = vadd.f32 %v4291, %v4363
    %v4365 = vpop.f32.mrb[0].mxu0
    %v4366 = vadd.f32 %v4293, %v4365
    %v4367 = vpop.f32.mrb[0].mxu0
    %v4368 = vadd.f32 %v4295, %v4367
    %4369 = vmatprep.mubr.bf16.mxu0 %v3385
    %4370 = vmatmul.mubr.bf16.gmra.mrb[0].mxu0 %v3384
    %v4371 = vpop.f32.mrb[0].mxu0
    %v4372 = vadd.f32 %v4299, %v4371
    %v4373 = vpop.f32.mrb[0].mxu0
    %v4374 = vadd.f32 %v4301, %v4373
    %v4375 = vpop.f32.mrb[0].mxu0
    %v4376 = vadd.f32 %v4303, %v4375
    %v4377 = vpop.f32.mrb[0].mxu0
    %v4378 = vadd.f32 %v4305, %v4377
    %4379 = vmatprep.mubr.bf16.mxu0 %v3393
    %4380 = vmatmul.mubr.bf16.gmra.mrb[0].mxu0 %v3392
    %v4381 = vpop.f32.mrb[0].mxu0
    %v4382 = vadd.f32 %v4309, %v4381
    %v4383 = vpop.f32.mrb[0].mxu0
    %v4384 = vadd.f32 %v4311, %v4383
    %v4385 = vpop.f32.mrb[0].mxu0
    %v4386 = vadd.f32 %v4313, %v4385
    %v4387 = vpop.f32.mrb[0].mxu0
    %v4388 = vadd.f32 %v4315, %v4387
    %4389 = vmatprep.mubr.bf16.mxu0 %v3401
    %4390 = vmatmul.mubr.bf16.gmra.mrb[0].mxu0 %v3400
    %v4391 = vpop.f32.mrb[0].mxu0
    %v4392 = vadd.f32 %v4319, %v4391
    %v4393 = vpop.f32.mrb[0].mxu0
    %v4394 = vadd.f32 %v4321, %v4393
    %v4395 = vpop.f32.mrb[0].mxu0
    %v4396 = vadd.f32 %v4323, %v4395
    %v4397 = vpop.f32.mrb[0].mxu0
    %v4398 = vadd.f32 %v4325, %v4397
    %4399 = vdwg.mxu0
    %4400 = vmatprep.subr.bf16.mxu0 %v3743
    %4401 = vmatpush1.bf16.msra.mxu0 %v3742
    %4402 = vmatprep.subr.bf16.mxu0 %v3750
    %4403 = vmatpush1.bf16.msra.mxu0 %v3749
    %4404 = vmatprep.subr.bf16.mxu0 %v3757
    %4405 = vmatpush1.bf16.msra.mxu0 %v3756
    %4406 = vmatprep.subr.bf16.mxu0 %v3764
    %4407 = vmatpush1.bf16.msra.mxu0 %v3763
    %4408 = vmatprep.subr.bf16.mxu0 %v3771
    %4409 = vmatpush1.bf16.msra.mxu0 %v3770
    %4410 = vmatprep.subr.bf16.mxu0 %v3778
    %4411 = vmatpush1.bf16.msra.mxu0 %v3777
    %4412 = vmatprep.subr.bf16.mxu0 %v3785
    %4413 = vmatpush1.bf16.msra.mxu0 %v3784
    %4414 = vmatprep.subr.bf16.mxu0 %v3792
    %4415 = vmatpush1.bf16.msra.mxu0 %v3791
    %4416 = vmatprep.subr.bf16.mxu0 %v3799
    %4417 = vmatpush1.bf16.msra.mxu0 %v3798
    %4418 = vmatprep.subr.bf16.mxu0 %v3806
    %4419 = vmatpush1.bf16.msra.mxu0 %v3805
    %4420 = vmatprep.subr.bf16.mxu0 %v3813
    %4421 = vmatpush1.bf16.msra.mxu0 %v3812
    %4422 = vmatprep.subr.bf16.mxu0 %v3820
    %4423 = vmatpush1.bf16.msra.mxu0 %v3819
    %4424 = vmatprep.subr.bf16.mxu0 %v3827
    %4425 = vmatpush1.bf16.msra.mxu0 %v3826
    %4426 = vmatprep.subr.bf16.mxu0 %v3834
    %4427 = vmatpush1.bf16.msra.mxu0 %v3833
    %4428 = vmatprep.subr.bf16.mxu0 %v3841
    %4429 = vmatpush1.bf16.msra.mxu0 %v3840
    %4430 = vmatprep.subr.bf16.mxu0 %v3848
    %4431 = vmatpush1.bf16.msra.mxu0 %v3847
    %4432 = vmatprep.mubr.bf16.mxu0 %v3379
    %4433 = vmatmul.mubr.bf16.gmra.mrb[0].mxu0 %v3378
    %v4434 = vpop.f32.mrb[0].mxu0
    %v4435 = vadd.f32 %v4362, %v4434
    %v4436 = vpop.f32.mrb[0].mxu0
    %v4437 = vadd.f32 %v4364, %v4436
    %v4438 = vpop.f32.mrb[0].mxu0
    %v4439 = vadd.f32 %v4366, %v4438
    %v4440 = vpop.f32.mrb[0].mxu0
    %v4441 = vadd.f32 %v4368, %v4440
    %4442 = vmatprep.mubr.bf16.mxu0 %v3387
    %4443 = vmatmul.mubr.bf16.gmra.mrb[0].mxu0 %v3386
    %v4444 = vpop.f32.mrb[0].mxu0
    %v4445 = vadd.f32 %v4372, %v4444
    %v4446 = vpop.f32.mrb[0].mxu0
    %v4447 = vadd.f32 %v4374, %v4446
    %v4448 = vpop.f32.mrb[0].mxu0
    %v4449 = vadd.f32 %v4376, %v4448
    %v4450 = vpop.f32.mrb[0].mxu0
    %v4451 = vadd.f32 %v4378, %v4450
    %4452 = vmatprep.mubr.bf16.mxu0 %v3395
    %4453 = vmatmul.mubr.bf16.gmra.mrb[0].mxu0 %v3394
    %v4454 = vpop.f32.mrb[0].mxu0
    %v4455 = vadd.f32 %v4382, %v4454
    %v4456 = vpop.f32.mrb[0].mxu0
    %v4457 = vadd.f32 %v4384, %v4456
    %v4458 = vpop.f32.mrb[0].mxu0
    %v4459 = vadd.f32 %v4386, %v4458
    %v4460 = vpop.f32.mrb[0].mxu0
    %v4461 = vadd.f32 %v4388, %v4460
    %4462 = vmatprep.mubr.bf16.mxu0 %v3403
    %4463 = vmatmul.mubr.bf16.gmra.mrb[0].mxu0 %v3402
    %v4464 = vpop.f32.mrb[0].mxu0
    %v4465 = vadd.f32 %v4392, %v4464
    %v4466 = vpop.f32.mrb[0].mxu0
    %v4467 = vadd.f32 %v4394, %v4466
    %v4468 = vpop.f32.mrb[0].mxu0
    %v4469 = vadd.f32 %v4396, %v4468
    %v4470 = vpop.f32.mrb[0].mxu0
    %v4471 = vadd.f32 %v4398, %v4470
    %4472 = vdwg.mxu0
    %4473 = vmatprep.subr.bf16.mxu0 %v3409
    %4474 = vmatpush1.bf16.msra.mxu0 %v3408
    %4475 = vmatprep.subr.bf16.mxu0 %v3416
    %4476 = vmatpush1.bf16.msra.mxu0 %v3415
    %4477 = vmatprep.subr.bf16.mxu0 %v3423
    %4478 = vmatpush1.bf16.msra.mxu0 %v3422
    %4479 = vmatprep.subr.bf16.mxu0 %v3430
    %4480 = vmatpush1.bf16.msra.mxu0 %v3429
    %4481 = vmatprep.subr.bf16.mxu0 %v3437
    %4482 = vmatpush1.bf16.msra.mxu0 %v3436
    %4483 = vmatprep.subr.bf16.mxu0 %v3444
    %4484 = vmatpush1.bf16.msra.mxu0 %v3443
    %4485 = vmatprep.subr.bf16.mxu0 %v3451
    %4486 = vmatpush1.bf16.msra.mxu0 %v3450
    %4487 = vmatprep.subr.bf16.mxu0 %v3458
    %4488 = vmatpush1.bf16.msra.mxu0 %v3457
    %4489 = vmatprep.subr.bf16.mxu0 %v3465
    %4490 = vmatpush1.bf16.msra.mxu0 %v3464
    %4491 = vmatprep.subr.bf16.mxu0 %v3472
    %4492 = vmatpush1.bf16.msra.mxu0 %v3471
    %4493 = vmatprep.subr.bf16.mxu0 %v3479
    %4494 = vmatpush1.bf16.msra.mxu0 %v3478
    %4495 = vmatprep.subr.bf16.mxu0 %v3486
    %4496 = vmatpush1.bf16.msra.mxu0 %v3485
    %4497 = vmatprep.subr.bf16.mxu0 %v3493
    %4498 = vmatpush1.bf16.msra.mxu0 %v3492
    %4499 = vmatprep.subr.bf16.mxu0 %v3500
    %4500 = vmatpush1.bf16.msra.mxu0 %v3499
    %4501 = vmatprep.subr.bf16.mxu0 %v3507
    %4502 = vmatpush1.bf16.msra.mxu0 %v3506
    %4503 = vmatprep.subr.bf16.mxu0 %v3514
    %4504 = vmatpush1.bf16.msra.mxu0 %v3513
    %4505 = vmatprep.mubr.bf16.mxu0 %v3373
    %4506 = vmatmul.mubr.bf16.gmra.mrb[0].mxu0 %v3372
    %v4507 = vpop.f32.mrb[0].mxu0
    %v4508 = vadd.f32 %v3873, %v4507
    %v4509 = vpop.f32.mrb[0].mxu0
    %v4510 = vadd.f32 %v3877, %v4509
    %v4511 = vpop.f32.mrb[0].mxu0
    %v4512 = vadd.f32 %v3873, %v4511
    %v4513 = vpop.f32.mrb[0].mxu0
    %v4514 = vadd.f32 %v3877, %v4513
    %4515 = vmatprep.mubr.bf16.mxu0 %v3381
    %4516 = vmatmul.mubr.bf16.gmra.mrb[0].mxu0 %v3380
    %v4517 = vpop.f32.mrb[0].mxu0
    %v4518 = vadd.f32 %v3873, %v4517
    %v4519 = vpop.f32.mrb[0].mxu0
    %v4520 = vadd.f32 %v3877, %v4519
    %v4521 = vpop.f32.mrb[0].mxu0
    %v4522 = vadd.f32 %v3873, %v4521
    %v4523 = vpop.f32.mrb[0].mxu0
    %v4524 = vadd.f32 %v3877, %v4523
    %4525 = vmatprep.mubr.bf16.mxu0 %v3389
    %4526 = vmatmul.mubr.bf16.gmra.mrb[0].mxu0 %v3388
    %v4527 = vpop.f32.mrb[0].mxu0
    %v4528 = vadd.f32 %v3873, %v4527
    %v4529 = vpop.f32.mrb[0].mxu0
    %v4530 = vadd.f32 %v3877, %v4529
    %v4531 = vpop.f32.mrb[0].mxu0
    %v4532 = vadd.f32 %v3873, %v4531
    %v4533 = vpop.f32.mrb[0].mxu0
    %v4534 = vadd.f32 %v3877, %v4533
    %4535 = vmatprep.mubr.bf16.mxu0 %v3397
    %4536 = vmatmul.mubr.bf16.gmra.mrb[0].mxu0 %v3396
    %v4537 = vpop.f32.mrb[0].mxu0
    %v4538 = vadd.f32 %v3873, %v4537
    %v4539 = vpop.f32.mrb[0].mxu0
    %v4540 = vadd.f32 %v3877, %v4539
    %v4541 = vpop.f32.mrb[0].mxu0
    %v4542 = vadd.f32 %v3873, %v4541
    %v4543 = vpop.f32.mrb[0].mxu0
    %v4544 = vadd.f32 %v3877, %v4543
    %4545 = vdwg.mxu0
    %4546 = vmatprep.subr.bf16.mxu0 %v3521
    %4547 = vmatpush1.bf16.msra.mxu0 %v3520
    %4548 = vmatprep.subr.bf16.mxu0 %v3528
    %4549 = vmatpush1.bf16.msra.mxu0 %v3527
    %4550 = vmatprep.subr.bf16.mxu0 %v3535
    %4551 = vmatpush1.bf16.msra.mxu0 %v3534
    %4552 = vmatprep.subr.bf16.mxu0 %v3542
    %4553 = vmatpush1.bf16.msra.mxu0 %v3541
    %4554 = vmatprep.subr.bf16.mxu0 %v3549
    %4555 = vmatpush1.bf16.msra.mxu0 %v3548
    %4556 = vmatprep.subr.bf16.mxu0 %v3556
    %4557 = vmatpush1.bf16.msra.mxu0 %v3555
    %4558 = vmatprep.subr.bf16.mxu0 %v3563
    %4559 = vmatpush1.bf16.msra.mxu0 %v3562
    %4560 = vmatprep.subr.bf16.mxu0 %v3570
    %4561 = vmatpush1.bf16.msra.mxu0 %v3569
    %4562 = vmatprep.subr.bf16.mxu0 %v3577
    %4563 = vmatpush1.bf16.msra.mxu0 %v3576
    %4564 = vmatprep.subr.bf16.mxu0 %v3584
    %4565 = vmatpush1.bf16.msra.mxu0 %v3583
    %4566 = vmatprep.subr.bf16.mxu0 %v3591
    %4567 = vmatpush1.bf16.msra.mxu0 %v3590
    %4568 = vmatprep.subr.bf16.mxu0 %v3598
    %4569 = vmatpush1.bf16.msra.mxu0 %v3597
    %4570 = vmatprep.subr.bf16.mxu0 %v3605
    %4571 = vmatpush1.bf16.msra.mxu0 %v3604
    %4572 = vmatprep.subr.bf16.mxu0 %v3612
    %4573 = vmatpush1.bf16.msra.mxu0 %v3611
    %4574 = vmatprep.subr.bf16.mxu0 %v3619
    %4575 = vmatpush1.bf16.msra.mxu0 %v3618
    %4576 = vmatprep.subr.bf16.mxu0 %v3626
    %4577 = vmatpush1.bf16.msra.mxu0 %v3625
    %4578 = vmatprep.mubr.bf16.mxu0 %v3375
    %4579 = vmatmul.mubr.bf16.gmra.mrb[0].mxu0 %v3374
    %v4580 = vpop.f32.mrb[0].mxu0
    %v4581 = vadd.f32 %v4508, %v4580
    %v4582 = vpop.f32.mrb[0].mxu0
    %v4583 = vadd.f32 %v4510, %v4582
    %v4584 = vpop.f32.mrb[0].mxu0
    %v4585 = vadd.f32 %v4512, %v4584
    %v4586 = vpop.f32.mrb[0].mxu0
    %v4587 = vadd.f32 %v4514, %v4586
    %4588 = vmatprep.mubr.bf16.mxu0 %v3383
    %4589 = vmatmul.mubr.bf16.gmra.mrb[0].mxu0 %v3382
    %v4590 = vpop.f32.mrb[0].mxu0
    %v4591 = vadd.f32 %v4518, %v4590
    %v4592 = vpop.f32.mrb[0].mxu0
    %v4593 = vadd.f32 %v4520, %v4592
    %v4594 = vpop.f32.mrb[0].mxu0
    %v4595 = vadd.f32 %v4522, %v4594
    %v4596 = vpop.f32.mrb[0].mxu0
    %v4597 = vadd.f32 %v4524, %v4596
    %4598 = vmatprep.mubr.bf16.mxu0 %v3391
    %4599 = vmatmul.mubr.bf16.gmra.mrb[0].mxu0 %v3390
    %v4600 = vpop.f32.mrb[0].mxu0
    %v4601 = vadd.f32 %v4528, %v4600
    %v4602 = vpop.f32.mrb[0].mxu0
    %v4603 = vadd.f32 %v4530, %v4602
    %v4604 = vpop.f32.mrb[0].mxu0
    %v4605 = vadd.f32 %v4532, %v4604
    %v4606 = vpop.f32.mrb[0].mxu0
    %v4607 = vadd.f32 %v4534, %v4606
    %4608 = vmatprep.mubr.bf16.mxu0 %v3399
    %4609 = vmatmul.mubr.bf16.gmra.mrb[0].mxu0 %v3398
    %v4610 = vpop.f32.mrb[0].mxu0
    %v4611 = vadd.f32 %v4538, %v4610
    %v4612 = vpop.f32.mrb[0].mxu0
    %v4613 = vadd.f32 %v4540, %v4612
    %v4614 = vpop.f32.mrb[0].mxu0
    %v4615 = vadd.f32 %v4542, %v4614
    %v4616 = vpop.f32.mrb[0].mxu0
    %v4617 = vadd.f32 %v4544, %v4616
    %4618 = vdwg.mxu0
    %4619 = vmatprep.subr.bf16.mxu0 %v3633
    %4620 = vmatpush1.bf16.msra.mxu0 %v3632
    %4621 = vmatprep.subr.bf16.mxu0 %v3640
    %4622 = vmatpush1.bf16.msra.mxu0 %v3639
    %4623 = vmatprep.subr.bf16.mxu0 %v3647
    %4624 = vmatpush1.bf16.msra.mxu0 %v3646
    %4625 = vmatprep.subr.bf16.mxu0 %v3654
    %4626 = vmatpush1.bf16.msra.mxu0 %v3653
    %4627 = vmatprep.subr.bf16.mxu0 %v3661
    %4628 = vmatpush1.bf16.msra.mxu0 %v3660
    %4629 = vmatprep.subr.bf16.mxu0 %v3668
    %4630 = vmatpush1.bf16.msra.mxu0 %v3667
    %4631 = vmatprep.subr.bf16.mxu0 %v3675
    %4632 = vmatpush1.bf16.msra.mxu0 %v3674
    %4633 = vmatprep.subr.bf16.mxu0 %v3682
    %4634 = vmatpush1.bf16.msra.mxu0 %v3681
    %4635 = vmatprep.subr.bf16.mxu0 %v3689
    %4636 = vmatpush1.bf16.msra.mxu0 %v3688
    %4637 = vmatprep.subr.bf16.mxu0 %v3696
    %4638 = vmatpush1.bf16.msra.mxu0 %v3695
    %4639 = vmatprep.subr.bf16.mxu0 %v3703
    %4640 = vmatpush1.bf16.msra.mxu0 %v3702
    %4641 = vmatprep.subr.bf16.mxu0 %v3710
    %4642 = vmatpush1.bf16.msra.mxu0 %v3709
    %4643 = vmatprep.subr.bf16.mxu0 %v3717
    %4644 = vmatpush1.bf16.msra.mxu0 %v3716
    %4645 = vmatprep.subr.bf16.mxu0 %v3724
    %4646 = vmatpush1.bf16.msra.mxu0 %v3723
    %4647 = vmatprep.subr.bf16.mxu0 %v3731
    %4648 = vmatpush1.bf16.msra.mxu0 %v3730
    %4649 = vmatprep.subr.bf16.mxu0 %v3738
    %4650 = vmatpush1.bf16.msra.mxu0 %v3737
    %4651 = vmatprep.mubr.bf16.mxu0 %v3377
    %4652 = vmatmul.mubr.bf16.gmra.mrb[0].mxu0 %v3376
    %v4653 = vpop.f32.mrb[0].mxu0
    %v4654 = vadd.f32 %v4581, %v4653
    %v4655 = vpop.f32.mrb[0].mxu0
    %v4656 = vadd.f32 %v4583, %v4655
    %v4657 = vpop.f32.mrb[0].mxu0
    %v4658 = vadd.f32 %v4585, %v4657
    %v4659 = vpop.f32.mrb[0].mxu0
    %v4660 = vadd.f32 %v4587, %v4659
    %4661 = vmatprep.mubr.bf16.mxu0 %v3385
    %4662 = vmatmul.mubr.bf16.gmra.mrb[0].mxu0 %v3384
    %v4663 = vpop.f32.mrb[0].mxu0
    %v4664 = vadd.f32 %v4591, %v4663
    %v4665 = vpop.f32.mrb[0].mxu0
    %v4666 = vadd.f32 %v4593, %v4665
    %v4667 = vpop.f32.mrb[0].mxu0
    %v4668 = vadd.f32 %v4595, %v4667
    %v4669 = vpop.f32.mrb[0].mxu0
    %v4670 = vadd.f32 %v4597, %v4669
    %4671 = vmatprep.mubr.bf16.mxu0 %v3393
    %4672 = vmatmul.mubr.bf16.gmra.mrb[0].mxu0 %v3392
    %v4673 = vpop.f32.mrb[0].mxu0
    %v4674 = vadd.f32 %v4601, %v4673
    %v4675 = vpop.f32.mrb[0].mxu0
    %v4676 = vadd.f32 %v4603, %v4675
    %v4677 = vpop.f32.mrb[0].mxu0
    %v4678 = vadd.f32 %v4605, %v4677
    %v4679 = vpop.f32.mrb[0].mxu0
    %v4680 = vadd.f32 %v4607, %v4679
    %4681 = vmatprep.mubr.bf16.mxu0 %v3401
    %4682 = vmatmul.mubr.bf16.gmra.mrb[0].mxu0 %v3400
    %v4683 = vpop.f32.mrb[0].mxu0
    %v4684 = vadd.f32 %v4611, %v4683
    %v4685 = vpop.f32.mrb[0].mxu0
    %v4686 = vadd.f32 %v4613, %v4685
    %v4687 = vpop.f32.mrb[0].mxu0
    %v4688 = vadd.f32 %v4615, %v4687
    %v4689 = vpop.f32.mrb[0].mxu0
    %v4690 = vadd.f32 %v4617, %v4689
    %4691 = vdwg.mxu0
    %4692 = vmatprep.subr.bf16.mxu0 %v3745
    %4693 = vmatpush1.bf16.msra.mxu0 %v3744
    %4694 = vmatprep.subr.bf16.mxu0 %v3752
    %4695 = vmatpush1.bf16.msra.mxu0 %v3751
    %4696 = vmatprep.subr.bf16.mxu0 %v3759
    %4697 = vmatpush1.bf16.msra.mxu0 %v3758
    %4698 = vmatprep.subr.bf16.mxu0 %v3766
    %4699 = vmatpush1.bf16.msra.mxu0 %v3765
    %4700 = vmatprep.subr.bf16.mxu0 %v3773
    %4701 = vmatpush1.bf16.msra.mxu0 %v3772
    %4702 = vmatprep.subr.bf16.mxu0 %v3780
    %4703 = vmatpush1.bf16.msra.mxu0 %v3779
    %4704 = vmatprep.subr.bf16.mxu0 %v3787
    %4705 = vmatpush1.bf16.msra.mxu0 %v3786
    %4706 = vmatprep.subr.bf16.mxu0 %v3794
    %4707 = vmatpush1.bf16.msra.mxu0 %v3793
    %4708 = vmatprep.subr.bf16.mxu0 %v3801
    %4709 = vmatpush1.bf16.msra.mxu0 %v3800
    %4710 = vmatprep.subr.bf16.mxu0 %v3808
    %4711 = vmatpush1.bf16.msra.mxu0 %v3807
    %4712 = vmatprep.subr.bf16.mxu0 %v3815
    %4713 = vmatpush1.bf16.msra.mxu0 %v3814
    %4714 = vmatprep.subr.bf16.mxu0 %v3822
    %4715 = vmatpush1.bf16.msra.mxu0 %v3821
    %4716 = vmatprep.subr.bf16.mxu0 %v3829
    %4717 = vmatpush1.bf16.msra.mxu0 %v3828
    %4718 = vmatprep.subr.bf16.mxu0 %v3836
    %4719 = vmatpush1.bf16.msra.mxu0 %v3835
    %4720 = vmatprep.subr.bf16.mxu0 %v3843
    %4721 = vmatpush1.bf16.msra.mxu0 %v3842
    %4722 = vmatprep.subr.bf16.mxu0 %v3850
    %4723 = vmatpush1.bf16.msra.mxu0 %v3849
    %4724 = vmatprep.mubr.bf16.mxu0 %v3379
    %4725 = vmatmul.mubr.bf16.gmra.mrb[0].mxu0 %v3378
    %v4726 = vpop.f32.mrb[0].mxu0
    %v4727 = vadd.f32 %v4654, %v4726
    %v4728 = vpop.f32.mrb[0].mxu0
    %v4729 = vadd.f32 %v4656, %v4728
    %v4730 = vpop.f32.mrb[0].mxu0
    %v4731 = vadd.f32 %v4658, %v4730
    %v4732 = vpop.f32.mrb[0].mxu0
    %v4733 = vadd.f32 %v4660, %v4732
    %4734 = vmatprep.mubr.bf16.mxu0 %v3387
    %4735 = vmatmul.mubr.bf16.gmra.mrb[0].mxu0 %v3386
    %v4736 = vpop.f32.mrb[0].mxu0
    %v4737 = vadd.f32 %v4664, %v4736
    %v4738 = vpop.f32.mrb[0].mxu0
    %v4739 = vadd.f32 %v4666, %v4738
    %v4740 = vpop.f32.mrb[0].mxu0
    %v4741 = vadd.f32 %v4668, %v4740
    %v4742 = vpop.f32.mrb[0].mxu0
    %v4743 = vadd.f32 %v4670, %v4742
    %4744 = vmatprep.mubr.bf16.mxu0 %v3395
    %4745 = vmatmul.mubr.bf16.gmra.mrb[0].mxu0 %v3394
    %v4746 = vpop.f32.mrb[0].mxu0
    %v4747 = vadd.f32 %v4674, %v4746
    %v4748 = vpop.f32.mrb[0].mxu0
    %v4749 = vadd.f32 %v4676, %v4748
    %v4750 = vpop.f32.mrb[0].mxu0
    %v4751 = vadd.f32 %v4678, %v4750
    %v4752 = vpop.f32.mrb[0].mxu0
    %v4753 = vadd.f32 %v4680, %v4752
    %4754 = vmatprep.mubr.bf16.mxu0 %v3403
    %4755 = vmatmul.mubr.bf16.gmra.mrb[0].mxu0 %v3402
    %v4756 = vpop.f32.mrb[0].mxu0
    %v4757 = vadd.f32 %v4684, %v4756
    %v4758 = vpop.f32.mrb[0].mxu0
    %v4759 = vadd.f32 %v4686, %v4758
    %v4760 = vpop.f32.mrb[0].mxu0
    %v4761 = vadd.f32 %v4688, %v4760
    %v4762 = vpop.f32.mrb[0].mxu0
    %v4763 = vadd.f32 %v4690, %v4762
    %4764 = vdwg.mxu0
    %4765 = vmatprep.subr.bf16.mxu0 0
    %4766 = vmatpush1.bf16.msra.mxu0 %v3410
    %4767 = vmatprep.subr.bf16.mxu0 0
    %4768 = vmatpush1.bf16.msra.mxu0 %v3417
    %4769 = vmatprep.subr.bf16.mxu0 0
    %4770 = vmatpush1.bf16.msra.mxu0 %v3424
    %4771 = vmatprep.subr.bf16.mxu0 0
    %4772 = vmatpush1.bf16.msra.mxu0 %v3431
    %4773 = vmatprep.subr.bf16.mxu0 0
    %4774 = vmatpush1.bf16.msra.mxu0 %v3438
    %4775 = vmatprep.subr.bf16.mxu0 0
    %4776 = vmatpush1.bf16.msra.mxu0 %v3445
    %4777 = vmatprep.subr.bf16.mxu0 0
    %4778 = vmatpush1.bf16.msra.mxu0 %v3452
    %4779 = vmatprep.subr.bf16.mxu0 0
    %4780 = vmatpush1.bf16.msra.mxu0 %v3459
    %4781 = vmatprep.subr.bf16.mxu0 0
    %4782 = vmatpush1.bf16.msra.mxu0 %v3466
    %4783 = vmatprep.subr.bf16.mxu0 0
    %4784 = vmatpush1.bf16.msra.mxu0 %v3473
    %4785 = vmatprep.subr.bf16.mxu0 0
    %4786 = vmatpush1.bf16.msra.mxu0 %v3480
    %4787 = vmatprep.subr.bf16.mxu0 0
    %4788 = vmatpush1.bf16.msra.mxu0 %v3487
    %4789 = vmatprep.subr.bf16.mxu0 0
    %4790 = vmatpush1.bf16.msra.mxu0 %v3494
    %4791 = vmatprep.subr.bf16.mxu0 0
    %4792 = vmatpush1.bf16.msra.mxu0 %v3501
    %4793 = vmatprep.subr.bf16.mxu0 0
    %4794 = vmatpush1.bf16.msra.mxu0 %v3508
    %4795 = vmatprep.subr.bf16.mxu0 0
    %4796 = vmatpush1.bf16.msra.mxu0 %v3515
    %4797 = vmatprep.mubr.bf16.mxu0 %v3373
    %4798 = vmatmul.mubr.bf16.gmra.mrb[0].mxu0 %v3372
    %v4799 = vpop.f32.mrb[0].mxu0
    %v4800 = vadd.f32 %v3881, %v4799
    %v4801 = vpop.f32.mrb[0].mxu0
    %v4802 = vpop.f32.mrb[0].mxu0
    %v4803 = vadd.f32 %v3881, %v4802
    %v4804 = vpop.f32.mrb[0].mxu0
    %4805 = vmatprep.mubr.bf16.mxu0 %v3381
    %4806 = vmatmul.mubr.bf16.gmra.mrb[0].mxu0 %v3380
    %v4807 = vpop.f32.mrb[0].mxu0
    %v4808 = vadd.f32 %v3881, %v4807
    %v4809 = vpop.f32.mrb[0].mxu0
    %v4810 = vpop.f32.mrb[0].mxu0
    %v4811 = vadd.f32 %v3881, %v4810
    %v4812 = vpop.f32.mrb[0].mxu0
    %4813 = vmatprep.mubr.bf16.mxu0 %v3389
    %4814 = vmatmul.mubr.bf16.gmra.mrb[0].mxu0 %v3388
    %v4815 = vpop.f32.mrb[0].mxu0
    %v4816 = vadd.f32 %v3881, %v4815
    %v4817 = vpop.f32.mrb[0].mxu0
    %v4818 = vpop.f32.mrb[0].mxu0
    %v4819 = vadd.f32 %v3881, %v4818
    %v4820 = vpop.f32.mrb[0].mxu0
    %4821 = vmatprep.mubr.bf16.mxu0 %v3397
    %4822 = vmatmul.mubr.bf16.gmra.mrb[0].mxu0 %v3396
    %v4823 = vpop.f32.mrb[0].mxu0
    %v4824 = vadd.f32 %v3881, %v4823
    %v4825 = vpop.f32.mrb[0].mxu0
    %v4826 = vpop.f32.mrb[0].mxu0
    %v4827 = vadd.f32 %v3881, %v4826
    %v4828 = vpop.f32.mrb[0].mxu0
    %4829 = vdwg.mxu0
    %4830 = vmatprep.subr.bf16.mxu0 0
    %4831 = vmatpush1.bf16.msra.mxu0 %v3522
    %4832 = vmatprep.subr.bf16.mxu0 0
    %4833 = vmatpush1.bf16.msra.mxu0 %v3529
    %4834 = vmatprep.subr.bf16.mxu0 0
    %4835 = vmatpush1.bf16.msra.mxu0 %v3536
    %4836 = vmatprep.subr.bf16.mxu0 0
    %4837 = vmatpush1.bf16.msra.mxu0 %v3543
    %4838 = vmatprep.subr.bf16.mxu0 0
    %4839 = vmatpush1.bf16.msra.mxu0 %v3550
    %4840 = vmatprep.subr.bf16.mxu0 0
    %4841 = vmatpush1.bf16.msra.mxu0 %v3557
    %4842 = vmatprep.subr.bf16.mxu0 0
    %4843 = vmatpush1.bf16.msra.mxu0 %v3564
    %4844 = vmatprep.subr.bf16.mxu0 0
    %4845 = vmatpush1.bf16.msra.mxu0 %v3571
    %4846 = vmatprep.subr.bf16.mxu0 0
    %4847 = vmatpush1.bf16.msra.mxu0 %v3578
    %4848 = vmatprep.subr.bf16.mxu0 0
    %4849 = vmatpush1.bf16.msra.mxu0 %v3585
    %4850 = vmatprep.subr.bf16.mxu0 0
    %4851 = vmatpush1.bf16.msra.mxu0 %v3592
    %4852 = vmatprep.subr.bf16.mxu0 0
    %4853 = vmatpush1.bf16.msra.mxu0 %v3599
    %4854 = vmatprep.subr.bf16.mxu0 0
    %4855 = vmatpush1.bf16.msra.mxu0 %v3606
    %4856 = vmatprep.subr.bf16.mxu0 0
    %4857 = vmatpush1.bf16.msra.mxu0 %v3613
    %4858 = vmatprep.subr.bf16.mxu0 0
    %4859 = vmatpush1.bf16.msra.mxu0 %v3620
    %4860 = vmatprep.subr.bf16.mxu0 0
    %4861 = vmatpush1.bf16.msra.mxu0 %v3627
    %4862 = vmatprep.mubr.bf16.mxu0 %v3375
    %4863 = vmatmul.mubr.bf16.gmra.mrb[0].mxu0 %v3374
    %v4864 = vpop.f32.mrb[0].mxu0
    %v4865 = vadd.f32 %v4800, %v4864
    %v4866 = vpop.f32.mrb[0].mxu0
    %v4867 = vpop.f32.mrb[0].mxu0
    %v4868 = vadd.f32 %v4803, %v4867
    %v4869 = vpop.f32.mrb[0].mxu0
    %4870 = vmatprep.mubr.bf16.mxu0 %v3383
    %4871 = vmatmul.mubr.bf16.gmra.mrb[0].mxu0 %v3382
    %v4872 = vpop.f32.mrb[0].mxu0
    %v4873 = vadd.f32 %v4808, %v4872
    %v4874 = vpop.f32.mrb[0].mxu0
    %v4875 = vpop.f32.mrb[0].mxu0
    %v4876 = vadd.f32 %v4811, %v4875
    %v4877 = vpop.f32.mrb[0].mxu0
    %4878 = vmatprep.mubr.bf16.mxu0 %v3391
    %4879 = vmatmul.mubr.bf16.gmra.mrb[0].mxu0 %v3390
    %v4880 = vpop.f32.mrb[0].mxu0
    %v4881 = vadd.f32 %v4816, %v4880
    %v4882 = vpop.f32.mrb[0].mxu0
    %v4883 = vpop.f32.mrb[0].mxu0
    %v4884 = vadd.f32 %v4819, %v4883
    %v4885 = vpop.f32.mrb[0].mxu0
    %4886 = vmatprep.mubr.bf16.mxu0 %v3399
    %4887 = vmatmul.mubr.bf16.gmra.mrb[0].mxu0 %v3398
    %v4888 = vpop.f32.mrb[0].mxu0
    %v4889 = vadd.f32 %v4824, %v4888
    %v4890 = vpop.f32.mrb[0].mxu0
    %v4891 = vpop.f32.mrb[0].mxu0
    %v4892 = vadd.f32 %v4827, %v4891
    %v4893 = vpop.f32.mrb[0].mxu0
    %4894 = vdwg.mxu0
    %4895 = vmatprep.subr.bf16.mxu0 0
    %4896 = vmatpush1.bf16.msra.mxu0 %v3634
    %4897 = vmatprep.subr.bf16.mxu0 0
    %4898 = vmatpush1.bf16.msra.mxu0 %v3641
    %4899 = vmatprep.subr.bf16.mxu0 0
    %4900 = vmatpush1.bf16.msra.mxu0 %v3648
    %4901 = vmatprep.subr.bf16.mxu0 0
    %4902 = vmatpush1.bf16.msra.mxu0 %v3655
    %4903 = vmatprep.subr.bf16.mxu0 0
    %4904 = vmatpush1.bf16.msra.mxu0 %v3662
    %4905 = vmatprep.subr.bf16.mxu0 0
    %4906 = vmatpush1.bf16.msra.mxu0 %v3669
    %4907 = vmatprep.subr.bf16.mxu0 0
    %4908 = vmatpush1.bf16.msra.mxu0 %v3676
    %4909 = vmatprep.subr.bf16.mxu0 0
    %4910 = vmatpush1.bf16.msra.mxu0 %v3683
    %4911 = vmatprep.subr.bf16.mxu0 0
    %4912 = vmatpush1.bf16.msra.mxu0 %v3690
    %4913 = vmatprep.subr.bf16.mxu0 0
    %4914 = vmatpush1.bf16.msra.mxu0 %v3697
    %4915 = vmatprep.subr.bf16.mxu0 0
    %4916 = vmatpush1.bf16.msra.mxu0 %v3704
    %4917 = vmatprep.subr.bf16.mxu0 0
    %4918 = vmatpush1.bf16.msra.mxu0 %v3711
    %4919 = vmatprep.subr.bf16.mxu0 0
    %4920 = vmatpush1.bf16.msra.mxu0 %v3718
    %4921 = vmatprep.subr.bf16.mxu0 0
    %4922 = vmatpush1.bf16.msra.mxu0 %v3725
    %4923 = vmatprep.subr.bf16.mxu0 0
    %4924 = vmatpush1.bf16.msra.mxu0 %v3732
    %4925 = vmatprep.subr.bf16.mxu0 0
    %4926 = vmatpush1.bf16.msra.mxu0 %v3739
    %4927 = vmatprep.mubr.bf16.mxu0 %v3377
    %4928 = vmatmul.mubr.bf16.gmra.mrb[0].mxu0 %v3376
    %v4929 = vpop.f32.mrb[0].mxu0
    %v4930 = vadd.f32 %v4865, %v4929
    %v4931 = vpop.f32.mrb[0].mxu0
    %v4932 = vpop.f32.mrb[0].mxu0
    %v4933 = vadd.f32 %v4868, %v4932
    %v4934 = vpop.f32.mrb[0].mxu0
    %4935 = vmatprep.mubr.bf16.mxu0 %v3385
    %4936 = vmatmul.mubr.bf16.gmra.mrb[0].mxu0 %v3384
    %v4937 = vpop.f32.mrb[0].mxu0
    %v4938 = vadd.f32 %v4873, %v4937
    %v4939 = vpop.f32.mrb[0].mxu0
    %v4940 = vpop.f32.mrb[0].mxu0
    %v4941 = vadd.f32 %v4876, %v4940
    %v4942 = vpop.f32.mrb[0].mxu0
    %4943 = vmatprep.mubr.bf16.mxu0 %v3393
    %4944 = vmatmul.mubr.bf16.gmra.mrb[0].mxu0 %v3392
    %v4945 = vpop.f32.mrb[0].mxu0
    %v4946 = vadd.f32 %v4881, %v4945
    %v4947 = vpop.f32.mrb[0].mxu0
    %v4948 = vpop.f32.mrb[0].mxu0
    %v4949 = vadd.f32 %v4884, %v4948
    %v4950 = vpop.f32.mrb[0].mxu0
    %4951 = vmatprep.mubr.bf16.mxu0 %v3401
    %4952 = vmatmul.mubr.bf16.gmra.mrb[0].mxu0 %v3400
    %v4953 = vpop.f32.mrb[0].mxu0
    %v4954 = vadd.f32 %v4889, %v4953
    %v4955 = vpop.f32.mrb[0].mxu0
    %v4956 = vpop.f32.mrb[0].mxu0
    %v4957 = vadd.f32 %v4892, %v4956
    %v4958 = vpop.f32.mrb[0].mxu0
    %4959 = vdwg.mxu0
    %4960 = vmatprep.subr.bf16.mxu0 0
    %4961 = vmatpush1.bf16.msra.mxu0 %v3746
    %4962 = vmatprep.subr.bf16.mxu0 0
    %4963 = vmatpush1.bf16.msra.mxu0 %v3753
    %4964 = vmatprep.subr.bf16.mxu0 0
    %4965 = vmatpush1.bf16.msra.mxu0 %v3760
    %4966 = vmatprep.subr.bf16.mxu0 0
    %4967 = vmatpush1.bf16.msra.mxu0 %v3767
    %4968 = vmatprep.subr.bf16.mxu0 0
    %4969 = vmatpush1.bf16.msra.mxu0 %v3774
    %4970 = vmatprep.subr.bf16.mxu0 0
    %4971 = vmatpush1.bf16.msra.mxu0 %v3781
    %4972 = vmatprep.subr.bf16.mxu0 0
    %4973 = vmatpush1.bf16.msra.mxu0 %v3788
    %4974 = vmatprep.subr.bf16.mxu0 0
    %4975 = vmatpush1.bf16.msra.mxu0 %v3795
    %4976 = vmatprep.subr.bf16.mxu0 0
    %4977 = vmatpush1.bf16.msra.mxu0 %v3802
    %4978 = vmatprep.subr.bf16.mxu0 0
    %4979 = vmatpush1.bf16.msra.mxu0 %v3809
    %4980 = vmatprep.subr.bf16.mxu0 0
    %4981 = vmatpush1.bf16.msra.mxu0 %v3816
    %4982 = vmatprep.subr.bf16.mxu0 0
    %4983 = vmatpush1.bf16.msra.mxu0 %v3823
    %4984 = vmatprep.subr.bf16.mxu0 0
    %4985 = vmatpush1.bf16.msra.mxu0 %v3830
    %4986 = vmatprep.subr.bf16.mxu0 0
    %4987 = vmatpush1.bf16.msra.mxu0 %v3837
    %4988 = vmatprep.subr.bf16.mxu0 0
    %4989 = vmatpush1.bf16.msra.mxu0 %v3844
    %4990 = vmatprep.subr.bf16.mxu0 0
    %4991 = vmatpush1.bf16.msra.mxu0 %v3851
    %4992 = vmatprep.mubr.bf16.mxu0 %v3379
    %4993 = vmatmul.mubr.bf16.gmra.mrb[0].mxu0 %v3378
    %v4994 = vpop.f32.mrb[0].mxu0
    %v4995 = vadd.f32 %v4930, %v4994
    %v4996 = vpop.f32.mrb[0].mxu0
    %v4997 = vpop.f32.mrb[0].mxu0
    %v4998 = vadd.f32 %v4933, %v4997
    %v4999 = vpop.f32.mrb[0].mxu0
    %5000 = vmatprep.mubr.bf16.mxu0 %v3387
    %5001 = vmatmul.mubr.bf16.gmra.mrb[0].mxu0 %v3386
    %v5002 = vpop.f32.mrb[0].mxu0
    %v5003 = vadd.f32 %v4938, %v5002
    %v5004 = vpop.f32.mrb[0].mxu0
    %v5005 = vpop.f32.mrb[0].mxu0
    %v5006 = vadd.f32 %v4941, %v5005
    %v5007 = vpop.f32.mrb[0].mxu0
    %5008 = vmatprep.mubr.bf16.mxu0 %v3395
    %5009 = vmatmul.mubr.bf16.gmra.mrb[0].mxu0 %v3394
    %v5010 = vpop.f32.mrb[0].mxu0
    %v5011 = vadd.f32 %v4946, %v5010
    %v5012 = vpop.f32.mrb[0].mxu0
    %v5013 = vpop.f32.mrb[0].mxu0
    %v5014 = vadd.f32 %v4949, %v5013
    %v5015 = vpop.f32.mrb[0].mxu0
    %5016 = vmatprep.mubr.bf16.mxu0 %v3403
    %5017 = vmatmul.mubr.bf16.gmra.mrb[0].mxu0 %v3402
    %v5018 = vpop.f32.mrb[0].mxu0
    %v5019 = vadd.f32 %v4954, %v5018
    %v5020 = vpop.f32.mrb[0].mxu0
    %v5021 = vpop.f32.mrb[0].mxu0
    %v5022 = vadd.f32 %v4957, %v5021
    %v5023 = vpop.f32.mrb[0].mxu0
    %5024 = vdwg.mxu0
    %v5025 = vtanh.pop %v4143
    %v5026 = vtanh.pop %v4145
    %v5027 = vtanh.pop %v4435
    %v5028 = vtanh.pop %v4437
    %v5029 = vtanh.pop %v4727
    %v5030 = vtanh.pop %v4729
    %v5031 = vtanh.pop %v4995
    %v5032 = vtanh.pop %v4147
    %v5033 = vtanh.pop %v4149
    %v5034 = vtanh.pop %v4439
    %v5035 = vtanh.pop %v4441
    %v5036 = vtanh.pop %v4731
    %v5037 = vtanh.pop %v4733
    %v5038 = vtanh.pop %v4998
    %v5039 = vtanh.pop %v4153
    %v5040 = vtanh.pop %v4155
    %v5041 = vtanh.pop %v4445
    %v5042 = vtanh.pop %v4447
    %v5043 = vtanh.pop %v4737
    %v5044 = vtanh.pop %v4739
    %v5045 = vtanh.pop %v5003
    %v5046 = vtanh.pop %v4157
    %v5047 = vtanh.pop %v4159
    %v5048 = vtanh.pop %v4449
    %v5049 = vtanh.pop %v4451
    %v5050 = vtanh.pop %v4741
    %v5051 = vtanh.pop %v4743
    %v5052 = vtanh.pop %v5006
    %v5053 = vtanh.pop %v4163
    %v5054 = vtanh.pop %v4165
    %v5055 = vtanh.pop %v4455
    %v5056 = vtanh.pop %v4457
    %v5057 = vtanh.pop %v4747
    %v5058 = vtanh.pop %v4749
    %v5059 = vtanh.pop %v5011
    %v5060 = vtanh.pop %v4167
    %v5061 = vtanh.pop %v4169
    %v5062 = vtanh.pop %v4459
    %v5063 = vtanh.pop %v4461
    %v5064 = vtanh.pop %v4751
    %v5065 = vtanh.pop %v4753
    %v5066 = vtanh.pop %v5014
    %v5067 = vtanh.pop %v4173
    %v5068 = vtanh.pop %v4175
    %v5069 = vtanh.pop %v4465
    %v5070 = vtanh.pop %v4467
    %v5071 = vtanh.pop %v4757
    %v5072 = vtanh.pop %v4759
    %v5073 = vtanh.pop %v5019
    %v5074 = vtanh.pop %v4177
    %v5075 = vtanh.pop %v4179
    %v5076 = vtanh.pop %v4469
    %v5077 = vtanh.pop %v4471
    %v5078 = vtanh.pop %v4761
    %v5079 = vtanh.pop %v4763
    %v5080 = vtanh.pop %v5022
    %v5081 = vpack.c.bf16 %v5032, %v5025
    %v5082 = vpack.c.bf16 %v5033, %v5026
    %v5083 = vpack.c.bf16 %v5034, %v5027
    %v5084 = vpack.c.bf16 %v5035, %v5028
    %v5085 = vpack.c.bf16 %v5036, %v5029
    %v5086 = vpack.c.bf16 %v5037, %v5030
    %v5087 = vpack.c.bf16 %v5038, %v5031
    %v5088 = vpack.c.bf16 %v5046, %v5039
    %v5089 = vpack.c.bf16 %v5047, %v5040
    %v5090 = vpack.c.bf16 %v5048, %v5041
    %v5091 = vpack.c.bf16 %v5049, %v5042
    %v5092 = vpack.c.bf16 %v5050, %v5043
    %v5093 = vpack.c.bf16 %v5051, %v5044
    %v5094 = vpack.c.bf16 %v5052, %v5045
    %v5095 = vpack.c.bf16 %v5060, %v5053
    %v5096 = vpack.c.bf16 %v5061, %v5054
    %v5097 = vpack.c.bf16 %v5062, %v5055
    %v5098 = vpack.c.bf16 %v5063, %v5056
    %v5099 = vpack.c.bf16 %v5064, %v5057
    %v5100 = vpack.c.bf16 %v5065, %v5058
    %v5101 = vpack.c.bf16 %v5066, %v5059
    %v5102 = vpack.c.bf16 %v5074, %v5067
    %v5103 = vpack.c.bf16 %v5075, %v5068
    %v5104 = vpack.c.bf16 %v5076, %v5069
    %v5105 = vpack.c.bf16 %v5077, %v5070
    %v5106 = vpack.c.bf16 %v5078, %v5071
    %v5107 = vpack.c.bf16 %v5079, %v5072
    %v5108 = vpack.c.bf16 %v5080, %v5073
    %v5137 = vunpack.c.l.b16 %v5081
    %v5138 = vunpack.c.l.b16 %v5082
    %v5139 = vunpack.c.l.b16 %v5083
    %v5140 = vunpack.c.l.b16 %v5084
    %v5141 = vunpack.c.l.b16 %v5085
    %v5142 = vunpack.c.l.b16 %v5086
    %v5143 = vunpack.c.l.b16 %v5087
    %v5144 = vunpack.c.h.b16 %v5081
    %v5145 = vunpack.c.h.b16 %v5082
    %v5146 = vunpack.c.h.b16 %v5083
    %v5147 = vunpack.c.h.b16 %v5084
    %v5148 = vunpack.c.h.b16 %v5085
    %v5149 = vunpack.c.h.b16 %v5086
    %v5150 = vunpack.c.h.b16 %v5087
    %v5151 = vunpack.c.l.b16 %v5088
    %v5152 = vunpack.c.l.b16 %v5089
    %v5153 = vunpack.c.l.b16 %v5090
    %v5154 = vunpack.c.l.b16 %v5091
    %v5155 = vunpack.c.l.b16 %v5092
    %v5156 = vunpack.c.l.b16 %v5093
    %v5157 = vunpack.c.l.b16 %v5094
    %v5158 = vunpack.c.h.b16 %v5088
    %v5159 = vunpack.c.h.b16 %v5089
    %v5160 = vunpack.c.h.b16 %v5090
    %v5161 = vunpack.c.h.b16 %v5091
    %v5162 = vunpack.c.h.b16 %v5092
    %v5163 = vunpack.c.h.b16 %v5093
    %v5164 = vunpack.c.h.b16 %v5094
    %v5165 = vunpack.c.l.b16 %v5095
    %v5166 = vunpack.c.l.b16 %v5096
    %v5167 = vunpack.c.l.b16 %v5097
    %v5168 = vunpack.c.l.b16 %v5098
    %v5169 = vunpack.c.l.b16 %v5099
    %v5170 = vunpack.c.l.b16 %v5100
    %v5171 = vunpack.c.l.b16 %v5101
    %v5172 = vunpack.c.h.b16 %v5095
    %v5173 = vunpack.c.h.b16 %v5096
    %v5174 = vunpack.c.h.b16 %v5097
    %v5175 = vunpack.c.h.b16 %v5098
    %v5176 = vunpack.c.h.b16 %v5099
    %v5177 = vunpack.c.h.b16 %v5100
    %v5178 = vunpack.c.h.b16 %v5101
    %v5179 = vunpack.c.l.b16 %v5102
    %v5180 = vunpack.c.l.b16 %v5103
    %v5181 = vunpack.c.l.b16 %v5104
    %v5182 = vunpack.c.l.b16 %v5105
    %v5183 = vunpack.c.l.b16 %v5106
    %v5184 = vunpack.c.l.b16 %v5107
    %v5185 = vunpack.c.l.b16 %v5108
    %v5186 = vunpack.c.h.b16 %v5102
    %v5187 = vunpack.c.h.b16 %v5103
    %v5188 = vunpack.c.h.b16 %v5104
    %v5189 = vunpack.c.h.b16 %v5105
    %v5190 = vunpack.c.h.b16 %v5106
    %v5191 = vunpack.c.h.b16 %v5107
    %v5192 = vunpack.c.h.b16 %v5108
    %v5193 = vpack.c.b16 %v5138, %v5137
    %v5194 = vpack.c.b16 %v5140, %v5139
    %v5195 = vpack.c.b16 %v5142, %v5141
    %v5196 = vpack.c.b16 %v5143, %v5143
    %v5197 = vpack.c.b16 %v5145, %v5144
    %v5198 = vpack.c.b16 %v5147, %v5146
    %v5199 = vpack.c.b16 %v5149, %v5148
    %v5200 = vpack.c.b16 %v5150, %v5150
    %v5201 = vpack.c.b16 %v5152, %v5151
    %v5202 = vpack.c.b16 %v5154, %v5153
    %v5203 = vpack.c.b16 %v5156, %v5155
    %v5204 = vpack.c.b16 %v5157, %v5157
    %v5205 = vpack.c.b16 %v5159, %v5158
    %v5206 = vpack.c.b16 %v5161, %v5160
    %v5207 = vpack.c.b16 %v5163, %v5162
    %v5208 = vpack.c.b16 %v5164, %v5164
    %v5209 = vpack.c.b16 %v5166, %v5165
    %v5210 = vpack.c.b16 %v5168, %v5167
    %v5211 = vpack.c.b16 %v5170, %v5169
    %v5212 = vpack.c.b16 %v5171, %v5171
    %v5213 = vpack.c.b16 %v5173, %v5172
    %v5214 = vpack.c.b16 %v5175, %v5174
    %v5215 = vpack.c.b16 %v5177, %v5176
    %v5216 = vpack.c.b16 %v5178, %v5178
    %v5217 = vpack.c.b16 %v5180, %v5179
    %v5218 = vpack.c.b16 %v5182, %v5181
    %v5219 = vpack.c.b16 %v5184, %v5183
    %v5220 = vpack.c.b16 %v5185, %v5185
    %v5221 = vpack.c.b16 %v5187, %v5186
    %v5222 = vpack.c.b16 %v5189, %v5188
    %v5223 = vpack.c.b16 %v5191, %v5190
    %v5224 = vpack.c.b16 %v5192, %v5192
    %5257 = vst [vmem:[#allocation23] sm:$0xff] %v5193
    %5258 = vst [vmem:[#allocation23 + $0x8] sm:$0xff] %v5194
    %5259 = vst [vmem:[#allocation23 + $0x10] sm:$0xff] %v5195
    %5260 = vst [vmem:[#allocation23 + $0x18] sm:$0xf] %v5196
    %5261 = vst [vmem:[#allocation23 + $0x1c] sm:$0xff] %v5197
    %5262 = vst [vmem:[#allocation23 + $0x24] sm:$0xff] %v5198
    %5263 = vst [vmem:[#allocation23 + $0x2c] sm:$0xff] %v5199
    %5264 = vst [vmem:[#allocation23 + $0x34] sm:$0xf] %v5200
    %5265 = vst [vmem:[#allocation23 + $0x38] sm:$0xff] %v5201
    %5266 = vst [vmem:[#allocation23 + $0x40] sm:$0xff] %v5202
    %5267 = vst [vmem:[#allocation23 + $0x48] sm:$0xff] %v5203
    %5268 = vst [vmem:[#allocation23 + $0x50] sm:$0xf] %v5204
    %5269 = vst [vmem:[#allocation23 + $0x54] sm:$0xff] %v5205
    %5270 = vst [vmem:[#allocation23 + $0x5c] sm:$0xff] %v5206
    %5271 = vst [vmem:[#allocation23 + $0x64] sm:$0xff] %v5207
    %5272 = vst [vmem:[#allocation23 + $0x6c] sm:$0xf] %v5208
    %5273 = vst [vmem:[#allocation23 + $0x70] sm:$0xff] %v5209
    %5274 = vst [vmem:[#allocation23 + $0x78] sm:$0xff] %v5210
    %5275 = vst [vmem:[#allocation23 + $0x80] sm:$0xff] %v5211
    %5276 = vst [vmem:[#allocation23 + $0x88] sm:$0xf] %v5212
    %5277 = vst [vmem:[#allocation23 + $0x8c] sm:$0xff] %v5213
    %5278 = vst [vmem:[#allocation23 + $0x94] sm:$0xff] %v5214
    %5279 = vst [vmem:[#allocation23 + $0x9c] sm:$0xff] %v5215
    %5280 = vst [vmem:[#allocation23 + $0xa4] sm:$0xf] %v5216
    %5281 = vst [vmem:[#allocation23 + $0xa8] sm:$0xff] %v5217
    %5282 = vst [vmem:[#allocation23 + $0xb0] sm:$0xff] %v5218
    %5283 = vst [vmem:[#allocation23 + $0xb8] sm:$0xff] %v5219
    %5284 = vst [vmem:[#allocation23 + $0xc0] sm:$0xf] %v5220
    %5285 = vst [vmem:[#allocation23 + $0xc4] sm:$0xff] %v5221
    %5286 = vst [vmem:[#allocation23 + $0xcc] sm:$0xff] %v5222
    %5287 = vst [vmem:[#allocation23 + $0xd4] sm:$0xff] %v5223
    %5288 = vst [vmem:[#allocation23 + $0xdc] sm:$0xf] %v5224
    // Predicated region
    $region94: #{tpu_custom_call.1} parent=1 // pred_check
      _
    $region95: #{tpu_custom_call.1} parent=1 // pred_check_branch
      %5290 = sbr.rel (0) target = $region97
    $region96: #{tpu_custom_call.1} parent=1 // pred_region
      %s5292 = ssub.s32 3584, 3584
      %5293 = vsyncadd [#allocation7], %s5292
      %s5294 = sshll.u32 [#allocation23], 4
      %s5295 = int_to_ptr.vmem [resolvable:$true] %s5294
      %5300 = dma.vmem_to_hbm [thread:$0]  %s5295, 3584, %s14, [#allocation7], 448, 448, 28
    $region97: #{tpu_custom_call.1} parent=1 // pred_fallthru
      _
    // Predicated region
    $region98: #{tpu_custom_call.1} parent=1 // pred_check
      _
    $region99: #{tpu_custom_call.1} parent=1 // pred_check_branch
      %5302 = sbr.rel (0) target = $region101
    $region100: #{tpu_custom_call.1} parent=1 // pred_region
      %5303 = dma.done [#allocation7], 3584
    $region101: #{tpu_custom_call.1} parent=1 // pred_fallthru
      _
    %5304 = vsyncpa [#allocation6], 1
    %5305 = vsyncpa [#allocation9], 1
    %5306 = vsyncpa [#allocation12], 1
    %5307 = vsyncpa [#allocation15], 1
    %5308 = vsyncpa [#allocation18], 1
    %5309 = vsyncpa [#allocation21], 1
    %5310 = vsyncpa [#allocation7], 1
  %5311 = vsyncmov [#allocation4]
  %s5312 = vpop.sfrf %5311
  %p5313 = scmp.eq.s32.totalorder %s5312, 0
  %p5314 = pneg %p5313
  %5316 = shalt.err (%p5314)
  %s5317 = scalar_lea.sflag [#allocation4], 1
  %5318 = vsyncmov %s5317
  %s5319 = vpop.sfrf %5318
  %p5320 = scmp.eq.s32.totalorder %s5319, 0
  %p5321 = pneg %p5320
  %5323 = shalt.err (%p5321)

</llo_original>
